<compile_context>
chip_gen: v5e
topology: v5e:2x2
jax: 0.10.0
libtpu: 0.0.40
codegen_flags: <defaults>
</compile_context>

<pallas_src>
import jax
import jax.numpy as jnp
from jax import lax
from jax.experimental import pallas as pl
from jax.experimental.pallas import tpu as pltpu


# ----------------------------------------------------------------------------
# Small static helpers (Python / trace-time only)
# ----------------------------------------------------------------------------
def _round_up(x, m):
    return ((x + m - 1) // m) * m


def _vmem_limit_bytes():
    """Generation-aware VMEM budget: ~3/4 of physical, capped at 112 MiB."""
    cap = 64 * 1024 * 1024
    try:
        info = pltpu.get_tpu_info()
        cap = int(getattr(info, "vmem_capacity_bytes", cap))
    except Exception:
        pass
    return max(32 * 1024 * 1024, min(cap * 3 // 4, 112 * 1024 * 1024))


def _estimate_vmem(T, TB, in_feat, H, O, fuse_fc):
    """Rough per-grid-step VMEM footprint (double-buffered acts + weights + xg)."""
    bf2, f4 = 2, 4
    x_bytes = T * TB * in_feat * bf2
    out_bytes = TB * O * f4 if fuse_fc else 2 * T * TB * H * bf2
    w_bytes = in_feat * 8 * H * bf2 + 2 * H * 4 * H * bf2 + 8 * H * f4
    if fuse_fc:
        w_bytes += 2 * H * O * f4 + O * f4
    xg_bytes = T * TB * 8 * H * f4
    return 2 * (x_bytes + out_bytes + w_bytes) + xg_bytes


def _pick_batch_tile(B, T, in_feat, H, O, fuse_fc, vmem_budget):
    """Largest multiple-of-8 divisor of (padded) B that fits the VMEM budget."""
    cands = [tb for tb in range(B, 0, -8) if tb % 8 == 0 and B % tb == 0]
    if not cands:
        cands = [B]
    if B >= 16:  # keep >= 2 grid steps when possible (v7x: feeds both TCs)
        cands = [tb for tb in cands if tb <= B // 2] or cands
    for tb in cands:
        if _estimate_vmem(T, tb, in_feat, H, O, fuse_fc) <= vmem_budget:
            return tb
    return cands[-1]


def _pick_unroll(n_steps, TB, H):
    """Unroll bounded by live-vreg footprint (4 KiB vregs, ~40 of 64 usable)."""
    if n_steps <= 0:
        return True
    # per unrolled step: two (TB,4H) f32 gate temps + four (TB,H) f32 carries
    per_step = max(1, (TB * H * 12 * 4) // 4096)
    u = 40 // per_step
    if u >= n_steps:
        return True
    return max(1, min(int(u), 8))


def _const_spec(arr):
    """Whole-array block, resident across the batch grid."""
    n = arr.ndim
    return pl.BlockSpec(arr.shape, lambda b: (0,) * n)


# ----------------------------------------------------------------------------
# Kernel factory
# ----------------------------------------------------------------------------
def _make_layer_kernel(T, TB, H, split_input, fuse_fc):
    G = 4 * H

    def cell(gates, c):
        # gate column order (fixed at prep time): [i, f, o, g]
        sig = jax.nn.sigmoid(gates[:, :3 * H])          # one EUP pass for i, f, o
        i_g = sig[:, 0 * H:1 * H]
        f_g = sig[:, 1 * H:2 * H]
        o_g = sig[:, 2 * H:3 * H]
        g_g = jnp.tanh(gates[:, 3 * H:])
        c_new = f_g * c + i_g * g_g
        return o_g * jnp.tanh(c_new), c_new

    def kernel(*refs):
        pos = 0
        if split_input:
            xf_ref, xb_ref = refs[0], refs[1]
            pos = 2
        else:
            x_ref = refs[0]
            pos = 1
        wih_ref, b_ref, whh_f_ref, whh_b_ref = refs[pos:pos + 4]
        pos += 4
        if fuse_fc:
            fcw_ref, fcb_ref = refs[pos:pos + 2]
            out_ref = refs[pos + 2]
            pos += 3
            out_f_ref = out_b_ref = None
        else:
            out_f_ref, out_b_ref = refs[pos:pos + 2]
            pos += 2
        xg_ref = refs[pos]

        # -------- hoisted input projection: ONE tall bf16 MXU matmul --------
        bias = b_ref[...]                               # (1, 8H) f32
        if split_input:
            w = wih_ref[...]                            # (2H, 8H) bf16
            g2d = (jnp.dot(xf_ref[...].reshape(T * TB, H), w[:H, :],
                           preferred_element_type=jnp.float32)
                   + jnp.dot(xb_ref[...].reshape(T * TB, H), w[H:, :],
                             preferred_element_type=jnp.float32))
        else:
            I = x_ref.shape[-1]
            g2d = jnp.dot(x_ref[...].reshape(T * TB, I), wih_ref[...],
                          preferred_element_type=jnp.float32)
        xg_ref[...] = (g2d + bias).reshape(T, TB, 8 * H)

        # -------- fused fwd/bwd recurrence over the precomputed gates --------
        whh_f = whh_f_ref[...]                          # (H, 4H) bf16, resident
        whh_b = whh_b_ref[...]

        def one_step(k, h_f, c_f, h_b, c_b):
            t_b = T - 1 - k
            g_f = xg_ref[k, :, :G] + jnp.dot(
                h_f.astype(whh_f.dtype), whh_f, preferred_element_type=jnp.float32)
            g_b = xg_ref[t_b, :, G:] + jnp.dot(
                h_b.astype(whh_b.dtype), whh_b, preferred_element_type=jnp.float32)
            h_f, c_f = cell(g_f, c_f)
            h_b, c_b = cell(g_b, c_b)
            if out_f_ref is not None:
                out_f_ref[k] = h_f.astype(out_f_ref.dtype)      # contiguous slab
                out_b_ref[t_b] = h_b.astype(out_b_ref.dtype)
            return h_f, c_f, h_b, c_b

        zeros = jnp.zeros((TB, H), jnp.float32)         # h0 = c0 = 0 (module)
        # Peel k == 0: its backward hidden is the value at t = T-1, i.e. exactly
        # PyTorch's out[:, -1, H:] -> no hb_last carry / per-step select needed.
        h_f, c_f, hb_last, c_b = one_step(0, zeros, zeros, zeros, zeros)

        def body(k, carry):
            return one_step(k, *carry)

        h_f, c_f, h_b, c_b = lax.fori_loop(
            1, T, body, (h_f, c_f, hb_last, c_b),
            unroll=_pick_unroll(T - 1, TB, H))

        if fuse_fc:
            fcw = fcw_ref[...]                          # (2H, O) f32 (tiny)
            logits = (jnp.dot(h_f, fcw[:H, :], preferred_element_type=jnp.float32)
                      + jnp.dot(hb_last, fcw[H:, :],
                                preferred_element_type=jnp.float32)
                      + fcb_ref[...])
            out_ref[...] = jax.nn.sigmoid(logits)

    return kernel


# ----------------------------------------------------------------------------
# pallas_call wrapper for one bidirectional layer
# ----------------------------------------------------------------------------
def _run_layer(xs, wih_cat, b_cat, whh_f, whh_b, fc_w_t=None, fc_b=None):
    """xs: (x,) time-major (T,B,E) bf16, or (out_fwd, out_bwd) each (T,B,H) bf16."""
    split_input = len(xs) == 2
    fuse_fc = fc_w_t is not None
    T, B = int(xs[0].shape[0]), int(xs[0].shape[1])
    H = int(whh_f.shape[0])
    in_feat = sum(int(x.shape[-1]) for x in xs)
    O = int(fc_w_t.shape[1]) if fuse_fc else 0

    vmem_limit = _vmem_limit_bytes()
    TB = _pick_batch_tile(B, T, in_feat, H, O, fuse_fc,
                          vmem_budget=int(vmem_limit * 0.8))
    grid = (B // TB,)

    in_specs = [pl.BlockSpec((T, TB, int(x.shape[-1])), lambda b: (0, b, 0))
                for x in xs]
    in_specs += [_const_spec(wih_cat), _const_spec(b_cat),
                 _const_spec(whh_f), _const_spec(whh_b)]
    operands = list(xs) + [wih_cat, b_cat, whh_f, whh_b]

    if fuse_fc:
        in_specs += [_const_spec(fc_w_t), _const_spec(fc_b)]
        operands += [fc_w_t, fc_b]
        out_specs = pl.BlockSpec((TB, O), lambda b: (b, 0))
        out_shape = jax.ShapeDtypeStruct((B, O), jnp.float32)
    else:
        out_specs = (pl.BlockSpec((T, TB, H), lambda b: (0, b, 0)),
                     pl.BlockSpec((T, TB, H), lambda b: (0, b, 0)))
        out_shape = (jax.ShapeDtypeStruct((T, B, H), jnp.bfloat16),
                     jax.ShapeDtypeStruct((T, B, H), jnp.bfloat16))

    grid_spec = pltpu.PrefetchScalarGridSpec(
        num_scalar_prefetch=0,
        grid=grid,
        in_specs=in_specs,
        out_specs=out_specs,
        scratch_shapes=[pltpu.VMEM((T, TB, 8 * H), jnp.float32)],
    )
    kernel = _make_layer_kernel(T, TB, H, split_input, fuse_fc)
    return pl.pallas_call(
        kernel,
        out_shape=out_shape,
        grid_spec=grid_spec,
        compiler_params=pltpu.CompilerParams(
            dimension_semantics=("parallel",),
            vmem_limit_bytes=vmem_limit,
        ),
    )(*operands)


# ----------------------------------------------------------------------------
# Parameters: PyTorch-layout init + one-time kernel-layout preparation
# ----------------------------------------------------------------------------
def init_raw_params(key, vocab_size, output_size, embedding_dim, hidden_dim, n_layers):
    """Parameters with the same shapes/gate order as the nn.Module state_dict."""
    scale = 1.0 / float(hidden_dim) ** 0.5

    def uni(k, shape):
        return jax.random.uniform(k, shape, jnp.float32, -scale, scale)

    k_emb, k_lstm, k_fc = jax.random.split(key, 3)
    raw = {"embedding": 0.1 * jax.random.normal(
        k_emb, (vocab_size, embedding_dim), jnp.float32)}

    layers = []
    for l in range(n_layers):
        in_dim = embedding_dim if l == 0 else 2 * hidden_dim
        layer = {}
        for d, name in enumerate(("fwd", "bwd")):
            kd = jax.random.fold_in(k_lstm, l * 2 + d)
            k1, k2, k3, k4 = jax.random.split(kd, 4)
            layer[name] = {
                "w_ih": uni(k1, (4 * hidden_dim, in_dim)),      # rows: i, f, g, o
                "w_hh": uni(k2, (4 * hidden_dim, hidden_dim)),
                "b_ih": uni(k3, (4 * hidden_dim,)),
                "b_hh": uni(k4, (4 * hidden_dim,)),
            }
        layers.append(layer)
    raw["lstm"] = layers

    kw, kb = jax.random.split(k_fc)
    raw["fc_w"] = uni(kw, (output_size, 2 * hidden_dim))
    raw["fc_b"] = uni(kb, (output_size,))
    return raw


def _prep_direction(p, H):
    """PyTorch (i,f,g,o) row blocks -> (in,4H)/(H,4H) with columns (i,f,o,g)."""
    perm = jnp.concatenate([jnp.arange(0, 2 * H),        # i, f
                            jnp.arange(3 * H, 4 * H),    # o
                            jnp.arange(2 * H, 3 * H)])   # g
    wih_t = jnp.transpose(p["w_ih"][perm])               # (in, 4H)
    whh_t = jnp.transpose(p["w_hh"][perm])               # (H, 4H)
    b = (p["b_ih"] + p["b_hh"])[perm][None, :]           # (1, 4H)
    return wih_t, whh_t, b


def prepare_params(raw, hidden_dim):
    """One-time weight prep: transpose / gate permute / bias pre-sum / bf16 cast."""
    H = hidden_dim
    layers = []
    for layer in raw["lstm"]:
        wih_f, whh_f, b_f = _prep_direction(layer["fwd"], H)
        wih_b, whh_b, b_b = _prep_direction(layer["bwd"], H)
        layers.append((
            jnp.concatenate([wih_f, wih_b], axis=1).astype(jnp.bfloat16),  # (in,8H)
            jnp.concatenate([b_f, b_b], axis=1),                           # (1,8H) f32
            whh_f.astype(jnp.bfloat16),                                    # (H,4H)
            whh_b.astype(jnp.bfloat16),                                    # (H,4H)
        ))
    return {
        "embedding": raw["embedding"],
        "lstm": layers,
        "fc_w_t": jnp.transpose(raw["fc_w"]),            # (2H, O) f32 (tiny)
        "fc_b": raw["fc_b"][None, :],                    # (1, O)
    }


# ----------------------------------------------------------------------------
# Forward pass (matches BiLSTM.forward)
# ----------------------------------------------------------------------------
def bilstm_forward(params, tokens):
    B, T = tokens.shape
    B_pad = _round_up(B, 8)                              # sublane-aligned batch tile
    if B_pad != B:
        tokens = jnp.pad(tokens, ((0, B_pad - B), (0, 0)))
    # Embedding gather directly in time-major (no separate HBM transpose pass).
    x = jnp.take(params["embedding"], tokens.T, axis=0).astype(jnp.bfloat16)  # (T,B,E)
    layers = params["lstm"]
    xs = (x,)
    for layer in layers[:-1]:
        xs = _run_layer(xs, *layer)                      # (out_fwd, out_bwd) bf16
    out = _run_layer(xs, *layers[-1],
                     fc_w_t=params["fc_w_t"], fc_b=params["fc_b"])  # (B_pad, O)
    return out[:B]


# ----------------------------------------------------------------------------
# Pure-JAX f32 reference (PyTorch semantics, raw weights) for correctness check
# ----------------------------------------------------------------------------
def _ref_lstm_dir(x, p, reverse):
    B, _, _ = x.shape
    H = p["w_hh"].shape[1]
    xs = jnp.flip(x, axis=1) if reverse else x

    def step(carry, x_t):
        h, c = carry
        gates = (jnp.dot(x_t, p["w_ih"].T, precision=lax.Precision.HIGHEST)
                 + jnp.dot(h, p["w_hh"].T, precision=lax.Precision.HIGHEST)
                 + p["b_ih"] + p["b_hh"])
        i = jax.nn.sigmoid(gates[:, 0 * H:1 * H])
        f = jax.nn.sigmoid(gates[:, 1 * H:2 * H])
        g = jnp.tanh(gates[:, 2 * H:3 * H])
        o = jax.nn.sigmoid(gates[:, 3 * H:4 * H])
        c = f * c + i * g
        h = o * jnp.tanh(c)
        return (h, c), h

    zeros = jnp.zeros((B, H), jnp.float32)
    _, hs = lax.scan(step, (zeros, zeros), jnp.swapaxes(xs, 0, 1))
    hs = jnp.swapaxes(hs, 0, 1)                          # (B, T, H)
    return jnp.flip(hs, axis=1) if reverse else hs


def bilstm_reference(raw, tokens):
    h = jnp.take(raw["embedding"], tokens, axis=0)
    for layer in raw["lstm"]:
        h = jnp.concatenate([_ref_lstm_dir(h, layer["fwd"], reverse=False),
                             _ref_lstm_dir(h, layer["bwd"], reverse=True)], axis=-1)
    last = h[:, -1, :]
    logits = jnp.dot(last, raw["fc_w"].T,
                     precision=lax.Precision.HIGHEST) + raw["fc_b"]
    return jax.nn.sigmoid(logits)


# ----------------------------------------------------------------------------
# Demo
# ----------------------------------------------------------------------------
if __name__ == "__main__":
    vocab_size = 50
    output_size = 4
    embedding_dim = 32
    hidden_dim = 32
    n_layers = 2
    B, T = 2, 8

    key = jax.random.PRNGKey(0)
    k_params, k_tokens = jax.random.split(key)

    raw = init_raw_params(k_params, vocab_size, output_size,
                          embedding_dim, hidden_dim, n_layers)
    params = prepare_params(raw, hidden_dim)
    tokens = jax.random.randint(k_tokens, (B, T), 0, vocab_size, dtype=jnp.int32)

    out = jax.jit(bilstm_forward)(params, tokens)
    out = jax.block_until_ready(out)

    assert out.shape == (B, output_size)
    assert bool(jnp.all(jnp.isfinite(out)))

    ref = jax.block_until_ready(jax.jit(bilstm_reference)(raw, tokens))
    # bf16 MXU operands (f32 accumulation / gate math) vs the f32 reference.
    max_err = float(jnp.max(jnp.abs(out - ref)))
    assert max_err < 2e-2, f"mismatch vs pure-JAX reference: {max_err}"

    print("KERNEL_OK")
</pallas_src>

<mosaic_0001>
module attributes {stable_mosaic.version = 11 : i64} {
  func.func @kernel(%arg0: i32, %arg1: memref<8x8x32xbf16, #tpu.memory_space<vmem>>, %arg2: memref<32x256xbf16, #tpu.memory_space<vmem>>, %arg3: memref<1x256xf32, #tpu.memory_space<vmem>>, %arg4: memref<32x128xbf16, #tpu.memory_space<vmem>>, %arg5: memref<32x128xbf16, #tpu.memory_space<vmem>>, %arg6: memref<8x8x32xbf16, #tpu.memory_space<vmem>>, %arg7: memref<8x8x32xbf16, #tpu.memory_space<vmem>>, %arg8: memref<8x8x256xf32, #tpu.memory_space<vmem>>) attributes {dimension_semantics = [#tpu.dimension_semantics<parallel>], iteration_bounds = array<i64: 1>, scalar_prefetch = 0 : i64, scratch_operands = 1 : i64, tpu.core_type = #tpu.core_type<tc>, window_params = [{transform_indices = @transform_0, window_bounds = array<i64: 8, 8, 32>}, {pipeline_mode = #tpu.pipeline_mode<synchronous>, transform_indices = @transform_1, window_bounds = array<i64: 32, 256>}, {pipeline_mode = #tpu.pipeline_mode<synchronous>, transform_indices = @transform_2, window_bounds = array<i64: 1, 256>}, {pipeline_mode = #tpu.pipeline_mode<synchronous>, transform_indices = @transform_3, window_bounds = array<i64: 32, 128>}, {pipeline_mode = #tpu.pipeline_mode<synchronous>, transform_indices = @transform_4, window_bounds = array<i64: 32, 128>}, {transform_indices = @transform_5, window_bounds = array<i64: 8, 8, 32>}, {transform_indices = @transform_6, window_bounds = array<i64: 8, 8, 32>}]} {
    %c0 = arith.constant 0 : index
    %c0_0 = arith.constant 0 : index
    %0 = vector.load %arg3[%c0, %c0_0] : memref<1x256xf32, #tpu.memory_space<vmem>>, vector<1x256xf32>
    %c0_1 = arith.constant 0 : index
    %c0_2 = arith.constant 0 : index
    %c0_3 = arith.constant 0 : index
    %1 = vector.load %arg1[%c0_1, %c0_2, %c0_3] : memref<8x8x32xbf16, #tpu.memory_space<vmem>>, vector<8x8x32xbf16>
    %2 = vector.shape_cast %1 : vector<8x8x32xbf16> to vector<64x32xbf16>
    %c0_4 = arith.constant 0 : index
    %c0_5 = arith.constant 0 : index
    %3 = vector.load %arg2[%c0_4, %c0_5] : memref<32x256xbf16, #tpu.memory_space<vmem>>, vector<32x256xbf16>
    %cst = arith.constant dense<0.000000e+00> : vector<64x256xf32>
    %4 = tpu.matmul %2, %3, %cst {dimension_numbers = #tpu.dot_dimension_numbers<[1], [0], [0], [1], [0, 0, 1, 1], [], []>} : vector<64x32xbf16>, vector<32x256xbf16>, vector<64x256xf32> -> vector<64x256xf32>
    %5 = vector.broadcast %0 : vector<1x256xf32> to vector<64x256xf32>
    %6 = arith.addf %4, %5 : vector<64x256xf32>
    %7 = vector.shape_cast %6 : vector<64x256xf32> to vector<8x8x256xf32>
    %c0_6 = arith.constant 0 : index
    %c0_7 = arith.constant 0 : index
    %c0_8 = arith.constant 0 : index
    %8 = vector.load %arg8[%c0_6, %c0_7, %c0_8] : memref<8x8x256xf32, #tpu.memory_space<vmem>>, vector<8x8x256xf32>
    tpu.vector_store %arg8[%c0_6, %c0_7, %c0_8], %7 {strides = array<i32>} : memref<8x8x256xf32, #tpu.memory_space<vmem>>, vector<8x8x256xf32>,
    %c0_9 = arith.constant 0 : index
    %c0_10 = arith.constant 0 : index
    %9 = vector.load %arg4[%c0_9, %c0_10] : memref<32x128xbf16, #tpu.memory_space<vmem>>, vector<32x128xbf16>
    %c0_11 = arith.constant 0 : index
    %c0_12 = arith.constant 0 : index
    %10 = vector.load %arg5[%c0_11, %c0_12] : memref<32x128xbf16, #tpu.memory_space<vmem>>, vector<32x128xbf16>
    %cst_13 = arith.constant 0.000000e+00 : f32
    %11 = vector.broadcast %cst_13 : f32 to vector<8x32xf32>
    %c0_14 = arith.constant 0 : index
    %c0_15 = arith.constant 0 : index
    %c0_16 = arith.constant 0 : index
    %12 = vector.load %arg8[%c0_14, %c0_15, %c0_16] : memref<8x8x256xf32, #tpu.memory_space<vmem>>, vector<1x8x128xf32>
    %13 = vector.shape_cast %12 : vector<1x8x128xf32> to vector<8x128xf32>
    %14 = arith.truncf %11 : vector<8x32xf32> to vector<8x32xbf16>
    %cst_17 = arith.constant dense<0.000000e+00> : vector<8x128xf32>
    %15 = tpu.matmul %14, %9, %cst_17 {dimension_numbers = #tpu.dot_dimension_numbers<[1], [0], [0], [1], [0, 0, 1, 1], [], []>} : vector<8x32xbf16>, vector<32x128xbf16>, vector<8x128xf32> -> vector<8x128xf32>
    %16 = arith.addf %13, %15 : vector<8x128xf32>
    %c7 = arith.constant 7 : index
    %c0_18 = arith.constant 0 : index
    %c128 = arith.constant 128 : index
    %17 = vector.load %arg8[%c7, %c0_18, %c128] : memref<8x8x256xf32, #tpu.memory_space<vmem>>, vector<1x8x128xf32>
    %18 = vector.shape_cast %17 : vector<1x8x128xf32> to vector<8x128xf32>
    %19 = arith.truncf %11 : vector<8x32xf32> to vector<8x32xbf16>
    %cst_19 = arith.constant dense<0.000000e+00> : vector<8x128xf32>
    %20 = tpu.matmul %19, %10, %cst_19 {dimension_numbers = #tpu.dot_dimension_numbers<[1], [0], [0], [1], [0, 0, 1, 1], [], []>} : vector<8x32xbf16>, vector<32x128xbf16>, vector<8x128xf32> -> vector<8x128xf32>
    %21 = arith.addf %18, %20 : vector<8x128xf32>
    %22 = vector.extract_strided_slice %16 {offsets = [0, 0], sizes = [8, 96], strides = [1, 1]} : vector<8x128xf32> to vector<8x96xf32>
    %23 = arith.negf %22 : vector<8x96xf32>
    %24 = math.exp %23 : vector<8x96xf32>
    %cst_20 = arith.constant 1.000000e+00 : f32
    %25 = vector.broadcast %cst_20 : f32 to vector<8x96xf32>
    %26 = arith.addf %25, %24 : vector<8x96xf32>
    %27 = arith.divf %25, %26 : vector<8x96xf32>
    %28 = vector.extract_strided_slice %27 {offsets = [0, 0], sizes = [8, 32], strides = [1, 1]} : vector<8x96xf32> to vector<8x32xf32>
    %29 = vector.extract_strided_slice %27 {offsets = [0, 32], sizes = [8, 32], strides = [1, 1]} : vector<8x96xf32> to vector<8x32xf32>
    %30 = vector.extract_strided_slice %27 {offsets = [0, 64], sizes = [8, 32], strides = [1, 1]} : vector<8x96xf32> to vector<8x32xf32>
    %31 = vector.extract_strided_slice %16 {offsets = [0, 96], sizes = [8, 32], strides = [1, 1]} : vector<8x128xf32> to vector<8x32xf32>
    %32 = math.tanh %31 : vector<8x32xf32>
    %33 = arith.mulf %29, %11 : vector<8x32xf32>
    %34 = arith.mulf %28, %32 : vector<8x32xf32>
    %35 = arith.addf %33, %34 : vector<8x32xf32>
    %36 = math.tanh %35 : vector<8x32xf32>
    %37 = arith.mulf %30, %36 : vector<8x32xf32>
    %38 = vector.extract_strided_slice %21 {offsets = [0, 0], sizes = [8, 96], strides = [1, 1]} : vector<8x128xf32> to vector<8x96xf32>
    %39 = arith.negf %38 : vector<8x96xf32>
    %40 = math.exp %39 : vector<8x96xf32>
    %cst_21 = arith.constant 1.000000e+00 : f32
    %41 = vector.broadcast %cst_21 : f32 to vector<8x96xf32>
    %42 = arith.addf %41, %40 : vector<8x96xf32>
    %43 = arith.divf %41, %42 : vector<8x96xf32>
    %44 = vector.extract_strided_slice %43 {offsets = [0, 0], sizes = [8, 32], strides = [1, 1]} : vector<8x96xf32> to vector<8x32xf32>
    %45 = vector.extract_strided_slice %43 {offsets = [0, 32], sizes = [8, 32], strides = [1, 1]} : vector<8x96xf32> to vector<8x32xf32>
    %46 = vector.extract_strided_slice %43 {offsets = [0, 64], sizes = [8, 32], strides = [1, 1]} : vector<8x96xf32> to vector<8x32xf32>
    %47 = vector.extract_strided_slice %21 {offsets = [0, 96], sizes = [8, 32], strides = [1, 1]} : vector<8x128xf32> to vector<8x32xf32>
    %48 = math.tanh %47 : vector<8x32xf32>
    %49 = arith.mulf %45, %11 : vector<8x32xf32>
    %50 = arith.mulf %44, %48 : vector<8x32xf32>
    %51 = arith.addf %49, %50 : vector<8x32xf32>
    %52 = math.tanh %51 : vector<8x32xf32>
    %53 = arith.mulf %46, %52 : vector<8x32xf32>
    %54 = arith.truncf %37 : vector<8x32xf32> to vector<8x32xbf16>
    %c0_22 = arith.constant 0 : index
    %c0_23 = arith.constant 0 : index
    %c0_24 = arith.constant 0 : index
    %55 = vector.load %arg6[%c0_22, %c0_23, %c0_24] : memref<8x8x32xbf16, #tpu.memory_space<vmem>>, vector<1x8x32xbf16>
    %56 = vector.shape_cast %55 : vector<1x8x32xbf16> to vector<8x32xbf16>
    %57 = vector.shape_cast %54 : vector<8x32xbf16> to vector<1x8x32xbf16>
    tpu.vector_store %arg6[%c0_22, %c0_23, %c0_24], %57 {strides = array<i32>} : memref<8x8x32xbf16, #tpu.memory_space<vmem>>, vector<1x8x32xbf16>,
    %58 = arith.truncf %53 : vector<8x32xf32> to vector<8x32xbf16>
    %c7_25 = arith.constant 7 : index
    %c0_26 = arith.constant 0 : index
    %c0_27 = arith.constant 0 : index
    %59 = vector.load %arg7[%c7_25, %c0_26, %c0_27] : memref<8x8x32xbf16, #tpu.memory_space<vmem>>, vector<1x8x32xbf16>
    %60 = vector.shape_cast %59 : vector<1x8x32xbf16> to vector<8x32xbf16>
    %61 = vector.shape_cast %58 : vector<8x32xbf16> to vector<1x8x32xbf16>
    tpu.vector_store %arg7[%c7_25, %c0_26, %c0_27], %61 {strides = array<i32>} : memref<8x8x32xbf16, #tpu.memory_space<vmem>>, vector<1x8x32xbf16>,
    %c1_i32 = arith.constant 1 : i32
    %c7_i32 = arith.constant 7 : i32
    %62 = arith.subi %c7_i32, %c1_i32 : i32
    %63 = arith.index_cast %c1_i32 : i32 to index
    %c0_28 = arith.constant 0 : index
    %c0_29 = arith.constant 0 : index
    %64 = vector.load %arg8[%63, %c0_28, %c0_29] : memref<8x8x256xf32, #tpu.memory_space<vmem>>, vector<1x8x128xf32>
    %65 = vector.shape_cast %64 : vector<1x8x128xf32> to vector<8x128xf32>
    %66 = arith.truncf %37 : vector<8x32xf32> to vector<8x32xbf16>
    %cst_30 = arith.constant dense<0.000000e+00> : vector<8x128xf32>
    %67 = tpu.matmul %66, %9, %cst_30 {dimension_numbers = #tpu.dot_dimension_numbers<[1], [0], [0], [1], [0, 0, 1, 1], [], []>} : vector<8x32xbf16>, vector<32x128xbf16>, vector<8x128xf32> -> vector<8x128xf32>
    %68 = arith.addf %65, %67 : vector<8x128xf32>
    %69 = arith.index_cast %62 : i32 to index
    %c0_31 = arith.constant 0 : index
    %c128_32 = arith.constant 128 : index
    %70 = vector.load %arg8[%69, %c0_31, %c128_32] : memref<8x8x256xf32, #tpu.memory_space<vmem>>, vector<1x8x128xf32>
    %71 = vector.shape_cast %70 : vector<1x8x128xf32> to vector<8x128xf32>
    %72 = arith.truncf %53 : vector<8x32xf32> to vector<8x32xbf16>
    %cst_33 = arith.constant dense<0.000000e+00> : vector<8x128xf32>
    %73 = tpu.matmul %72, %10, %cst_33 {dimension_numbers = #tpu.dot_dimension_numbers<[1], [0], [0], [1], [0, 0, 1, 1], [], []>} : vector<8x32xbf16>, vector<32x128xbf16>, vector<8x128xf32> -> vector<8x128xf32>
    %74 = arith.addf %71, %73 : vector<8x128xf32>
    %75 = vector.extract_strided_slice %68 {offsets = [0, 0], sizes = [8, 96], strides = [1, 1]} : vector<8x128xf32> to vector<8x96xf32>
    %76 = arith.negf %75 : vector<8x96xf32>
    %77 = math.exp %76 : vector<8x96xf32>
    %cst_34 = arith.constant 1.000000e+00 : f32
    %78 = vector.broadcast %cst_34 : f32 to vector<8x96xf32>
    %79 = arith.addf %78, %77 : vector<8x96xf32>
    %80 = arith.divf %78, %79 : vector<8x96xf32>
    %81 = vector.extract_strided_slice %80 {offsets = [0, 0], sizes = [8, 32], strides = [1, 1]} : vector<8x96xf32> to vector<8x32xf32>
    %82 = vector.extract_strided_slice %80 {offsets = [0, 32], sizes = [8, 32], strides = [1, 1]} : vector<8x96xf32> to vector<8x32xf32>
    %83 = vector.extract_strided_slice %80 {offsets = [0, 64], sizes = [8, 32], strides = [1, 1]} : vector<8x96xf32> to vector<8x32xf32>
    %84 = vector.extract_strided_slice %68 {offsets = [0, 96], sizes = [8, 32], strides = [1, 1]} : vector<8x128xf32> to vector<8x32xf32>
    %85 = math.tanh %84 : vector<8x32xf32>
    %86 = arith.mulf %82, %35 : vector<8x32xf32>
    %87 = arith.mulf %81, %85 : vector<8x32xf32>
    %88 = arith.addf %86, %87 : vector<8x32xf32>
    %89 = math.tanh %88 : vector<8x32xf32>
    %90 = arith.mulf %83, %89 : vector<8x32xf32>
    %91 = vector.extract_strided_slice %74 {offsets = [0, 0], sizes = [8, 96], strides = [1, 1]} : vector<8x128xf32> to vector<8x96xf32>
    %92 = arith.negf %91 : vector<8x96xf32>
    %93 = math.exp %92 : vector<8x96xf32>
    %cst_35 = arith.constant 1.000000e+00 : f32
    %94 = vector.broadcast %cst_35 : f32 to vector<8x96xf32>
    %95 = arith.addf %94, %93 : vector<8x96xf32>
    %96 = arith.divf %94, %95 : vector<8x96xf32>
    %97 = vector.extract_strided_slice %96 {offsets = [0, 0], sizes = [8, 32], strides = [1, 1]} : vector<8x96xf32> to vector<8x32xf32>
    %98 = vector.extract_strided_slice %96 {offsets = [0, 32], sizes = [8, 32], strides = [1, 1]} : vector<8x96xf32> to vector<8x32xf32>
    %99 = vector.extract_strided_slice %96 {offsets = [0, 64], sizes = [8, 32], strides = [1, 1]} : vector<8x96xf32> to vector<8x32xf32>
    %100 = vector.extract_strided_slice %74 {offsets = [0, 96], sizes = [8, 32], strides = [1, 1]} : vector<8x128xf32> to vector<8x32xf32>
    %101 = math.tanh %100 : vector<8x32xf32>
    %102 = arith.mulf %98, %51 : vector<8x32xf32>
    %103 = arith.mulf %97, %101 : vector<8x32xf32>
    %104 = arith.addf %102, %103 : vector<8x32xf32>
    %105 = math.tanh %104 : vector<8x32xf32>
    %106 = arith.mulf %99, %105 : vector<8x32xf32>
    %107 = arith.truncf %90 : vector<8x32xf32> to vector<8x32xbf16>
    %108 = arith.index_cast %c1_i32 : i32 to index
    %c0_36 = arith.constant 0 : index
    %c0_37 = arith.constant 0 : index
    %109 = vector.load %arg6[%108, %c0_36, %c0_37] : memref<8x8x32xbf16, #tpu.memory_space<vmem>>, vector<1x8x32xbf16>
    %110 = vector.shape_cast %109 : vector<1x8x32xbf16> to vector<8x32xbf16>
    %111 = vector.shape_cast %107 : vector<8x32xbf16> to vector<1x8x32xbf16>
    tpu.vector_store %arg6[%108, %c0_36, %c0_37], %111 {strides = array<i32>} : memref<8x8x32xbf16, #tpu.memory_space<vmem>>, vector<1x8x32xbf16>,
    %112 = arith.truncf %106 : vector<8x32xf32> to vector<8x32xbf16>
    %113 = arith.index_cast %62 : i32 to index
    %c0_38 = arith.constant 0 : index
    %c0_39 = arith.constant 0 : index
    %114 = vector.load %arg7[%113, %c0_38, %c0_39] : memref<8x8x32xbf16, #tpu.memory_space<vmem>>, vector<1x8x32xbf16>
    %115 = vector.shape_cast %114 : vector<1x8x32xbf16> to vector<8x32xbf16>
    %116 = vector.shape_cast %112 : vector<8x32xbf16> to vector<1x8x32xbf16>
    tpu.vector_store %arg7[%113, %c0_38, %c0_39], %116 {strides = array<i32>} : memref<8x8x32xbf16, #tpu.memory_space<vmem>>, vector<1x8x32xbf16>,
    %c2_i32 = arith.constant 2 : i32
    %c7_i32_40 = arith.constant 7 : i32
    %117 = arith.subi %c7_i32_40, %c2_i32 : i32
    %118 = arith.index_cast %c2_i32 : i32 to index
    %c0_41 = arith.constant 0 : index
    %c0_42 = arith.constant 0 : index
    %119 = vector.load %arg8[%118, %c0_41, %c0_42] : memref<8x8x256xf32, #tpu.memory_space<vmem>>, vector<1x8x128xf32>
    %120 = vector.shape_cast %119 : vector<1x8x128xf32> to vector<8x128xf32>
    %121 = arith.truncf %90 : vector<8x32xf32> to vector<8x32xbf16>
    %cst_43 = arith.constant dense<0.000000e+00> : vector<8x128xf32>
    %122 = tpu.matmul %121, %9, %cst_43 {dimension_numbers = #tpu.dot_dimension_numbers<[1], [0], [0], [1], [0, 0, 1, 1], [], []>} : vector<8x32xbf16>, vector<32x128xbf16>, vector<8x128xf32> -> vector<8x128xf32>
    %123 = arith.addf %120, %122 : vector<8x128xf32>
    %124 = arith.index_cast %117 : i32 to index
    %c0_44 = arith.constant 0 : index
    %c128_45 = arith.constant 128 : index
    %125 = vector.load %arg8[%124, %c0_44, %c128_45] : memref<8x8x256xf32, #tpu.memory_space<vmem>>, vector<1x8x128xf32>
    %126 = vector.shape_cast %125 : vector<1x8x128xf32> to vector<8x128xf32>
    %127 = arith.truncf %106 : vector<8x32xf32> to vector<8x32xbf16>
    %cst_46 = arith.constant dense<0.000000e+00> : vector<8x128xf32>
    %128 = tpu.matmul %127, %10, %cst_46 {dimension_numbers = #tpu.dot_dimension_numbers<[1], [0], [0], [1], [0, 0, 1, 1], [], []>} : vector<8x32xbf16>, vector<32x128xbf16>, vector<8x128xf32> -> vector<8x128xf32>
    %129 = arith.addf %126, %128 : vector<8x128xf32>
    %130 = vector.extract_strided_slice %123 {offsets = [0, 0], sizes = [8, 96], strides = [1, 1]} : vector<8x128xf32> to vector<8x96xf32>
    %131 = arith.negf %130 : vector<8x96xf32>
    %132 = math.exp %131 : vector<8x96xf32>
    %cst_47 = arith.constant 1.000000e+00 : f32
    %133 = vector.broadcast %cst_47 : f32 to vector<8x96xf32>
    %134 = arith.addf %133, %132 : vector<8x96xf32>
    %135 = arith.divf %133, %134 : vector<8x96xf32>
    %136 = vector.extract_strided_slice %135 {offsets = [0, 0], sizes = [8, 32], strides = [1, 1]} : vector<8x96xf32> to vector<8x32xf32>
    %137 = vector.extract_strided_slice %135 {offsets = [0, 32], sizes = [8, 32], strides = [1, 1]} : vector<8x96xf32> to vector<8x32xf32>
    %138 = vector.extract_strided_slice %135 {offsets = [0, 64], sizes = [8, 32], strides = [1, 1]} : vector<8x96xf32> to vector<8x32xf32>
    %139 = vector.extract_strided_slice %123 {offsets = [0, 96], sizes = [8, 32], strides = [1, 1]} : vector<8x128xf32> to vector<8x32xf32>
    %140 = math.tanh %139 : vector<8x32xf32>
    %141 = arith.mulf %137, %88 : vector<8x32xf32>
    %142 = arith.mulf %136, %140 : vector<8x32xf32>
    %143 = arith.addf %141, %142 : vector<8x32xf32>
    %144 = math.tanh %143 : vector<8x32xf32>
    %145 = arith.mulf %138, %144 : vector<8x32xf32>
    %146 = vector.extract_strided_slice %129 {offsets = [0, 0], sizes = [8, 96], strides = [1, 1]} : vector<8x128xf32> to vector<8x96xf32>
    %147 = arith.negf %146 : vector<8x96xf32>
    %148 = math.exp %147 : vector<8x96xf32>
    %cst_48 = arith.constant 1.000000e+00 : f32
    %149 = vector.broadcast %cst_48 : f32 to vector<8x96xf32>
    %150 = arith.addf %149, %148 : vector<8x96xf32>
    %151 = arith.divf %149, %150 : vector<8x96xf32>
    %152 = vector.extract_strided_slice %151 {offsets = [0, 0], sizes = [8, 32], strides = [1, 1]} : vector<8x96xf32> to vector<8x32xf32>
    %153 = vector.extract_strided_slice %151 {offsets = [0, 32], sizes = [8, 32], strides = [1, 1]} : vector<8x96xf32> to vector<8x32xf32>
    %154 = vector.extract_strided_slice %151 {offsets = [0, 64], sizes = [8, 32], strides = [1, 1]} : vector<8x96xf32> to vector<8x32xf32>
    %155 = vector.extract_strided_slice %129 {offsets = [0, 96], sizes = [8, 32], strides = [1, 1]} : vector<8x128xf32> to vector<8x32xf32>
    %156 = math.tanh %155 : vector<8x32xf32>
    %157 = arith.mulf %153, %104 : vector<8x32xf32>
    %158 = arith.mulf %152, %156 : vector<8x32xf32>
    %159 = arith.addf %157, %158 : vector<8x32xf32>
    %160 = math.tanh %159 : vector<8x32xf32>
    %161 = arith.mulf %154, %160 : vector<8x32xf32>
    %162 = arith.truncf %145 : vector<8x32xf32> to vector<8x32xbf16>
    %163 = arith.index_cast %c2_i32 : i32 to index
    %c0_49 = arith.constant 0 : index
    %c0_50 = arith.constant 0 : index
    %164 = vector.load %arg6[%163, %c0_49, %c0_50] : memref<8x8x32xbf16, #tpu.memory_space<vmem>>, vector<1x8x32xbf16>
    %165 = vector.shape_cast %164 : vector<1x8x32xbf16> to vector<8x32xbf16>
    %166 = vector.shape_cast %162 : vector<8x32xbf16> to vector<1x8x32xbf16>
    tpu.vector_store %arg6[%163, %c0_49, %c0_50], %166 {strides = array<i32>} : memref<8x8x32xbf16, #tpu.memory_space<vmem>>, vector<1x8x32xbf16>,
    %167 = arith.truncf %161 : vector<8x32xf32> to vector<8x32xbf16>
    %168 = arith.index_cast %117 : i32 to index
    %c0_51 = arith.constant 0 : index
    %c0_52 = arith.constant 0 : index
    %169 = vector.load %arg7[%168, %c0_51, %c0_52] : memref<8x8x32xbf16, #tpu.memory_space<vmem>>, vector<1x8x32xbf16>
    %170 = vector.shape_cast %169 : vector<1x8x32xbf16> to vector<8x32xbf16>
    %171 = vector.shape_cast %167 : vector<8x32xbf16> to vector<1x8x32xbf16>
    tpu.vector_store %arg7[%168, %c0_51, %c0_52], %171 {strides = array<i32>} : memref<8x8x32xbf16, #tpu.memory_space<vmem>>, vector<1x8x32xbf16>,
    %c3_i32 = arith.constant 3 : i32
    %c7_i32_53 = arith.constant 7 : i32
    %172 = arith.subi %c7_i32_53, %c3_i32 : i32
    %173 = arith.index_cast %c3_i32 : i32 to index
    %c0_54 = arith.constant 0 : index
    %c0_55 = arith.constant 0 : index
    %174 = vector.load %arg8[%173, %c0_54, %c0_55] : memref<8x8x256xf32, #tpu.memory_space<vmem>>, vector<1x8x128xf32>
    %175 = vector.shape_cast %174 : vector<1x8x128xf32> to vector<8x128xf32>
    %176 = arith.truncf %145 : vector<8x32xf32> to vector<8x32xbf16>
    %cst_56 = arith.constant dense<0.000000e+00> : vector<8x128xf32>
    %177 = tpu.matmul %176, %9, %cst_56 {dimension_numbers = #tpu.dot_dimension_numbers<[1], [0], [0], [1], [0, 0, 1, 1], [], []>} : vector<8x32xbf16>, vector<32x128xbf16>, vector<8x128xf32> -> vector<8x128xf32>
    %178 = arith.addf %175, %177 : vector<8x128xf32>
    %179 = arith.index_cast %172 : i32 to index
    %c0_57 = arith.constant 0 : index
    %c128_58 = arith.constant 128 : index
    %180 = vector.load %arg8[%179, %c0_57, %c128_58] : memref<8x8x256xf32, #tpu.memory_space<vmem>>, vector<1x8x128xf32>
    %181 = vector.shape_cast %180 : vector<1x8x128xf32> to vector<8x128xf32>
    %182 = arith.truncf %161 : vector<8x32xf32> to vector<8x32xbf16>
    %cst_59 = arith.constant dense<0.000000e+00> : vector<8x128xf32>
    %183 = tpu.matmul %182, %10, %cst_59 {dimension_numbers = #tpu.dot_dimension_numbers<[1], [0], [0], [1], [0, 0, 1, 1], [], []>} : vector<8x32xbf16>, vector<32x128xbf16>, vector<8x128xf32> -> vector<8x128xf32>
    %184 = arith.addf %181, %183 : vector<8x128xf32>
    %185 = vector.extract_strided_slice %178 {offsets = [0, 0], sizes = [8, 96], strides = [1, 1]} : vector<8x128xf32> to vector<8x96xf32>
    %186 = arith.negf %185 : vector<8x96xf32>
    %187 = math.exp %186 : vector<8x96xf32>
    %cst_60 = arith.constant 1.000000e+00 : f32
    %188 = vector.broadcast %cst_60 : f32 to vector<8x96xf32>
    %189 = arith.addf %188, %187 : vector<8x96xf32>
    %190 = arith.divf %188, %189 : vector<8x96xf32>
    %191 = vector.extract_strided_slice %190 {offsets = [0, 0], sizes = [8, 32], strides = [1, 1]} : vector<8x96xf32> to vector<8x32xf32>
    %192 = vector.extract_strided_slice %190 {offsets = [0, 32], sizes = [8, 32], strides = [1, 1]} : vector<8x96xf32> to vector<8x32xf32>
    %193 = vector.extract_strided_slice %190 {offsets = [0, 64], sizes = [8, 32], strides = [1, 1]} : vector<8x96xf32> to vector<8x32xf32>
    %194 = vector.extract_strided_slice %178 {offsets = [0, 96], sizes = [8, 32], strides = [1, 1]} : vector<8x128xf32> to vector<8x32xf32>
    %195 = math.tanh %194 : vector<8x32xf32>
    %196 = arith.mulf %192, %143 : vector<8x32xf32>
    %197 = arith.mulf %191, %195 : vector<8x32xf32>
    %198 = arith.addf %196, %197 : vector<8x32xf32>
    %199 = math.tanh %198 : vector<8x32xf32>
    %200 = arith.mulf %193, %199 : vector<8x32xf32>
    %201 = vector.extract_strided_slice %184 {offsets = [0, 0], sizes = [8, 96], strides = [1, 1]} : vector<8x128xf32> to vector<8x96xf32>
    %202 = arith.negf %201 : vector<8x96xf32>
    %203 = math.exp %202 : vector<8x96xf32>
    %cst_61 = arith.constant 1.000000e+00 : f32
    %204 = vector.broadcast %cst_61 : f32 to vector<8x96xf32>
    %205 = arith.addf %204, %203 : vector<8x96xf32>
    %206 = arith.divf %204, %205 : vector<8x96xf32>
    %207 = vector.extract_strided_slice %206 {offsets = [0, 0], sizes = [8, 32], strides = [1, 1]} : vector<8x96xf32> to vector<8x32xf32>
    %208 = vector.extract_strided_slice %206 {offsets = [0, 32], sizes = [8, 32], strides = [1, 1]} : vector<8x96xf32> to vector<8x32xf32>
    %209 = vector.extract_strided_slice %206 {offsets = [0, 64], sizes = [8, 32], strides = [1, 1]} : vector<8x96xf32> to vector<8x32xf32>
    %210 = vector.extract_strided_slice %184 {offsets = [0, 96], sizes = [8, 32], strides = [1, 1]} : vector<8x128xf32> to vector<8x32xf32>
    %211 = math.tanh %210 : vector<8x32xf32>
    %212 = arith.mulf %208, %159 : vector<8x32xf32>
    %213 = arith.mulf %207, %211 : vector<8x32xf32>
    %214 = arith.addf %212, %213 : vector<8x32xf32>
    %215 = math.tanh %214 : vector<8x32xf32>
    %216 = arith.mulf %209, %215 : vector<8x32xf32>
    %217 = arith.truncf %200 : vector<8x32xf32> to vector<8x32xbf16>
    %218 = arith.index_cast %c3_i32 : i32 to index
    %c0_62 = arith.constant 0 : index
    %c0_63 = arith.constant 0 : index
    %219 = vector.load %arg6[%218, %c0_62, %c0_63] : memref<8x8x32xbf16, #tpu.memory_space<vmem>>, vector<1x8x32xbf16>
    %220 = vector.shape_cast %219 : vector<1x8x32xbf16> to vector<8x32xbf16>
    %221 = vector.shape_cast %217 : vector<8x32xbf16> to vector<1x8x32xbf16>
    tpu.vector_store %arg6[%218, %c0_62, %c0_63], %221 {strides = array<i32>} : memref<8x8x32xbf16, #tpu.memory_space<vmem>>, vector<1x8x32xbf16>,
    %222 = arith.truncf %216 : vector<8x32xf32> to vector<8x32xbf16>
    %223 = arith.index_cast %172 : i32 to index
    %c0_64 = arith.constant 0 : index
    %c0_65 = arith.constant 0 : index
    %224 = vector.load %arg7[%223, %c0_64, %c0_65] : memref<8x8x32xbf16, #tpu.memory_space<vmem>>, vector<1x8x32xbf16>
    %225 = vector.shape_cast %224 : vector<1x8x32xbf16> to vector<8x32xbf16>
    %226 = vector.shape_cast %222 : vector<8x32xbf16> to vector<1x8x32xbf16>
    tpu.vector_store %arg7[%223, %c0_64, %c0_65], %226 {strides = array<i32>} : memref<8x8x32xbf16, #tpu.memory_space<vmem>>, vector<1x8x32xbf16>,
    %c4_i32 = arith.constant 4 : i32
    %c7_i32_66 = arith.constant 7 : i32
    %227 = arith.subi %c7_i32_66, %c4_i32 : i32
    %228 = arith.index_cast %c4_i32 : i32 to index
    %c0_67 = arith.constant 0 : index
    %c0_68 = arith.constant 0 : index
    %229 = vector.load %arg8[%228, %c0_67, %c0_68] : memref<8x8x256xf32, #tpu.memory_space<vmem>>, vector<1x8x128xf32>
    %230 = vector.shape_cast %229 : vector<1x8x128xf32> to vector<8x128xf32>
    %231 = arith.truncf %200 : vector<8x32xf32> to vector<8x32xbf16>
    %cst_69 = arith.constant dense<0.000000e+00> : vector<8x128xf32>
    %232 = tpu.matmul %231, %9, %cst_69 {dimension_numbers = #tpu.dot_dimension_numbers<[1], [0], [0], [1], [0, 0, 1, 1], [], []>} : vector<8x32xbf16>, vector<32x128xbf16>, vector<8x128xf32> -> vector<8x128xf32>
    %233 = arith.addf %230, %232 : vector<8x128xf32>
    %234 = arith.index_cast %227 : i32 to index
    %c0_70 = arith.constant 0 : index
    %c128_71 = arith.constant 128 : index
    %235 = vector.load %arg8[%234, %c0_70, %c128_71] : memref<8x8x256xf32, #tpu.memory_space<vmem>>, vector<1x8x128xf32>
    %236 = vector.shape_cast %235 : vector<1x8x128xf32> to vector<8x128xf32>
    %237 = arith.truncf %216 : vector<8x32xf32> to vector<8x32xbf16>
    %cst_72 = arith.constant dense<0.000000e+00> : vector<8x128xf32>
    %238 = tpu.matmul %237, %10, %cst_72 {dimension_numbers = #tpu.dot_dimension_numbers<[1], [0], [0], [1], [0, 0, 1, 1], [], []>} : vector<8x32xbf16>, vector<32x128xbf16>, vector<8x128xf32> -> vector<8x128xf32>
    %239 = arith.addf %236, %238 : vector<8x128xf32>
    %240 = vector.extract_strided_slice %233 {offsets = [0, 0], sizes = [8, 96], strides = [1, 1]} : vector<8x128xf32> to vector<8x96xf32>
    %241 = arith.negf %240 : vector<8x96xf32>
    %242 = math.exp %241 : vector<8x96xf32>
    %cst_73 = arith.constant 1.000000e+00 : f32
    %243 = vector.broadcast %cst_73 : f32 to vector<8x96xf32>
    %244 = arith.addf %243, %242 : vector<8x96xf32>
    %245 = arith.divf %243, %244 : vector<8x96xf32>
    %246 = vector.extract_strided_slice %245 {offsets = [0, 0], sizes = [8, 32], strides = [1, 1]} : vector<8x96xf32> to vector<8x32xf32>
    %247 = vector.extract_strided_slice %245 {offsets = [0, 32], sizes = [8, 32], strides = [1, 1]} : vector<8x96xf32> to vector<8x32xf32>
    %248 = vector.extract_strided_slice %245 {offsets = [0, 64], sizes = [8, 32], strides = [1, 1]} : vector<8x96xf32> to vector<8x32xf32>
    %249 = vector.extract_strided_slice %233 {offsets = [0, 96], sizes = [8, 32], strides = [1, 1]} : vector<8x128xf32> to vector<8x32xf32>
    %250 = math.tanh %249 : vector<8x32xf32>
    %251 = arith.mulf %247, %198 : vector<8x32xf32>
    %252 = arith.mulf %246, %250 : vector<8x32xf32>
    %253 = arith.addf %251, %252 : vector<8x32xf32>
    %254 = math.tanh %253 : vector<8x32xf32>
    %255 = arith.mulf %248, %254 : vector<8x32xf32>
    %256 = vector.extract_strided_slice %239 {offsets = [0, 0], sizes = [8, 96], strides = [1, 1]} : vector<8x128xf32> to vector<8x96xf32>
    %257 = arith.negf %256 : vector<8x96xf32>
    %258 = math.exp %257 : vector<8x96xf32>
    %cst_74 = arith.constant 1.000000e+00 : f32
    %259 = vector.broadcast %cst_74 : f32 to vector<8x96xf32>
    %260 = arith.addf %259, %258 : vector<8x96xf32>
    %261 = arith.divf %259, %260 : vector<8x96xf32>
    %262 = vector.extract_strided_slice %261 {offsets = [0, 0], sizes = [8, 32], strides = [1, 1]} : vector<8x96xf32> to vector<8x32xf32>
    %263 = vector.extract_strided_slice %261 {offsets = [0, 32], sizes = [8, 32], strides = [1, 1]} : vector<8x96xf32> to vector<8x32xf32>
    %264 = vector.extract_strided_slice %261 {offsets = [0, 64], sizes = [8, 32], strides = [1, 1]} : vector<8x96xf32> to vector<8x32xf32>
    %265 = vector.extract_strided_slice %239 {offsets = [0, 96], sizes = [8, 32], strides = [1, 1]} : vector<8x128xf32> to vector<8x32xf32>
    %266 = math.tanh %265 : vector<8x32xf32>
    %267 = arith.mulf %263, %214 : vector<8x32xf32>
    %268 = arith.mulf %262, %266 : vector<8x32xf32>
    %269 = arith.addf %267, %268 : vector<8x32xf32>
    %270 = math.tanh %269 : vector<8x32xf32>
    %271 = arith.mulf %264, %270 : vector<8x32xf32>
    %272 = arith.truncf %255 : vector<8x32xf32> to vector<8x32xbf16>
    %273 = arith.index_cast %c4_i32 : i32 to index
    %c0_75 = arith.constant 0 : index
    %c0_76 = arith.constant 0 : index
    %274 = vector.load %arg6[%273, %c0_75, %c0_76] : memref<8x8x32xbf16, #tpu.memory_space<vmem>>, vector<1x8x32xbf16>
    %275 = vector.shape_cast %274 : vector<1x8x32xbf16> to vector<8x32xbf16>
    %276 = vector.shape_cast %272 : vector<8x32xbf16> to vector<1x8x32xbf16>
    tpu.vector_store %arg6[%273, %c0_75, %c0_76], %276 {strides = array<i32>} : memref<8x8x32xbf16, #tpu.memory_space<vmem>>, vector<1x8x32xbf16>,
    %277 = arith.truncf %271 : vector<8x32xf32> to vector<8x32xbf16>
    %278 = arith.index_cast %227 : i32 to index
    %c0_77 = arith.constant 0 : index
    %c0_78 = arith.constant 0 : index
    %279 = vector.load %arg7[%278, %c0_77, %c0_78] : memref<8x8x32xbf16, #tpu.memory_space<vmem>>, vector<1x8x32xbf16>
    %280 = vector.shape_cast %279 : vector<1x8x32xbf16> to vector<8x32xbf16>
    %281 = vector.shape_cast %277 : vector<8x32xbf16> to vector<1x8x32xbf16>
    tpu.vector_store %arg7[%278, %c0_77, %c0_78], %281 {strides = array<i32>} : memref<8x8x32xbf16, #tpu.memory_space<vmem>>, vector<1x8x32xbf16>,
    %c5_i32 = arith.constant 5 : i32
    %c7_i32_79 = arith.constant 7 : i32
    %282 = arith.subi %c7_i32_79, %c5_i32 : i32
    %283 = arith.index_cast %c5_i32 : i32 to index
    %c0_80 = arith.constant 0 : index
    %c0_81 = arith.constant 0 : index
    %284 = vector.load %arg8[%283, %c0_80, %c0_81] : memref<8x8x256xf32, #tpu.memory_space<vmem>>, vector<1x8x128xf32>
    %285 = vector.shape_cast %284 : vector<1x8x128xf32> to vector<8x128xf32>
    %286 = arith.truncf %255 : vector<8x32xf32> to vector<8x32xbf16>
    %cst_82 = arith.constant dense<0.000000e+00> : vector<8x128xf32>
    %287 = tpu.matmul %286, %9, %cst_82 {dimension_numbers = #tpu.dot_dimension_numbers<[1], [0], [0], [1], [0, 0, 1, 1], [], []>} : vector<8x32xbf16>, vector<32x128xbf16>, vector<8x128xf32> -> vector<8x128xf32>
    %288 = arith.addf %285, %287 : vector<8x128xf32>
    %289 = arith.index_cast %282 : i32 to index
    %c0_83 = arith.constant 0 : index
    %c128_84 = arith.constant 128 : index
    %290 = vector.load %arg8[%289, %c0_83, %c128_84] : memref<8x8x256xf32, #tpu.memory_space<vmem>>, vector<1x8x128xf32>
    %291 = vector.shape_cast %290 : vector<1x8x128xf32> to vector<8x128xf32>
    %292 = arith.truncf %271 : vector<8x32xf32> to vector<8x32xbf16>
    %cst_85 = arith.constant dense<0.000000e+00> : vector<8x128xf32>
    %293 = tpu.matmul %292, %10, %cst_85 {dimension_numbers = #tpu.dot_dimension_numbers<[1], [0], [0], [1], [0, 0, 1, 1], [], []>} : vector<8x32xbf16>, vector<32x128xbf16>, vector<8x128xf32> -> vector<8x128xf32>
    %294 = arith.addf %291, %293 : vector<8x128xf32>
    %295 = vector.extract_strided_slice %288 {offsets = [0, 0], sizes = [8, 96], strides = [1, 1]} : vector<8x128xf32> to vector<8x96xf32>
    %296 = arith.negf %295 : vector<8x96xf32>
    %297 = math.exp %296 : vector<8x96xf32>
    %cst_86 = arith.constant 1.000000e+00 : f32
    %298 = vector.broadcast %cst_86 : f32 to vector<8x96xf32>
    %299 = arith.addf %298, %297 : vector<8x96xf32>
    %300 = arith.divf %298, %299 : vector<8x96xf32>
    %301 = vector.extract_strided_slice %300 {offsets = [0, 0], sizes = [8, 32], strides = [1, 1]} : vector<8x96xf32> to vector<8x32xf32>
    %302 = vector.extract_strided_slice %300 {offsets = [0, 32], sizes = [8, 32], strides = [1, 1]} : vector<8x96xf32> to vector<8x32xf32>
    %303 = vector.extract_strided_slice %300 {offsets = [0, 64], sizes = [8, 32], strides = [1, 1]} : vector<8x96xf32> to vector<8x32xf32>
    %304 = vector.extract_strided_slice %288 {offsets = [0, 96], sizes = [8, 32], strides = [1, 1]} : vector<8x128xf32> to vector<8x32xf32>
    %305 = math.tanh %304 : vector<8x32xf32>
    %306 = arith.mulf %302, %253 : vector<8x32xf32>
    %307 = arith.mulf %301, %305 : vector<8x32xf32>
    %308 = arith.addf %306, %307 : vector<8x32xf32>
    %309 = math.tanh %308 : vector<8x32xf32>
    %310 = arith.mulf %303, %309 : vector<8x32xf32>
    %311 = vector.extract_strided_slice %294 {offsets = [0, 0], sizes = [8, 96], strides = [1, 1]} : vector<8x128xf32> to vector<8x96xf32>
    %312 = arith.negf %311 : vector<8x96xf32>
    %313 = math.exp %312 : vector<8x96xf32>
    %cst_87 = arith.constant 1.000000e+00 : f32
    %314 = vector.broadcast %cst_87 : f32 to vector<8x96xf32>
    %315 = arith.addf %314, %313 : vector<8x96xf32>
    %316 = arith.divf %314, %315 : vector<8x96xf32>
    %317 = vector.extract_strided_slice %316 {offsets = [0, 0], sizes = [8, 32], strides = [1, 1]} : vector<8x96xf32> to vector<8x32xf32>
    %318 = vector.extract_strided_slice %316 {offsets = [0, 32], sizes = [8, 32], strides = [1, 1]} : vector<8x96xf32> to vector<8x32xf32>
    %319 = vector.extract_strided_slice %316 {offsets = [0, 64], sizes = [8, 32], strides = [1, 1]} : vector<8x96xf32> to vector<8x32xf32>
    %320 = vector.extract_strided_slice %294 {offsets = [0, 96], sizes = [8, 32], strides = [1, 1]} : vector<8x128xf32> to vector<8x32xf32>
    %321 = math.tanh %320 : vector<8x32xf32>
    %322 = arith.mulf %318, %269 : vector<8x32xf32>
    %323 = arith.mulf %317, %321 : vector<8x32xf32>
    %324 = arith.addf %322, %323 : vector<8x32xf32>
    %325 = math.tanh %324 : vector<8x32xf32>
    %326 = arith.mulf %319, %325 : vector<8x32xf32>
    %327 = arith.truncf %310 : vector<8x32xf32> to vector<8x32xbf16>
    %328 = arith.index_cast %c5_i32 : i32 to index
    %c0_88 = arith.constant 0 : index
    %c0_89 = arith.constant 0 : index
    %329 = vector.load %arg6[%328, %c0_88, %c0_89] : memref<8x8x32xbf16, #tpu.memory_space<vmem>>, vector<1x8x32xbf16>
    %330 = vector.shape_cast %329 : vector<1x8x32xbf16> to vector<8x32xbf16>
    %331 = vector.shape_cast %327 : vector<8x32xbf16> to vector<1x8x32xbf16>
    tpu.vector_store %arg6[%328, %c0_88, %c0_89], %331 {strides = array<i32>} : memref<8x8x32xbf16, #tpu.memory_space<vmem>>, vector<1x8x32xbf16>,
    %332 = arith.truncf %326 : vector<8x32xf32> to vector<8x32xbf16>
    %333 = arith.index_cast %282 : i32 to index
    %c0_90 = arith.constant 0 : index
    %c0_91 = arith.constant 0 : index
    %334 = vector.load %arg7[%333, %c0_90, %c0_91] : memref<8x8x32xbf16, #tpu.memory_space<vmem>>, vector<1x8x32xbf16>
    %335 = vector.shape_cast %334 : vector<1x8x32xbf16> to vector<8x32xbf16>
    %336 = vector.shape_cast %332 : vector<8x32xbf16> to vector<1x8x32xbf16>
    tpu.vector_store %arg7[%333, %c0_90, %c0_91], %336 {strides = array<i32>} : memref<8x8x32xbf16, #tpu.memory_space<vmem>>, vector<1x8x32xbf16>,
    %c6_i32 = arith.constant 6 : i32
    %c7_i32_92 = arith.constant 7 : i32
    %337 = arith.subi %c7_i32_92, %c6_i32 : i32
    %338 = arith.index_cast %c6_i32 : i32 to index
    %c0_93 = arith.constant 0 : index
    %c0_94 = arith.constant 0 : index
    %339 = vector.load %arg8[%338, %c0_93, %c0_94] : memref<8x8x256xf32, #tpu.memory_space<vmem>>, vector<1x8x128xf32>
    %340 = vector.shape_cast %339 : vector<1x8x128xf32> to vector<8x128xf32>
    %341 = arith.truncf %310 : vector<8x32xf32> to vector<8x32xbf16>
    %cst_95 = arith.constant dense<0.000000e+00> : vector<8x128xf32>
    %342 = tpu.matmul %341, %9, %cst_95 {dimension_numbers = #tpu.dot_dimension_numbers<[1], [0], [0], [1], [0, 0, 1, 1], [], []>} : vector<8x32xbf16>, vector<32x128xbf16>, vector<8x128xf32> -> vector<8x128xf32>
    %343 = arith.addf %340, %342 : vector<8x128xf32>
    %344 = arith.index_cast %337 : i32 to index
    %c0_96 = arith.constant 0 : index
    %c128_97 = arith.constant 128 : index
    %345 = vector.load %arg8[%344, %c0_96, %c128_97] : memref<8x8x256xf32, #tpu.memory_space<vmem>>, vector<1x8x128xf32>
    %346 = vector.shape_cast %345 : vector<1x8x128xf32> to vector<8x128xf32>
    %347 = arith.truncf %326 : vector<8x32xf32> to vector<8x32xbf16>
    %cst_98 = arith.constant dense<0.000000e+00> : vector<8x128xf32>
    %348 = tpu.matmul %347, %10, %cst_98 {dimension_numbers = #tpu.dot_dimension_numbers<[1], [0], [0], [1], [0, 0, 1, 1], [], []>} : vector<8x32xbf16>, vector<32x128xbf16>, vector<8x128xf32> -> vector<8x128xf32>
    %349 = arith.addf %346, %348 : vector<8x128xf32>
    %350 = vector.extract_strided_slice %343 {offsets = [0, 0], sizes = [8, 96], strides = [1, 1]} : vector<8x128xf32> to vector<8x96xf32>
    %351 = arith.negf %350 : vector<8x96xf32>
    %352 = math.exp %351 : vector<8x96xf32>
    %cst_99 = arith.constant 1.000000e+00 : f32
    %353 = vector.broadcast %cst_99 : f32 to vector<8x96xf32>
    %354 = arith.addf %353, %352 : vector<8x96xf32>
    %355 = arith.divf %353, %354 : vector<8x96xf32>
    %356 = vector.extract_strided_slice %355 {offsets = [0, 0], sizes = [8, 32], strides = [1, 1]} : vector<8x96xf32> to vector<8x32xf32>
    %357 = vector.extract_strided_slice %355 {offsets = [0, 32], sizes = [8, 32], strides = [1, 1]} : vector<8x96xf32> to vector<8x32xf32>
    %358 = vector.extract_strided_slice %355 {offsets = [0, 64], sizes = [8, 32], strides = [1, 1]} : vector<8x96xf32> to vector<8x32xf32>
    %359 = vector.extract_strided_slice %343 {offsets = [0, 96], sizes = [8, 32], strides = [1, 1]} : vector<8x128xf32> to vector<8x32xf32>
    %360 = math.tanh %359 : vector<8x32xf32>
    %361 = arith.mulf %357, %308 : vector<8x32xf32>
    %362 = arith.mulf %356, %360 : vector<8x32xf32>
    %363 = arith.addf %361, %362 : vector<8x32xf32>
    %364 = math.tanh %363 : vector<8x32xf32>
    %365 = arith.mulf %358, %364 : vector<8x32xf32>
    %366 = vector.extract_strided_slice %349 {offsets = [0, 0], sizes = [8, 96], strides = [1, 1]} : vector<8x128xf32> to vector<8x96xf32>
    %367 = arith.negf %366 : vector<8x96xf32>
    %368 = math.exp %367 : vector<8x96xf32>
    %cst_100 = arith.constant 1.000000e+00 : f32
    %369 = vector.broadcast %cst_100 : f32 to vector<8x96xf32>
    %370 = arith.addf %369, %368 : vector<8x96xf32>
    %371 = arith.divf %369, %370 : vector<8x96xf32>
    %372 = vector.extract_strided_slice %371 {offsets = [0, 0], sizes = [8, 32], strides = [1, 1]} : vector<8x96xf32> to vector<8x32xf32>
    %373 = vector.extract_strided_slice %371 {offsets = [0, 32], sizes = [8, 32], strides = [1, 1]} : vector<8x96xf32> to vector<8x32xf32>
    %374 = vector.extract_strided_slice %371 {offsets = [0, 64], sizes = [8, 32], strides = [1, 1]} : vector<8x96xf32> to vector<8x32xf32>
    %375 = vector.extract_strided_slice %349 {offsets = [0, 96], sizes = [8, 32], strides = [1, 1]} : vector<8x128xf32> to vector<8x32xf32>
    %376 = math.tanh %375 : vector<8x32xf32>
    %377 = arith.mulf %373, %324 : vector<8x32xf32>
    %378 = arith.mulf %372, %376 : vector<8x32xf32>
    %379 = arith.addf %377, %378 : vector<8x32xf32>
    %380 = math.tanh %379 : vector<8x32xf32>
    %381 = arith.mulf %374, %380 : vector<8x32xf32>
    %382 = arith.truncf %365 : vector<8x32xf32> to vector<8x32xbf16>
    %383 = arith.index_cast %c6_i32 : i32 to index
    %c0_101 = arith.constant 0 : index
    %c0_102 = arith.constant 0 : index
    %384 = vector.load %arg6[%383, %c0_101, %c0_102] : memref<8x8x32xbf16, #tpu.memory_space<vmem>>, vector<1x8x32xbf16>
    %385 = vector.shape_cast %384 : vector<1x8x32xbf16> to vector<8x32xbf16>
    %386 = vector.shape_cast %382 : vector<8x32xbf16> to vector<1x8x32xbf16>
    tpu.vector_store %arg6[%383, %c0_101, %c0_102], %386 {strides = array<i32>} : memref<8x8x32xbf16, #tpu.memory_space<vmem>>, vector<1x8x32xbf16>,
    %387 = arith.truncf %381 : vector<8x32xf32> to vector<8x32xbf16>
    %388 = arith.index_cast %337 : i32 to index
    %c0_103 = arith.constant 0 : index
    %c0_104 = arith.constant 0 : index
    %389 = vector.load %arg7[%388, %c0_103, %c0_104] : memref<8x8x32xbf16, #tpu.memory_space<vmem>>, vector<1x8x32xbf16>
    %390 = vector.shape_cast %389 : vector<1x8x32xbf16> to vector<8x32xbf16>
    %391 = vector.shape_cast %387 : vector<8x32xbf16> to vector<1x8x32xbf16>
    tpu.vector_store %arg7[%388, %c0_103, %c0_104], %391 {strides = array<i32>} : memref<8x8x32xbf16, #tpu.memory_space<vmem>>, vector<1x8x32xbf16>,
    %c7_i32_105 = arith.constant 7 : i32
    %c7_i32_106 = arith.constant 7 : i32
    %392 = arith.subi %c7_i32_106, %c7_i32_105 : i32
    %393 = arith.index_cast %c7_i32_105 : i32 to index
    %c0_107 = arith.constant 0 : index
    %c0_108 = arith.constant 0 : index
    %394 = vector.load %arg8[%393, %c0_107, %c0_108] : memref<8x8x256xf32, #tpu.memory_space<vmem>>, vector<1x8x128xf32>
    %395 = vector.shape_cast %394 : vector<1x8x128xf32> to vector<8x128xf32>
    %396 = arith.truncf %365 : vector<8x32xf32> to vector<8x32xbf16>
    %cst_109 = arith.constant dense<0.000000e+00> : vector<8x128xf32>
    %397 = tpu.matmul %396, %9, %cst_109 {dimension_numbers = #tpu.dot_dimension_numbers<[1], [0], [0], [1], [0, 0, 1, 1], [], []>} : vector<8x32xbf16>, vector<32x128xbf16>, vector<8x128xf32> -> vector<8x128xf32>
    %398 = arith.addf %395, %397 : vector<8x128xf32>
    %399 = arith.index_cast %392 : i32 to index
    %c0_110 = arith.constant 0 : index
    %c128_111 = arith.constant 128 : index
    %400 = vector.load %arg8[%399, %c0_110, %c128_111] : memref<8x8x256xf32, #tpu.memory_space<vmem>>, vector<1x8x128xf32>
    %401 = vector.shape_cast %400 : vector<1x8x128xf32> to vector<8x128xf32>
    %402 = arith.truncf %381 : vector<8x32xf32> to vector<8x32xbf16>
    %cst_112 = arith.constant dense<0.000000e+00> : vector<8x128xf32>
    %403 = tpu.matmul %402, %10, %cst_112 {dimension_numbers = #tpu.dot_dimension_numbers<[1], [0], [0], [1], [0, 0, 1, 1], [], []>} : vector<8x32xbf16>, vector<32x128xbf16>, vector<8x128xf32> -> vector<8x128xf32>
    %404 = arith.addf %401, %403 : vector<8x128xf32>
    %405 = vector.extract_strided_slice %398 {offsets = [0, 0], sizes = [8, 96], strides = [1, 1]} : vector<8x128xf32> to vector<8x96xf32>
    %406 = arith.negf %405 : vector<8x96xf32>
    %407 = math.exp %406 : vector<8x96xf32>
    %cst_113 = arith.constant 1.000000e+00 : f32
    %408 = vector.broadcast %cst_113 : f32 to vector<8x96xf32>
    %409 = arith.addf %408, %407 : vector<8x96xf32>
    %410 = arith.divf %408, %409 : vector<8x96xf32>
    %411 = vector.extract_strided_slice %410 {offsets = [0, 0], sizes = [8, 32], strides = [1, 1]} : vector<8x96xf32> to vector<8x32xf32>
    %412 = vector.extract_strided_slice %410 {offsets = [0, 32], sizes = [8, 32], strides = [1, 1]} : vector<8x96xf32> to vector<8x32xf32>
    %413 = vector.extract_strided_slice %410 {offsets = [0, 64], sizes = [8, 32], strides = [1, 1]} : vector<8x96xf32> to vector<8x32xf32>
    %414 = vector.extract_strided_slice %398 {offsets = [0, 96], sizes = [8, 32], strides = [1, 1]} : vector<8x128xf32> to vector<8x32xf32>
    %415 = math.tanh %414 : vector<8x32xf32>
    %416 = arith.mulf %412, %363 : vector<8x32xf32>
    %417 = arith.mulf %411, %415 : vector<8x32xf32>
    %418 = arith.addf %416, %417 : vector<8x32xf32>
    %419 = math.tanh %418 : vector<8x32xf32>
    %420 = arith.mulf %413, %419 : vector<8x32xf32>
    %421 = vector.extract_strided_slice %404 {offsets = [0, 0], sizes = [8, 96], strides = [1, 1]} : vector<8x128xf32> to vector<8x96xf32>
    %422 = arith.negf %421 : vector<8x96xf32>
    %423 = math.exp %422 : vector<8x96xf32>
    %cst_114 = arith.constant 1.000000e+00 : f32
    %424 = vector.broadcast %cst_114 : f32 to vector<8x96xf32>
    %425 = arith.addf %424, %423 : vector<8x96xf32>
    %426 = arith.divf %424, %425 : vector<8x96xf32>
    %427 = vector.extract_strided_slice %426 {offsets = [0, 0], sizes = [8, 32], strides = [1, 1]} : vector<8x96xf32> to vector<8x32xf32>
    %428 = vector.extract_strided_slice %426 {offsets = [0, 32], sizes = [8, 32], strides = [1, 1]} : vector<8x96xf32> to vector<8x32xf32>
    %429 = vector.extract_strided_slice %426 {offsets = [0, 64], sizes = [8, 32], strides = [1, 1]} : vector<8x96xf32> to vector<8x32xf32>
    %430 = vector.extract_strided_slice %404 {offsets = [0, 96], sizes = [8, 32], strides = [1, 1]} : vector<8x128xf32> to vector<8x32xf32>
    %431 = math.tanh %430 : vector<8x32xf32>
    %432 = arith.mulf %428, %379 : vector<8x32xf32>
    %433 = arith.mulf %427, %431 : vector<8x32xf32>
    %434 = arith.addf %432, %433 : vector<8x32xf32>
    %435 = math.tanh %434 : vector<8x32xf32>
    %436 = arith.mulf %429, %435 : vector<8x32xf32>
    %437 = arith.truncf %420 : vector<8x32xf32> to vector<8x32xbf16>
    %438 = arith.index_cast %c7_i32_105 : i32 to index
    %c0_115 = arith.constant 0 : index
    %c0_116 = arith.constant 0 : index
    %439 = vector.load %arg6[%438, %c0_115, %c0_116] : memref<8x8x32xbf16, #tpu.memory_space<vmem>>, vector<1x8x32xbf16>
    %440 = vector.shape_cast %439 : vector<1x8x32xbf16> to vector<8x32xbf16>
    %441 = vector.shape_cast %437 : vector<8x32xbf16> to vector<1x8x32xbf16>
    tpu.vector_store %arg6[%438, %c0_115, %c0_116], %441 {strides = array<i32>} : memref<8x8x32xbf16, #tpu.memory_space<vmem>>, vector<1x8x32xbf16>,
    %442 = arith.truncf %436 : vector<8x32xf32> to vector<8x32xbf16>
    %443 = arith.index_cast %392 : i32 to index
    %c0_117 = arith.constant 0 : index
    %c0_118 = arith.constant 0 : index
    %444 = vector.load %arg7[%443, %c0_117, %c0_118] : memref<8x8x32xbf16, #tpu.memory_space<vmem>>, vector<1x8x32xbf16>
    %445 = vector.shape_cast %444 : vector<1x8x32xbf16> to vector<8x32xbf16>
    %446 = vector.shape_cast %442 : vector<8x32xbf16> to vector<1x8x32xbf16>
    tpu.vector_store %arg7[%443, %c0_117, %c0_118], %446 {strides = array<i32>} : memref<8x8x32xbf16, #tpu.memory_space<vmem>>, vector<1x8x32xbf16>,
    %c7_i32_119 = arith.constant 7 : i32
    return
  }
  func.func @transform_0(%arg0: i32) -> (i32, i32, i32) {
    %c0_i32 = arith.constant 0 : i32
    %c0_i32_0 = arith.constant 0 : i32
    %c0_i32_1 = arith.constant 0 : i32
    return %c0_i32, %arg0, %c0_i32_0 : i32, i32, i32
  }
  func.func @transform_1(%arg0: i32) -> (i32, i32) {
    %c0_i32 = arith.constant 0 : i32
    %c0_i32_0 = arith.constant 0 : i32
    %c0_i32_1 = arith.constant 0 : i32
    return %c0_i32, %c0_i32_0 : i32, i32
  }
  func.func @transform_2(%arg0: i32) -> (i32, i32) {
    %c0_i32 = arith.constant 0 : i32
    %c0_i32_0 = arith.constant 0 : i32
    %c0_i32_1 = arith.constant 0 : i32
    return %c0_i32, %c0_i32_0 : i32, i32
  }
  func.func @transform_3(%arg0: i32) -> (i32, i32) {
    %c0_i32 = arith.constant 0 : i32
    %c0_i32_0 = arith.constant 0 : i32
    %c0_i32_1 = arith.constant 0 : i32
    return %c0_i32, %c0_i32_0 : i32, i32
  }
  func.func @transform_4(%arg0: i32) -> (i32, i32) {
    %c0_i32 = arith.constant 0 : i32
    %c0_i32_0 = arith.constant 0 : i32
    %c0_i32_1 = arith.constant 0 : i32
    return %c0_i32, %c0_i32_0 : i32, i32
  }
  func.func @transform_5(%arg0: i32) -> (i32, i32, i32) {
    %c0_i32 = arith.constant 0 : i32
    %c0_i32_0 = arith.constant 0 : i32
    %c0_i32_1 = arith.constant 0 : i32
    return %c0_i32, %arg0, %c0_i32_0 : i32, i32, i32
  }
  func.func @transform_6(%arg0: i32) -> (i32, i32, i32) {
    %c0_i32 = arith.constant 0 : i32
    %c0_i32_0 = arith.constant 0 : i32
    %c0_i32_1 = arith.constant 0 : i32
    return %c0_i32, %arg0, %c0_i32_0 : i32, i32, i32
  }
}

module attributes {stable_mosaic.version = 11 : i64} {
  func.func @kernel(%arg0: i32, %arg1: memref<8x8x32xbf16, #tpu.memory_space<vmem>>, %arg2: memref<8x8x32xbf16, #tpu.memory_space<vmem>>, %arg3: memref<64x256xbf16, #tpu.memory_space<vmem>>, %arg4: memref<1x256xf32, #tpu.memory_space<vmem>>, %arg5: memref<32x128xbf16, #tpu.memory_space<vmem>>, %arg6: memref<32x128xbf16, #tpu.memory_space<vmem>>, %arg7: memref<64x4xf32, #tpu.memory_space<vmem>>, %arg8: memref<1x4xf32, #tpu.memory_space<vmem>>, %arg9: memref<8x4xf32, #tpu.memory_space<vmem>>, %arg10: memref<8x8x256xf32, #tpu.memory_space<vmem>>) attributes {dimension_semantics = [#tpu.dimension_semantics<parallel>], iteration_bounds = array<i64: 1>, scalar_prefetch = 0 : i64, scratch_operands = 1 : i64, tpu.core_type = #tpu.core_type<tc>, window_params = [{transform_indices = @transform_0, window_bounds = array<i64: 8, 8, 32>}, {transform_indices = @transform_1, window_bounds = array<i64: 8, 8, 32>}, {pipeline_mode = #tpu.pipeline_mode<synchronous>, transform_indices = @transform_2, window_bounds = array<i64: 64, 256>}, {pipeline_mode = #tpu.pipeline_mode<synchronous>, transform_indices = @transform_3, window_bounds = array<i64: 1, 256>}, {pipeline_mode = #tpu.pipeline_mode<synchronous>, transform_indices = @transform_4, window_bounds = array<i64: 32, 128>}, {pipeline_mode = #tpu.pipeline_mode<synchronous>, transform_indices = @transform_5, window_bounds = array<i64: 32, 128>}, {pipeline_mode = #tpu.pipeline_mode<synchronous>, transform_indices = @transform_6, window_bounds = array<i64: 64, 4>}, {pipeline_mode = #tpu.pipeline_mode<synchronous>, transform_indices = @transform_7, window_bounds = array<i64: 1, 4>}, {transform_indices = @transform_8, window_bounds = array<i64: 8, 4>}]} {
    %c0 = arith.constant 0 : index
    %c0_0 = arith.constant 0 : index
    %0 = vector.load %arg4[%c0, %c0_0] : memref<1x256xf32, #tpu.memory_space<vmem>>, vector<1x256xf32>
    %c0_1 = arith.constant 0 : index
    %c0_2 = arith.constant 0 : index
    %1 = vector.load %arg3[%c0_1, %c0_2] : memref<64x256xbf16, #tpu.memory_space<vmem>>, vector<64x256xbf16>
    %c0_3 = arith.constant 0 : index
    %c0_4 = arith.constant 0 : index
    %c0_5 = arith.constant 0 : index
    %2 = vector.load %arg1[%c0_3, %c0_4, %c0_5] : memref<8x8x32xbf16, #tpu.memory_space<vmem>>, vector<8x8x32xbf16>
    %3 = vector.shape_cast %2 : vector<8x8x32xbf16> to vector<64x32xbf16>
    %4 = vector.extract_strided_slice %1 {offsets = [0, 0], sizes = [32, 256], strides = [1, 1]} : vector<64x256xbf16> to vector<32x256xbf16>
    %cst = arith.constant dense<0.000000e+00> : vector<64x256xf32>
    %5 = tpu.matmul %3, %4, %cst {dimension_numbers = #tpu.dot_dimension_numbers<[1], [0], [0], [1], [0, 0, 1, 1], [], []>} : vector<64x32xbf16>, vector<32x256xbf16>, vector<64x256xf32> -> vector<64x256xf32>
    %c0_6 = arith.constant 0 : index
    %c0_7 = arith.constant 0 : index
    %c0_8 = arith.constant 0 : index
    %6 = vector.load %arg2[%c0_6, %c0_7, %c0_8] : memref<8x8x32xbf16, #tpu.memory_space<vmem>>, vector<8x8x32xbf16>
    %7 = vector.shape_cast %6 : vector<8x8x32xbf16> to vector<64x32xbf16>
    %8 = vector.extract_strided_slice %1 {offsets = [32, 0], sizes = [32, 256], strides = [1, 1]} : vector<64x256xbf16> to vector<32x256xbf16>
    %cst_9 = arith.constant dense<0.000000e+00> : vector<64x256xf32>
    %9 = tpu.matmul %7, %8, %cst_9 {dimension_numbers = #tpu.dot_dimension_numbers<[1], [0], [0], [1], [0, 0, 1, 1], [], []>} : vector<64x32xbf16>, vector<32x256xbf16>, vector<64x256xf32> -> vector<64x256xf32>
    %10 = arith.addf %5, %9 : vector<64x256xf32>
    %11 = vector.broadcast %0 : vector<1x256xf32> to vector<64x256xf32>
    %12 = arith.addf %10, %11 : vector<64x256xf32>
    %13 = vector.shape_cast %12 : vector<64x256xf32> to vector<8x8x256xf32>
    %c0_10 = arith.constant 0 : index
    %c0_11 = arith.constant 0 : index
    %c0_12 = arith.constant 0 : index
    %14 = vector.load %arg10[%c0_10, %c0_11, %c0_12] : memref<8x8x256xf32, #tpu.memory_space<vmem>>, vector<8x8x256xf32>
    tpu.vector_store %arg10[%c0_10, %c0_11, %c0_12], %13 {strides = array<i32>} : memref<8x8x256xf32, #tpu.memory_space<vmem>>, vector<8x8x256xf32>,
    %c0_13 = arith.constant 0 : index
    %c0_14 = arith.constant 0 : index
    %15 = vector.load %arg5[%c0_13, %c0_14] : memref<32x128xbf16, #tpu.memory_space<vmem>>, vector<32x128xbf16>
    %c0_15 = arith.constant 0 : index
    %c0_16 = arith.constant 0 : index
    %16 = vector.load %arg6[%c0_15, %c0_16] : memref<32x128xbf16, #tpu.memory_space<vmem>>, vector<32x128xbf16>
    %cst_17 = arith.constant 0.000000e+00 : f32
    %17 = vector.broadcast %cst_17 : f32 to vector<8x32xf32>
    %c0_18 = arith.constant 0 : index
    %c0_19 = arith.constant 0 : index
    %c0_20 = arith.constant 0 : index
    %18 = vector.load %arg10[%c0_18, %c0_19, %c0_20] : memref<8x8x256xf32, #tpu.memory_space<vmem>>, vector<1x8x128xf32>
    %19 = vector.shape_cast %18 : vector<1x8x128xf32> to vector<8x128xf32>
    %20 = arith.truncf %17 : vector<8x32xf32> to vector<8x32xbf16>
    %cst_21 = arith.constant dense<0.000000e+00> : vector<8x128xf32>
    %21 = tpu.matmul %20, %15, %cst_21 {dimension_numbers = #tpu.dot_dimension_numbers<[1], [0], [0], [1], [0, 0, 1, 1], [], []>} : vector<8x32xbf16>, vector<32x128xbf16>, vector<8x128xf32> -> vector<8x128xf32>
    %22 = arith.addf %19, %21 : vector<8x128xf32>
    %c7 = arith.constant 7 : index
    %c0_22 = arith.constant 0 : index
    %c128 = arith.constant 128 : index
    %23 = vector.load %arg10[%c7, %c0_22, %c128] : memref<8x8x256xf32, #tpu.memory_space<vmem>>, vector<1x8x128xf32>
    %24 = vector.shape_cast %23 : vector<1x8x128xf32> to vector<8x128xf32>
    %25 = arith.truncf %17 : vector<8x32xf32> to vector<8x32xbf16>
    %cst_23 = arith.constant dense<0.000000e+00> : vector<8x128xf32>
    %26 = tpu.matmul %25, %16, %cst_23 {dimension_numbers = #tpu.dot_dimension_numbers<[1], [0], [0], [1], [0, 0, 1, 1], [], []>} : vector<8x32xbf16>, vector<32x128xbf16>, vector<8x128xf32> -> vector<8x128xf32>
    %27 = arith.addf %24, %26 : vector<8x128xf32>
    %28 = vector.extract_strided_slice %22 {offsets = [0, 0], sizes = [8, 96], strides = [1, 1]} : vector<8x128xf32> to vector<8x96xf32>
    %29 = arith.negf %28 : vector<8x96xf32>
    %30 = math.exp %29 : vector<8x96xf32>
    %cst_24 = arith.constant 1.000000e+00 : f32
    %31 = vector.broadcast %cst_24 : f32 to vector<8x96xf32>
    %32 = arith.addf %31, %30 : vector<8x96xf32>
    %33 = arith.divf %31, %32 : vector<8x96xf32>
    %34 = vector.extract_strided_slice %33 {offsets = [0, 0], sizes = [8, 32], strides = [1, 1]} : vector<8x96xf32> to vector<8x32xf32>
    %35 = vector.extract_strided_slice %33 {offsets = [0, 32], sizes = [8, 32], strides = [1, 1]} : vector<8x96xf32> to vector<8x32xf32>
    %36 = vector.extract_strided_slice %33 {offsets = [0, 64], sizes = [8, 32], strides = [1, 1]} : vector<8x96xf32> to vector<8x32xf32>
    %37 = vector.extract_strided_slice %22 {offsets = [0, 96], sizes = [8, 32], strides = [1, 1]} : vector<8x128xf32> to vector<8x32xf32>
    %38 = math.tanh %37 : vector<8x32xf32>
    %39 = arith.mulf %35, %17 : vector<8x32xf32>
    %40 = arith.mulf %34, %38 : vector<8x32xf32>
    %41 = arith.addf %39, %40 : vector<8x32xf32>
    %42 = math.tanh %41 : vector<8x32xf32>
    %43 = arith.mulf %36, %42 : vector<8x32xf32>
    %44 = vector.extract_strided_slice %27 {offsets = [0, 0], sizes = [8, 96], strides = [1, 1]} : vector<8x128xf32> to vector<8x96xf32>
    %45 = arith.negf %44 : vector<8x96xf32>
    %46 = math.exp %45 : vector<8x96xf32>
    %cst_25 = arith.constant 1.000000e+00 : f32
    %47 = vector.broadcast %cst_25 : f32 to vector<8x96xf32>
    %48 = arith.addf %47, %46 : vector<8x96xf32>
    %49 = arith.divf %47, %48 : vector<8x96xf32>
    %50 = vector.extract_strided_slice %49 {offsets = [0, 0], sizes = [8, 32], strides = [1, 1]} : vector<8x96xf32> to vector<8x32xf32>
    %51 = vector.extract_strided_slice %49 {offsets = [0, 32], sizes = [8, 32], strides = [1, 1]} : vector<8x96xf32> to vector<8x32xf32>
    %52 = vector.extract_strided_slice %49 {offsets = [0, 64], sizes = [8, 32], strides = [1, 1]} : vector<8x96xf32> to vector<8x32xf32>
    %53 = vector.extract_strided_slice %27 {offsets = [0, 96], sizes = [8, 32], strides = [1, 1]} : vector<8x128xf32> to vector<8x32xf32>
    %54 = math.tanh %53 : vector<8x32xf32>
    %55 = arith.mulf %51, %17 : vector<8x32xf32>
    %56 = arith.mulf %50, %54 : vector<8x32xf32>
    %57 = arith.addf %55, %56 : vector<8x32xf32>
    %58 = math.tanh %57 : vector<8x32xf32>
    %59 = arith.mulf %52, %58 : vector<8x32xf32>
    %c1_i32 = arith.constant 1 : i32
    %60 = arith.index_cast %c1_i32 : i32 to index
    %c0_26 = arith.constant 0 : index
    %c0_27 = arith.constant 0 : index
    %61 = vector.load %arg10[%60, %c0_26, %c0_27] : memref<8x8x256xf32, #tpu.memory_space<vmem>>, vector<1x8x128xf32>
    %62 = vector.shape_cast %61 : vector<1x8x128xf32> to vector<8x128xf32>
    %63 = arith.truncf %43 : vector<8x32xf32> to vector<8x32xbf16>
    %cst_28 = arith.constant dense<0.000000e+00> : vector<8x128xf32>
    %64 = tpu.matmul %63, %15, %cst_28 {dimension_numbers = #tpu.dot_dimension_numbers<[1], [0], [0], [1], [0, 0, 1, 1], [], []>} : vector<8x32xbf16>, vector<32x128xbf16>, vector<8x128xf32> -> vector<8x128xf32>
    %65 = arith.addf %62, %64 : vector<8x128xf32>
    %66 = vector.extract_strided_slice %65 {offsets = [0, 0], sizes = [8, 96], strides = [1, 1]} : vector<8x128xf32> to vector<8x96xf32>
    %67 = arith.negf %66 : vector<8x96xf32>
    %68 = math.exp %67 : vector<8x96xf32>
    %cst_29 = arith.constant 1.000000e+00 : f32
    %69 = vector.broadcast %cst_29 : f32 to vector<8x96xf32>
    %70 = arith.addf %69, %68 : vector<8x96xf32>
    %71 = arith.divf %69, %70 : vector<8x96xf32>
    %72 = vector.extract_strided_slice %71 {offsets = [0, 0], sizes = [8, 32], strides = [1, 1]} : vector<8x96xf32> to vector<8x32xf32>
    %73 = vector.extract_strided_slice %71 {offsets = [0, 32], sizes = [8, 32], strides = [1, 1]} : vector<8x96xf32> to vector<8x32xf32>
    %74 = vector.extract_strided_slice %71 {offsets = [0, 64], sizes = [8, 32], strides = [1, 1]} : vector<8x96xf32> to vector<8x32xf32>
    %75 = vector.extract_strided_slice %65 {offsets = [0, 96], sizes = [8, 32], strides = [1, 1]} : vector<8x128xf32> to vector<8x32xf32>
    %76 = math.tanh %75 : vector<8x32xf32>
    %77 = arith.mulf %73, %41 : vector<8x32xf32>
    %78 = arith.mulf %72, %76 : vector<8x32xf32>
    %79 = arith.addf %77, %78 : vector<8x32xf32>
    %80 = math.tanh %79 : vector<8x32xf32>
    %81 = arith.mulf %74, %80 : vector<8x32xf32>
    %c2_i32 = arith.constant 2 : i32
    %82 = arith.index_cast %c2_i32 : i32 to index
    %c0_30 = arith.constant 0 : index
    %c0_31 = arith.constant 0 : index
    %83 = vector.load %arg10[%82, %c0_30, %c0_31] : memref<8x8x256xf32, #tpu.memory_space<vmem>>, vector<1x8x128xf32>
    %84 = vector.shape_cast %83 : vector<1x8x128xf32> to vector<8x128xf32>
    %85 = arith.truncf %81 : vector<8x32xf32> to vector<8x32xbf16>
    %cst_32 = arith.constant dense<0.000000e+00> : vector<8x128xf32>
    %86 = tpu.matmul %85, %15, %cst_32 {dimension_numbers = #tpu.dot_dimension_numbers<[1], [0], [0], [1], [0, 0, 1, 1], [], []>} : vector<8x32xbf16>, vector<32x128xbf16>, vector<8x128xf32> -> vector<8x128xf32>
    %87 = arith.addf %84, %86 : vector<8x128xf32>
    %88 = vector.extract_strided_slice %87 {offsets = [0, 0], sizes = [8, 96], strides = [1, 1]} : vector<8x128xf32> to vector<8x96xf32>
    %89 = arith.negf %88 : vector<8x96xf32>
    %90 = math.exp %89 : vector<8x96xf32>
    %cst_33 = arith.constant 1.000000e+00 : f32
    %91 = vector.broadcast %cst_33 : f32 to vector<8x96xf32>
    %92 = arith.addf %91, %90 : vector<8x96xf32>
    %93 = arith.divf %91, %92 : vector<8x96xf32>
    %94 = vector.extract_strided_slice %93 {offsets = [0, 0], sizes = [8, 32], strides = [1, 1]} : vector<8x96xf32> to vector<8x32xf32>
    %95 = vector.extract_strided_slice %93 {offsets = [0, 32], sizes = [8, 32], strides = [1, 1]} : vector<8x96xf32> to vector<8x32xf32>
    %96 = vector.extract_strided_slice %93 {offsets = [0, 64], sizes = [8, 32], strides = [1, 1]} : vector<8x96xf32> to vector<8x32xf32>
    %97 = vector.extract_strided_slice %87 {offsets = [0, 96], sizes = [8, 32], strides = [1, 1]} : vector<8x128xf32> to vector<8x32xf32>
    %98 = math.tanh %97 : vector<8x32xf32>
    %99 = arith.mulf %95, %79 : vector<8x32xf32>
    %100 = arith.mulf %94, %98 : vector<8x32xf32>
    %101 = arith.addf %99, %100 : vector<8x32xf32>
    %102 = math.tanh %101 : vector<8x32xf32>
    %103 = arith.mulf %96, %102 : vector<8x32xf32>
    %c3_i32 = arith.constant 3 : i32
    %104 = arith.index_cast %c3_i32 : i32 to index
    %c0_34 = arith.constant 0 : index
    %c0_35 = arith.constant 0 : index
    %105 = vector.load %arg10[%104, %c0_34, %c0_35] : memref<8x8x256xf32, #tpu.memory_space<vmem>>, vector<1x8x128xf32>
    %106 = vector.shape_cast %105 : vector<1x8x128xf32> to vector<8x128xf32>
    %107 = arith.truncf %103 : vector<8x32xf32> to vector<8x32xbf16>
    %cst_36 = arith.constant dense<0.000000e+00> : vector<8x128xf32>
    %108 = tpu.matmul %107, %15, %cst_36 {dimension_numbers = #tpu.dot_dimension_numbers<[1], [0], [0], [1], [0, 0, 1, 1], [], []>} : vector<8x32xbf16>, vector<32x128xbf16>, vector<8x128xf32> -> vector<8x128xf32>
    %109 = arith.addf %106, %108 : vector<8x128xf32>
    %110 = vector.extract_strided_slice %109 {offsets = [0, 0], sizes = [8, 96], strides = [1, 1]} : vector<8x128xf32> to vector<8x96xf32>
    %111 = arith.negf %110 : vector<8x96xf32>
    %112 = math.exp %111 : vector<8x96xf32>
    %cst_37 = arith.constant 1.000000e+00 : f32
    %113 = vector.broadcast %cst_37 : f32 to vector<8x96xf32>
    %114 = arith.addf %113, %112 : vector<8x96xf32>
    %115 = arith.divf %113, %114 : vector<8x96xf32>
    %116 = vector.extract_strided_slice %115 {offsets = [0, 0], sizes = [8, 32], strides = [1, 1]} : vector<8x96xf32> to vector<8x32xf32>
    %117 = vector.extract_strided_slice %115 {offsets = [0, 32], sizes = [8, 32], strides = [1, 1]} : vector<8x96xf32> to vector<8x32xf32>
    %118 = vector.extract_strided_slice %115 {offsets = [0, 64], sizes = [8, 32], strides = [1, 1]} : vector<8x96xf32> to vector<8x32xf32>
    %119 = vector.extract_strided_slice %109 {offsets = [0, 96], sizes = [8, 32], strides = [1, 1]} : vector<8x128xf32> to vector<8x32xf32>
    %120 = math.tanh %119 : vector<8x32xf32>
    %121 = arith.mulf %117, %101 : vector<8x32xf32>
    %122 = arith.mulf %116, %120 : vector<8x32xf32>
    %123 = arith.addf %121, %122 : vector<8x32xf32>
    %124 = math.tanh %123 : vector<8x32xf32>
    %125 = arith.mulf %118, %124 : vector<8x32xf32>
    %c4_i32 = arith.constant 4 : i32
    %126 = arith.index_cast %c4_i32 : i32 to index
    %c0_38 = arith.constant 0 : index
    %c0_39 = arith.constant 0 : index
    %127 = vector.load %arg10[%126, %c0_38, %c0_39] : memref<8x8x256xf32, #tpu.memory_space<vmem>>, vector<1x8x128xf32>
    %128 = vector.shape_cast %127 : vector<1x8x128xf32> to vector<8x128xf32>
    %129 = arith.truncf %125 : vector<8x32xf32> to vector<8x32xbf16>
    %cst_40 = arith.constant dense<0.000000e+00> : vector<8x128xf32>
    %130 = tpu.matmul %129, %15, %cst_40 {dimension_numbers = #tpu.dot_dimension_numbers<[1], [0], [0], [1], [0, 0, 1, 1], [], []>} : vector<8x32xbf16>, vector<32x128xbf16>, vector<8x128xf32> -> vector<8x128xf32>
    %131 = arith.addf %128, %130 : vector<8x128xf32>
    %132 = vector.extract_strided_slice %131 {offsets = [0, 0], sizes = [8, 96], strides = [1, 1]} : vector<8x128xf32> to vector<8x96xf32>
    %133 = arith.negf %132 : vector<8x96xf32>
    %134 = math.exp %133 : vector<8x96xf32>
    %cst_41 = arith.constant 1.000000e+00 : f32
    %135 = vector.broadcast %cst_41 : f32 to vector<8x96xf32>
    %136 = arith.addf %135, %134 : vector<8x96xf32>
    %137 = arith.divf %135, %136 : vector<8x96xf32>
    %138 = vector.extract_strided_slice %137 {offsets = [0, 0], sizes = [8, 32], strides = [1, 1]} : vector<8x96xf32> to vector<8x32xf32>
    %139 = vector.extract_strided_slice %137 {offsets = [0, 32], sizes = [8, 32], strides = [1, 1]} : vector<8x96xf32> to vector<8x32xf32>
    %140 = vector.extract_strided_slice %137 {offsets = [0, 64], sizes = [8, 32], strides = [1, 1]} : vector<8x96xf32> to vector<8x32xf32>
    %141 = vector.extract_strided_slice %131 {offsets = [0, 96], sizes = [8, 32], strides = [1, 1]} : vector<8x128xf32> to vector<8x32xf32>
    %142 = math.tanh %141 : vector<8x32xf32>
    %143 = arith.mulf %139, %123 : vector<8x32xf32>
    %144 = arith.mulf %138, %142 : vector<8x32xf32>
    %145 = arith.addf %143, %144 : vector<8x32xf32>
    %146 = math.tanh %145 : vector<8x32xf32>
    %147 = arith.mulf %140, %146 : vector<8x32xf32>
    %c5_i32 = arith.constant 5 : i32
    %148 = arith.index_cast %c5_i32 : i32 to index
    %c0_42 = arith.constant 0 : index
    %c0_43 = arith.constant 0 : index
    %149 = vector.load %arg10[%148, %c0_42, %c0_43] : memref<8x8x256xf32, #tpu.memory_space<vmem>>, vector<1x8x128xf32>
    %150 = vector.shape_cast %149 : vector<1x8x128xf32> to vector<8x128xf32>
    %151 = arith.truncf %147 : vector<8x32xf32> to vector<8x32xbf16>
    %cst_44 = arith.constant dense<0.000000e+00> : vector<8x128xf32>
    %152 = tpu.matmul %151, %15, %cst_44 {dimension_numbers = #tpu.dot_dimension_numbers<[1], [0], [0], [1], [0, 0, 1, 1], [], []>} : vector<8x32xbf16>, vector<32x128xbf16>, vector<8x128xf32> -> vector<8x128xf32>
    %153 = arith.addf %150, %152 : vector<8x128xf32>
    %154 = vector.extract_strided_slice %153 {offsets = [0, 0], sizes = [8, 96], strides = [1, 1]} : vector<8x128xf32> to vector<8x96xf32>
    %155 = arith.negf %154 : vector<8x96xf32>
    %156 = math.exp %155 : vector<8x96xf32>
    %cst_45 = arith.constant 1.000000e+00 : f32
    %157 = vector.broadcast %cst_45 : f32 to vector<8x96xf32>
    %158 = arith.addf %157, %156 : vector<8x96xf32>
    %159 = arith.divf %157, %158 : vector<8x96xf32>
    %160 = vector.extract_strided_slice %159 {offsets = [0, 0], sizes = [8, 32], strides = [1, 1]} : vector<8x96xf32> to vector<8x32xf32>
    %161 = vector.extract_strided_slice %159 {offsets = [0, 32], sizes = [8, 32], strides = [1, 1]} : vector<8x96xf32> to vector<8x32xf32>
    %162 = vector.extract_strided_slice %159 {offsets = [0, 64], sizes = [8, 32], strides = [1, 1]} : vector<8x96xf32> to vector<8x32xf32>
    %163 = vector.extract_strided_slice %153 {offsets = [0, 96], sizes = [8, 32], strides = [1, 1]} : vector<8x128xf32> to vector<8x32xf32>
    %164 = math.tanh %163 : vector<8x32xf32>
    %165 = arith.mulf %161, %145 : vector<8x32xf32>
    %166 = arith.mulf %160, %164 : vector<8x32xf32>
    %167 = arith.addf %165, %166 : vector<8x32xf32>
    %168 = math.tanh %167 : vector<8x32xf32>
    %169 = arith.mulf %162, %168 : vector<8x32xf32>
    %c6_i32 = arith.constant 6 : i32
    %170 = arith.index_cast %c6_i32 : i32 to index
    %c0_46 = arith.constant 0 : index
    %c0_47 = arith.constant 0 : index
    %171 = vector.load %arg10[%170, %c0_46, %c0_47] : memref<8x8x256xf32, #tpu.memory_space<vmem>>, vector<1x8x128xf32>
    %172 = vector.shape_cast %171 : vector<1x8x128xf32> to vector<8x128xf32>
    %173 = arith.truncf %169 : vector<8x32xf32> to vector<8x32xbf16>
    %cst_48 = arith.constant dense<0.000000e+00> : vector<8x128xf32>
    %174 = tpu.matmul %173, %15, %cst_48 {dimension_numbers = #tpu.dot_dimension_numbers<[1], [0], [0], [1], [0, 0, 1, 1], [], []>} : vector<8x32xbf16>, vector<32x128xbf16>, vector<8x128xf32> -> vector<8x128xf32>
    %175 = arith.addf %172, %174 : vector<8x128xf32>
    %176 = vector.extract_strided_slice %175 {offsets = [0, 0], sizes = [8, 96], strides = [1, 1]} : vector<8x128xf32> to vector<8x96xf32>
    %177 = arith.negf %176 : vector<8x96xf32>
    %178 = math.exp %177 : vector<8x96xf32>
    %cst_49 = arith.constant 1.000000e+00 : f32
    %179 = vector.broadcast %cst_49 : f32 to vector<8x96xf32>
    %180 = arith.addf %179, %178 : vector<8x96xf32>
    %181 = arith.divf %179, %180 : vector<8x96xf32>
    %182 = vector.extract_strided_slice %181 {offsets = [0, 0], sizes = [8, 32], strides = [1, 1]} : vector<8x96xf32> to vector<8x32xf32>
    %183 = vector.extract_strided_slice %181 {offsets = [0, 32], sizes = [8, 32], strides = [1, 1]} : vector<8x96xf32> to vector<8x32xf32>
    %184 = vector.extract_strided_slice %181 {offsets = [0, 64], sizes = [8, 32], strides = [1, 1]} : vector<8x96xf32> to vector<8x32xf32>
    %185 = vector.extract_strided_slice %175 {offsets = [0, 96], sizes = [8, 32], strides = [1, 1]} : vector<8x128xf32> to vector<8x32xf32>
    %186 = math.tanh %185 : vector<8x32xf32>
    %187 = arith.mulf %183, %167 : vector<8x32xf32>
    %188 = arith.mulf %182, %186 : vector<8x32xf32>
    %189 = arith.addf %187, %188 : vector<8x32xf32>
    %190 = math.tanh %189 : vector<8x32xf32>
    %191 = arith.mulf %184, %190 : vector<8x32xf32>
    %c7_i32 = arith.constant 7 : i32
    %192 = arith.index_cast %c7_i32 : i32 to index
    %c0_50 = arith.constant 0 : index
    %c0_51 = arith.constant 0 : index
    %193 = vector.load %arg10[%192, %c0_50, %c0_51] : memref<8x8x256xf32, #tpu.memory_space<vmem>>, vector<1x8x128xf32>
    %194 = vector.shape_cast %193 : vector<1x8x128xf32> to vector<8x128xf32>
    %195 = arith.truncf %191 : vector<8x32xf32> to vector<8x32xbf16>
    %cst_52 = arith.constant dense<0.000000e+00> : vector<8x128xf32>
    %196 = tpu.matmul %195, %15, %cst_52 {dimension_numbers = #tpu.dot_dimension_numbers<[1], [0], [0], [1], [0, 0, 1, 1], [], []>} : vector<8x32xbf16>, vector<32x128xbf16>, vector<8x128xf32> -> vector<8x128xf32>
    %197 = arith.addf %194, %196 : vector<8x128xf32>
    %198 = vector.extract_strided_slice %197 {offsets = [0, 0], sizes = [8, 96], strides = [1, 1]} : vector<8x128xf32> to vector<8x96xf32>
    %199 = arith.negf %198 : vector<8x96xf32>
    %200 = math.exp %199 : vector<8x96xf32>
    %cst_53 = arith.constant 1.000000e+00 : f32
    %201 = vector.broadcast %cst_53 : f32 to vector<8x96xf32>
    %202 = arith.addf %201, %200 : vector<8x96xf32>
    %203 = arith.divf %201, %202 : vector<8x96xf32>
    %204 = vector.extract_strided_slice %203 {offsets = [0, 0], sizes = [8, 32], strides = [1, 1]} : vector<8x96xf32> to vector<8x32xf32>
    %205 = vector.extract_strided_slice %203 {offsets = [0, 32], sizes = [8, 32], strides = [1, 1]} : vector<8x96xf32> to vector<8x32xf32>
    %206 = vector.extract_strided_slice %203 {offsets = [0, 64], sizes = [8, 32], strides = [1, 1]} : vector<8x96xf32> to vector<8x32xf32>
    %207 = vector.extract_strided_slice %197 {offsets = [0, 96], sizes = [8, 32], strides = [1, 1]} : vector<8x128xf32> to vector<8x32xf32>
    %208 = math.tanh %207 : vector<8x32xf32>
    %209 = arith.mulf %205, %189 : vector<8x32xf32>
    %210 = arith.mulf %204, %208 : vector<8x32xf32>
    %211 = arith.addf %209, %210 : vector<8x32xf32>
    %212 = math.tanh %211 : vector<8x32xf32>
    %213 = arith.mulf %206, %212 : vector<8x32xf32>
    %c7_i32_54 = arith.constant 7 : i32
    %c0_55 = arith.constant 0 : index
    %c0_56 = arith.constant 0 : index
    %214 = vector.load %arg7[%c0_55, %c0_56] : memref<64x4xf32, #tpu.memory_space<vmem>>, vector<64x4xf32>
    %215 = vector.extract_strided_slice %214 {offsets = [0, 0], sizes = [32, 4], strides = [1, 1]} : vector<64x4xf32> to vector<32x4xf32>
    %cst_57 = arith.constant dense<0.000000e+00> : vector<8x4xf32>
    %216 = tpu.matmul %213, %215, %cst_57 {dimension_numbers = #tpu.dot_dimension_numbers<[1], [0], [0], [1], [0, 0, 1, 1], [], []>} : vector<8x32xf32>, vector<32x4xf32>, vector<8x4xf32> -> vector<8x4xf32>
    %217 = vector.extract_strided_slice %214 {offsets = [32, 0], sizes = [32, 4], strides = [1, 1]} : vector<64x4xf32> to vector<32x4xf32>
    %cst_58 = arith.constant dense<0.000000e+00> : vector<8x4xf32>
    %218 = tpu.matmul %59, %217, %cst_58 {dimension_numbers = #tpu.dot_dimension_numbers<[1], [0], [0], [1], [0, 0, 1, 1], [], []>} : vector<8x32xf32>, vector<32x4xf32>, vector<8x4xf32> -> vector<8x4xf32>
    %219 = arith.addf %216, %218 : vector<8x4xf32>
    %c0_59 = arith.constant 0 : index
    %c0_60 = arith.constant 0 : index
    %220 = vector.load %arg8[%c0_59, %c0_60] : memref<1x4xf32, #tpu.memory_space<vmem>>, vector<1x4xf32>
    %221 = vector.broadcast %220 : vector<1x4xf32> to vector<8x4xf32>
    %222 = arith.addf %219, %221 : vector<8x4xf32>
    %223 = arith.negf %222 : vector<8x4xf32>
    %224 = math.exp %223 : vector<8x4xf32>
    %cst_61 = arith.constant 1.000000e+00 : f32
    %225 = vector.broadcast %cst_61 : f32 to vector<8x4xf32>
    %226 = arith.addf %225, %224 : vector<8x4xf32>
    %227 = arith.divf %225, %226 : vector<8x4xf32>
    %c0_62 = arith.constant 0 : index
    %c0_63 = arith.constant 0 : index
    %228 = vector.load %arg9[%c0_62, %c0_63] : memref<8x4xf32, #tpu.memory_space<vmem>>, vector<8x4xf32>
    tpu.vector_store %arg9[%c0_62, %c0_63], %227 {strides = array<i32>} : memref<8x4xf32, #tpu.memory_space<vmem>>, vector<8x4xf32>,
    return
  }
  func.func @transform_0(%arg0: i32) -> (i32, i32, i32) {
    %c0_i32 = arith.constant 0 : i32
    %c0_i32_0 = arith.constant 0 : i32
    %c0_i32_1 = arith.constant 0 : i32
    return %c0_i32, %arg0, %c0_i32_0 : i32, i32, i32
  }
  func.func @transform_1(%arg0: i32) -> (i32, i32, i32) {
    %c0_i32 = arith.constant 0 : i32
    %c0_i32_0 = arith.constant 0 : i32
    %c0_i32_1 = arith.constant 0 : i32
    return %c0_i32, %arg0, %c0_i32_0 : i32, i32, i32
  }
  func.func @transform_2(%arg0: i32) -> (i32, i32) {
    %c0_i32 = arith.constant 0 : i32
    %c0_i32_0 = arith.constant 0 : i32
    %c0_i32_1 = arith.constant 0 : i32
    return %c0_i32, %c0_i32_0 : i32, i32
  }
  func.func @transform_3(%arg0: i32) -> (i32, i32) {
    %c0_i32 = arith.constant 0 : i32
    %c0_i32_0 = arith.constant 0 : i32
    %c0_i32_1 = arith.constant 0 : i32
    return %c0_i32, %c0_i32_0 : i32, i32
  }
  func.func @transform_4(%arg0: i32) -> (i32, i32) {
    %c0_i32 = arith.constant 0 : i32
    %c0_i32_0 = arith.constant 0 : i32
    %c0_i32_1 = arith.constant 0 : i32
    return %c0_i32, %c0_i32_0 : i32, i32
  }
  func.func @transform_5(%arg0: i32) -> (i32, i32) {
    %c0_i32 = arith.constant 0 : i32
    %c0_i32_0 = arith.constant 0 : i32
    %c0_i32_1 = arith.constant 0 : i32
    return %c0_i32, %c0_i32_0 : i32, i32
  }
  func.func @transform_6(%arg0: i32) -> (i32, i32) {
    %c0_i32 = arith.constant 0 : i32
    %c0_i32_0 = arith.constant 0 : i32
    %c0_i32_1 = arith.constant 0 : i32
    return %c0_i32, %c0_i32_0 : i32, i32
  }
  func.func @transform_7(%arg0: i32) -> (i32, i32) {
    %c0_i32 = arith.constant 0 : i32
    %c0_i32_0 = arith.constant 0 : i32
    %c0_i32_1 = arith.constant 0 : i32
    return %c0_i32, %c0_i32_0 : i32, i32
  }
  func.func @transform_8(%arg0: i32) -> (i32, i32) {
    %c0_i32 = arith.constant 0 : i32
    %c0_i32_0 = arith.constant 0 : i32
    return %arg0, %c0_i32 : i32, i32
  }
}

</mosaic_0001>

<llo_original>
// kernel: bilstm_forward.3
$region0: #{bilstm_forward.3}
  #allocation0 [shape = 'u32[]', space=smem, size = 0x4, offset = 0x4, fixed_abs, tag = 'smem constant byte address 0x4 - core index']
  #allocation1 [shape = 'u32[72,128]{1,0:T(1,128)}', space=vmem, size = 0x9000, scoped, tag = 'internal scratch']
  #allocation2 [shape = 'f32[8,8,256]{2,1,0:T(8,128)}', space=vmem, size = 0x10000, scoped, tag = 'scratch operand']
  %s0 = inlined_call_operand.vmem [shape: bf16[8,8,32], index: 0, kind: input, shape index: {}]
  %s1 = inlined_call_operand.vmem [shape: bf16[8,8,32], index: 1, kind: input, shape index: {}]
  %s2 = inlined_call_operand.vmem [shape: bf16[64,256], index: 2, kind: input, shape index: {}]
  %s3 = inlined_call_operand.vmem [shape: f32[1,256], index: 3, kind: input, shape index: {}]
  %s4 = inlined_call_operand.vmem [shape: bf16[32,128], index: 4, kind: input, shape index: {}]
  %s5 = inlined_call_operand.vmem [shape: bf16[32,128], index: 5, kind: input, shape index: {}]
  %s6 = inlined_call_operand.vmem [shape: f32[64,4], index: 6, kind: input, shape index: {}]
  %s7 = inlined_call_operand.vmem [shape: f32[1,4], index: 7, kind: input, shape index: {}]
  %s8 = inlined_call_operand.vmem [shape: f32[8,4], index: 8, kind: output, shape index: {}]
  %s9 = sld [smem:[#allocation0]]
  $region42: #{bilstm_forward.3} parent=0
    _
  %s11 = ssub.s32 1, %s9
  %s12 = scalar_select 0, %s11, %s9
  // Predicated region
  $region2: #{bilstm_forward.3} parent=0 // pred_check
    _
  $region3: #{bilstm_forward.3} parent=0 // pred_check_branch
    %14 = sbr.rel (0) target = $region5
  $region4: #{bilstm_forward.3} parent=0 // pred_region
    _
  $region5: #{bilstm_forward.3} parent=0 // pred_fallthru
    _
  // Predicated region
  $region6: #{bilstm_forward.3} parent=0 // pred_check
    _
  $region7: #{bilstm_forward.3} parent=0 // pred_check_branch
    %16 = sbr.rel (0) target = $region9
  $region8: #{bilstm_forward.3} parent=0 // pred_region
    _
  $region9: #{bilstm_forward.3} parent=0 // pred_fallthru
    _
  // Predicated region
  $region10: #{bilstm_forward.3} parent=0 // pred_check
    _
  $region11: #{bilstm_forward.3} parent=0 // pred_check_branch
    %18 = sbr.rel (0) target = $region13
  $region12: #{bilstm_forward.3} parent=0 // pred_region
    _
  $region13: #{bilstm_forward.3} parent=0 // pred_fallthru
    _
  // Predicated region
  $region14: #{bilstm_forward.3} parent=0 // pred_check
    _
  $region15: #{bilstm_forward.3} parent=0 // pred_check_branch
    %20 = sbr.rel (0) target = $region17
  $region16: #{bilstm_forward.3} parent=0 // pred_region
    _
  $region17: #{bilstm_forward.3} parent=0 // pred_fallthru
    _
  // Predicated region
  $region18: #{bilstm_forward.3} parent=0 // pred_check
    _
  $region19: #{bilstm_forward.3} parent=0 // pred_check_branch
    %22 = sbr.rel (0) target = $region21
  $region20: #{bilstm_forward.3} parent=0 // pred_region
    _
  $region21: #{bilstm_forward.3} parent=0 // pred_fallthru
    _
  // Predicated region
  $region22: #{bilstm_forward.3} parent=0 // pred_check
    _
  $region23: #{bilstm_forward.3} parent=0 // pred_check_branch
    %24 = sbr.rel (0) target = $region25
  $region24: #{bilstm_forward.3} parent=0 // pred_region
    _
  $region25: #{bilstm_forward.3} parent=0 // pred_fallthru
    _
  // Predicated region
  $region26: #{bilstm_forward.3} parent=0 // pred_check
    _
  $region27: #{bilstm_forward.3} parent=0 // pred_check_branch
    %26 = sbr.rel (0) target = $region29
  $region28: #{bilstm_forward.3} parent=0 // pred_region
    _
  $region29: #{bilstm_forward.3} parent=0 // pred_fallthru
    _
  // Predicated region
  $region30: #{bilstm_forward.3} parent=0 // pred_check
    _
  $region31: #{bilstm_forward.3} parent=0 // pred_check_branch
    %28 = sbr.rel (0) target = $region33
  $region32: #{bilstm_forward.3} parent=0 // pred_region
    _
  $region33: #{bilstm_forward.3} parent=0 // pred_fallthru
    _
  %v30 = vld [vmem:[%s3] sm:$0x3]
  %v31 = vld [vmem:[%s2] sm:$0xff]
  %v32 = vld [vmem:[%s2 + $0x8] sm:$0xff]
  %v33 = vld [vmem:[%s2 + $0x10] sm:$0xff]
  %v34 = vld [vmem:[%s2 + $0x18] sm:$0xff]
  %v35 = vld [vmem:[%s2 + $0x20] sm:$0xff]
  %v36 = vld [vmem:[%s2 + $0x28] sm:$0xff]
  %v37 = vld [vmem:[%s2 + $0x30] sm:$0xff]
  %v38 = vld [vmem:[%s2 + $0x38] sm:$0xff]
  %v39 = vld [vmem:[%s0] sm:$0xf]
  %v40 = vld [vmem:[%s0 + $0x4] sm:$0xf]
  %v41 = vld [vmem:[%s0 + $0x8] sm:$0xf]
  %v42 = vld [vmem:[%s0 + $0xc] sm:$0xf]
  %v43 = vld [vmem:[%s0 + $0x10] sm:$0xf]
  %v44 = vld [vmem:[%s0 + $0x14] sm:$0xf]
  %v45 = vld [vmem:[%s0 + $0x18] sm:$0xf]
  %v46 = vld [vmem:[%s0 + $0x1c] sm:$0xf]
  %v47 = vld [vmem:[%s1] sm:$0xf]
  %v48 = vld [vmem:[%s1 + $0x4] sm:$0xf]
  %v49 = vld [vmem:[%s1 + $0x8] sm:$0xf]
  %v50 = vld [vmem:[%s1 + $0xc] sm:$0xf]
  %v51 = vld [vmem:[%s1 + $0x10] sm:$0xf]
  %v52 = vld [vmem:[%s1 + $0x14] sm:$0xf]
  %v53 = vld [vmem:[%s1 + $0x18] sm:$0xf]
  %v54 = vld [vmem:[%s1 + $0x1c] sm:$0xf]
  %v63 = vunpack.c.l.b16 %v47
  %v64 = vunpack.c.l.b16 %v48
  %v65 = vunpack.c.l.b16 %v49
  %v66 = vunpack.c.l.b16 %v50
  %v67 = vunpack.c.l.b16 %v51
  %v68 = vunpack.c.l.b16 %v52
  %v69 = vunpack.c.l.b16 %v53
  %v70 = vunpack.c.l.b16 %v54
  %v71 = vpack.c.b16 %v64, %v63
  %v72 = vpack.c.b16 %v66, %v65
  %v73 = vpack.c.b16 %v68, %v67
  %v74 = vpack.c.b16 %v70, %v69
  %v79 = vunpack.c.l.b16 %v35
  %v80 = vunpack.c.h.b16 %v35
  %v81 = vunpack.c.l.b16 %v36
  %v82 = vunpack.c.h.b16 %v36
  %v83 = vunpack.c.l.b16 %v37
  %v84 = vunpack.c.h.b16 %v37
  %v85 = vunpack.c.l.b16 %v38
  %v86 = vunpack.c.h.b16 %v38
  %v87 = vpack.c.b16 %v81, %v79
  %v88 = vpack.c.b16 %v82, %v80
  %v89 = vpack.c.b16 %v85, %v83
  %v90 = vpack.c.b16 %v86, %v84
  %vm95 = vcmask 261120
  %v97 = vsel %vm95, %v71, 0
  %v100 = vsel %vm95, %v72, 0
  %v103 = vsel %vm95, %v73, 0
  %v106 = vsel %vm95, %v74, 0
  %108 = vmatpush.bf16.msra.mxu0 0
  %109 = vmatpush.bf16.msra.mxu0 0
  %110 = vmatpush.bf16.msra.mxu0 0
  %111 = vmatpush.bf16.msra.mxu0 0
  %112 = vmatpush.bf16.msra.mxu0 0
  %113 = vmatpush.bf16.msra.mxu0 0
  %114 = vmatpush.bf16.msra.mxu0 %v89
  %115 = vmatpush.bf16.msra.mxu0 %v87
  %116 = vmatmul.bf16.gmra.mxu0 %v97
  %v117 = vpop.f32.mrf.mxu0
  %v118 = vadd.f32 0.0, %v117
  %v119 = vpop.f32.mrf.mxu0
  %v120 = vadd.f32 0.0, %v119
  %121 = vmatmul.bf16.gmra.mxu0 %v100
  %v122 = vpop.f32.mrf.mxu0
  %v123 = vadd.f32 0.0, %v122
  %v124 = vpop.f32.mrf.mxu0
  %v125 = vadd.f32 0.0, %v124
  %126 = vmatmul.bf16.gmra.mxu0 %v103
  %v127 = vpop.f32.mrf.mxu0
  %v128 = vadd.f32 0.0, %v127
  %v129 = vpop.f32.mrf.mxu0
  %v130 = vadd.f32 0.0, %v129
  %131 = vmatmul.bf16.gmra.mxu0 %v106
  %v132 = vpop.f32.mrf.mxu0
  %v133 = vadd.f32 0.0, %v132
  %v134 = vpop.f32.mrf.mxu0
  %v135 = vadd.f32 0.0, %v134
  %136 = vdwg.mxu0
  %137 = vmatpush.bf16.msra.mxu0 0
  %138 = vmatpush.bf16.msra.mxu0 0
  %139 = vmatpush.bf16.msra.mxu0 0
  %140 = vmatpush.bf16.msra.mxu0 0
  %141 = vmatpush.bf16.msra.mxu0 0
  %142 = vmatpush.bf16.msra.mxu0 0
  %143 = vmatpush.bf16.msra.mxu0 %v90
  %144 = vmatpush.bf16.msra.mxu0 %v88
  %145 = vmatmul.bf16.gmra.mxu0 %v97
  %v146 = vpop.f32.mrf.mxu0
  %v147 = vadd.f32 0.0, %v146
  %v148 = vpop.f32.mrf.mxu0
  %v149 = vadd.f32 0.0, %v148
  %150 = vmatmul.bf16.gmra.mxu0 %v100
  %v151 = vpop.f32.mrf.mxu0
  %v152 = vadd.f32 0.0, %v151
  %v153 = vpop.f32.mrf.mxu0
  %v154 = vadd.f32 0.0, %v153
  %155 = vmatmul.bf16.gmra.mxu0 %v103
  %v156 = vpop.f32.mrf.mxu0
  %v157 = vadd.f32 0.0, %v156
  %v158 = vpop.f32.mrf.mxu0
  %v159 = vadd.f32 0.0, %v158
  %160 = vmatmul.bf16.gmra.mxu0 %v106
  %v161 = vpop.f32.mrf.mxu0
  %v162 = vadd.f32 0.0, %v161
  %v163 = vpop.f32.mrf.mxu0
  %v164 = vadd.f32 0.0, %v163
  %165 = vdwg.mxu0
  %v174 = vunpack.c.l.b16 %v39
  %v175 = vunpack.c.l.b16 %v40
  %v176 = vunpack.c.l.b16 %v41
  %v177 = vunpack.c.l.b16 %v42
  %v178 = vunpack.c.l.b16 %v43
  %v179 = vunpack.c.l.b16 %v44
  %v180 = vunpack.c.l.b16 %v45
  %v181 = vunpack.c.l.b16 %v46
  %v182 = vpack.c.b16 %v175, %v174
  %v183 = vpack.c.b16 %v177, %v176
  %v184 = vpack.c.b16 %v179, %v178
  %v185 = vpack.c.b16 %v181, %v180
  %v190 = vunpack.c.l.b16 %v31
  %v191 = vunpack.c.h.b16 %v31
  %v192 = vunpack.c.l.b16 %v32
  %v193 = vunpack.c.h.b16 %v32
  %v194 = vunpack.c.l.b16 %v33
  %v195 = vunpack.c.h.b16 %v33
  %v196 = vunpack.c.l.b16 %v34
  %v197 = vunpack.c.h.b16 %v34
  %v198 = vpack.c.b16 %v192, %v190
  %v199 = vpack.c.b16 %v193, %v191
  %v200 = vpack.c.b16 %v196, %v194
  %v201 = vpack.c.b16 %v197, %v195
  %v207 = vsel %vm95, %v182, 0
  %v210 = vsel %vm95, %v183, 0
  %v213 = vsel %vm95, %v184, 0
  %v216 = vsel %vm95, %v185, 0
  %218 = vmatpush.bf16.msra.mxu0 0
  %219 = vmatpush.bf16.msra.mxu0 0
  %220 = vmatpush.bf16.msra.mxu0 0
  %221 = vmatpush.bf16.msra.mxu0 0
  %222 = vmatpush.bf16.msra.mxu0 0
  %223 = vmatpush.bf16.msra.mxu0 0
  %224 = vmatpush.bf16.msra.mxu0 %v200
  %225 = vmatpush.bf16.msra.mxu0 %v198
  %226 = vmatmul.bf16.gmra.mxu0 %v207
  %v227 = vpop.f32.mrf.mxu0
  %v228 = vadd.f32 %v118, %v227
  %v229 = vpop.f32.mrf.mxu0
  %v230 = vadd.f32 %v120, %v229
  %231 = vmatmul.bf16.gmra.mxu0 %v210
  %v232 = vpop.f32.mrf.mxu0
  %v233 = vadd.f32 %v123, %v232
  %v234 = vpop.f32.mrf.mxu0
  %v235 = vadd.f32 %v125, %v234
  %236 = vmatmul.bf16.gmra.mxu0 %v213
  %v237 = vpop.f32.mrf.mxu0
  %v238 = vadd.f32 %v128, %v237
  %v239 = vpop.f32.mrf.mxu0
  %v240 = vadd.f32 %v130, %v239
  %241 = vmatmul.bf16.gmra.mxu0 %v216
  %v242 = vpop.f32.mrf.mxu0
  %v243 = vadd.f32 %v133, %v242
  %v244 = vpop.f32.mrf.mxu0
  %v245 = vadd.f32 %v135, %v244
  %246 = vdwg.mxu0
  %247 = vmatpush.bf16.msra.mxu0 0
  %248 = vmatpush.bf16.msra.mxu0 0
  %249 = vmatpush.bf16.msra.mxu0 0
  %250 = vmatpush.bf16.msra.mxu0 0
  %251 = vmatpush.bf16.msra.mxu0 0
  %252 = vmatpush.bf16.msra.mxu0 0
  %253 = vmatpush.bf16.msra.mxu0 %v201
  %254 = vmatpush.bf16.msra.mxu0 %v199
  %255 = vmatmul.bf16.gmra.mxu0 %v207
  %v256 = vpop.f32.mrf.mxu0
  %v257 = vadd.f32 %v147, %v256
  %v258 = vpop.f32.mrf.mxu0
  %v259 = vadd.f32 %v149, %v258
  %260 = vmatmul.bf16.gmra.mxu0 %v210
  %v261 = vpop.f32.mrf.mxu0
  %v262 = vadd.f32 %v152, %v261
  %v263 = vpop.f32.mrf.mxu0
  %v264 = vadd.f32 %v154, %v263
  %265 = vmatmul.bf16.gmra.mxu0 %v213
  %v266 = vpop.f32.mrf.mxu0
  %v267 = vadd.f32 %v157, %v266
  %v268 = vpop.f32.mrf.mxu0
  %v269 = vadd.f32 %v159, %v268
  %270 = vmatmul.bf16.gmra.mxu0 %v216
  %v271 = vpop.f32.mrf.mxu0
  %v272 = vadd.f32 %v162, %v271
  %v273 = vpop.f32.mrf.mxu0
  %v274 = vadd.f32 %v164, %v273
  %275 = vdwg.mxu0
  %v277 = vperm.slane %v30, 0
  %v278 = vperm.slane %v30, 1
  %v281 = vadd.f32 %v228, %v277
  %v282 = vadd.f32 %v257, %v278
  %v283 = vadd.f32 %v230, %v277
  %v284 = vadd.f32 %v259, %v278
  %v285 = vadd.f32 %v233, %v277
  %v286 = vadd.f32 %v262, %v278
  %v287 = vadd.f32 %v235, %v277
  %v288 = vadd.f32 %v264, %v278
  %v289 = vadd.f32 %v238, %v277
  %v290 = vadd.f32 %v267, %v278
  %v291 = vadd.f32 %v240, %v277
  %v292 = vadd.f32 %v269, %v278
  %v293 = vadd.f32 %v243, %v277
  %v294 = vadd.f32 %v272, %v278
  %v295 = vadd.f32 %v245, %v277
  %v296 = vadd.f32 %v274, %v278
  %297 = vst [vmem:[#allocation2] sm:$0xff] %v281
  %298 = vst [vmem:[#allocation2 + $0x8] sm:$0xff] %v282
  %299 = vst [vmem:[#allocation2 + $0x10] sm:$0xff] %v283
  %300 = vst [vmem:[#allocation2 + $0x18] sm:$0xff] %v284
  %301 = vst [vmem:[#allocation2 + $0x20] sm:$0xff] %v285
  %302 = vst [vmem:[#allocation2 + $0x28] sm:$0xff] %v286
  %303 = vst [vmem:[#allocation2 + $0x30] sm:$0xff] %v287
  %304 = vst [vmem:[#allocation2 + $0x38] sm:$0xff] %v288
  %305 = vst [vmem:[#allocation2 + $0x40] sm:$0xff] %v289
  %306 = vst [vmem:[#allocation2 + $0x48] sm:$0xff] %v290
  %307 = vst [vmem:[#allocation2 + $0x50] sm:$0xff] %v291
  %308 = vst [vmem:[#allocation2 + $0x58] sm:$0xff] %v292
  %309 = vst [vmem:[#allocation2 + $0x60] sm:$0xff] %v293
  %310 = vst [vmem:[#allocation2 + $0x68] sm:$0xff] %v294
  %311 = vst [vmem:[#allocation2 + $0x70] sm:$0xff] %v295
  %312 = vst [vmem:[#allocation2 + $0x78] sm:$0xff] %v296
  %v313 = vld [vmem:[%s4] sm:$0xf]
  %v314 = vld [vmem:[%s4 + $0x4] sm:$0xf]
  %v315 = vld [vmem:[%s4 + $0x8] sm:$0xf]
  %v316 = vld [vmem:[%s4 + $0xc] sm:$0xf]
  %v317 = vld [vmem:[%s5] sm:$0xf]
  %v318 = vld [vmem:[%s5 + $0x4] sm:$0xf]
  %v319 = vld [vmem:[%s5 + $0x8] sm:$0xf]
  %v320 = vld [vmem:[%s5 + $0xc] sm:$0xf]
  %v321 = vld [vmem:[#allocation2] sm:$0xff]
  %v326 = vunpack.c.l.b16 %v313
  %v327 = vunpack.c.l.b16 %v314
  %v328 = vunpack.c.l.b16 %v315
  %v329 = vunpack.c.l.b16 %v316
  %v330 = vpack.c.b16 %v327, %v326
  %v331 = vpack.c.b16 %v329, %v328
  %v335 = vsel %vm95, 0, 0
  %337 = vmatpush.bf16.msra.mxu0 0
  %338 = vmatpush.bf16.msra.mxu0 0
  %339 = vmatpush.bf16.msra.mxu0 0
  %340 = vmatpush.bf16.msra.mxu0 0
  %341 = vmatpush.bf16.msra.mxu0 0
  %342 = vmatpush.bf16.msra.mxu0 0
  %343 = vmatpush.bf16.msra.mxu0 %v331
  %344 = vmatpush.bf16.msra.mxu0 %v330
  %345 = vmatmul.bf16.gmra.mxu0 %v335
  %v346 = vpop.f32.mrf.mxu0
  %v347 = vadd.f32 0.0, %v346
  %v348 = vpop.f32.mrf.mxu0
  %349 = vdwg.mxu0
  %v350 = vadd.f32 %v321, %v347
  %s351 = scalar_lea.vmem [#allocation2], 112
  %v352 = vld [vmem:[%s351 + $0x8] sm:$0xff]
  %v357 = vunpack.c.l.b16 %v317
  %v358 = vunpack.c.l.b16 %v318
  %v359 = vunpack.c.l.b16 %v319
  %v360 = vunpack.c.l.b16 %v320
  %v361 = vpack.c.b16 %v358, %v357
  %v362 = vpack.c.b16 %v360, %v359
  %365 = vmatpush.bf16.msra.mxu0 0
  %366 = vmatpush.bf16.msra.mxu0 0
  %367 = vmatpush.bf16.msra.mxu0 0
  %368 = vmatpush.bf16.msra.mxu0 0
  %369 = vmatpush.bf16.msra.mxu0 0
  %370 = vmatpush.bf16.msra.mxu0 0
  %371 = vmatpush.bf16.msra.mxu0 %v362
  %372 = vmatpush.bf16.msra.mxu0 %v361
  %373 = vmatmul.bf16.gmra.mxu0 %v335
  %v374 = vpop.f32.mrf.mxu0
  %v375 = vadd.f32 0.0, %v374
  %v376 = vpop.f32.mrf.mxu0
  %377 = vdwg.mxu0
  %v378 = vadd.f32 %v352, %v375
  %v379 = vxor.u32 %v350, 2147483648
  %v380 = vmul.f32 %v379, 1.442695
  %v381 = vpow.pop %v380
  %v382 = vadd.f32 %v381, 1.0
  %v383 = vrcp.pop %v382
  %v384 = vmul.f32 %v382, %v383
  %v385 = vsub.f32 1.0, %v384
  %v386 = vmul.f32 %v383, %v385
  %v387 = vadd.f32 %v383, %v386
  %vm388 = vweird.f32 %v382
  %vm389 = vweird.f32 %v383
  %vm390 = vmor %vm388, %vm389
  %v391 = vsel %vm390, %v383, %v387
  %v392 = vand.u32 2147483647, %v382
  %vm393 = vcmp.eq.f32.partialorder %v392, 8.507059e+37
  %v394 = vand.u32 %v382, 2147483648
  %v395 = vor.u32 1.1754944e-38, %v394
  %v396 = vsel %vm393, %v395, %v391
  %v397 = vmul.f32 1.0, %v396
  %v398 = vtanh.pop %v350
  %v399 = vmul.f32 %v397, 0.0
  %401 = vrot.lane.b32.xlu0 %v398, 32
  %v402 = vpop.permute.xlu0 %401
  %v404 = vmul.f32 %v397, %v402
  %406 = vrot.lane.b32.xlu0 %v404, 32
  %v407 = vpop.permute.xlu0 %406
  %v409 = vadd.f32 %v399, %v407
  %v410 = vtanh.pop %v409
  %412 = vrot.lane.b32.xlu0 %v410, 32
  %v413 = vpop.permute.xlu0 %412
  %v415 = vmul.f32 %v397, %v413
  %v416 = vxor.u32 %v378, 2147483648
  %v417 = vmul.f32 %v416, 1.442695
  %v418 = vpow.pop %v417
  %v419 = vadd.f32 %v418, 1.0
  %v420 = vrcp.pop %v419
  %v421 = vmul.f32 %v419, %v420
  %v422 = vsub.f32 1.0, %v421
  %v423 = vmul.f32 %v420, %v422
  %v424 = vadd.f32 %v420, %v423
  %vm425 = vweird.f32 %v419
  %vm426 = vweird.f32 %v420
  %vm427 = vmor %vm425, %vm426
  %v428 = vsel %vm427, %v420, %v424
  %v429 = vand.u32 2147483647, %v419
  %vm430 = vcmp.eq.f32.partialorder %v429, 8.507059e+37
  %v431 = vand.u32 %v419, 2147483648
  %v432 = vor.u32 1.1754944e-38, %v431
  %v433 = vsel %vm430, %v432, %v428
  %v434 = vmul.f32 1.0, %v433
  %v435 = vtanh.pop %v378
  %v436 = vmul.f32 %v434, 0.0
  %438 = vrot.lane.b32.xlu0 %v435, 32
  %v439 = vpop.permute.xlu0 %438
  %v441 = vmul.f32 %v434, %v439
  %443 = vrot.lane.b32.xlu0 %v441, 32
  %v444 = vpop.permute.xlu0 %443
  %v446 = vadd.f32 %v436, %v444
  %v447 = vtanh.pop %v446
  %449 = vrot.lane.b32.xlu0 %v447, 32
  %v450 = vpop.permute.xlu0 %449
  %v452 = vmul.f32 %v434, %v450
  %s453 = scalar_lea.vmem [#allocation2], 16
  %v454 = vld [vmem:[%s453] sm:$0xff]
  %v455 = vpack.c.bf16 %v415, %v415
  %457 = vrot.lane.b32.xlu0 %v455, 64
  %v458 = vpop.permute.xlu0 %457
  %v460 = vsel %vm95, %v458, 0
  %462 = vmatpush.bf16.msra.mxu0 0
  %463 = vmatpush.bf16.msra.mxu0 0
  %464 = vmatpush.bf16.msra.mxu0 0
  %465 = vmatpush.bf16.msra.mxu0 0
  %466 = vmatpush.bf16.msra.mxu0 0
  %467 = vmatpush.bf16.msra.mxu0 0
  %468 = vmatpush.bf16.msra.mxu0 %v331
  %469 = vmatpush.bf16.msra.mxu0 %v330
  %470 = vmatmul.bf16.gmra.mxu0 %v460
  %v471 = vpop.f32.mrf.mxu0
  %v472 = vadd.f32 0.0, %v471
  %v473 = vpop.f32.mrf.mxu0
  %474 = vdwg.mxu0
  %v475 = vadd.f32 %v454, %v472
  %v476 = vxor.u32 %v475, 2147483648
  %v477 = vmul.f32 %v476, 1.442695
  %v478 = vpow.pop %v477
  %v479 = vadd.f32 %v478, 1.0
  %v480 = vrcp.pop %v479
  %v481 = vmul.f32 %v479, %v480
  %v482 = vsub.f32 1.0, %v481
  %v483 = vmul.f32 %v480, %v482
  %v484 = vadd.f32 %v480, %v483
  %vm485 = vweird.f32 %v479
  %vm486 = vweird.f32 %v480
  %vm487 = vmor %vm485, %vm486
  %v488 = vsel %vm487, %v480, %v484
  %v489 = vand.u32 2147483647, %v479
  %vm490 = vcmp.eq.f32.partialorder %v489, 8.507059e+37
  %v491 = vand.u32 %v479, 2147483648
  %v492 = vor.u32 1.1754944e-38, %v491
  %v493 = vsel %vm490, %v492, %v488
  %v494 = vmul.f32 1.0, %v493
  %v495 = vtanh.pop %v475
  %v496 = vmul.f32 %v494, %v409
  %498 = vrot.lane.b32.xlu0 %v495, 32
  %v499 = vpop.permute.xlu0 %498
  %v501 = vmul.f32 %v494, %v499
  %503 = vrot.lane.b32.xlu0 %v501, 32
  %v504 = vpop.permute.xlu0 %503
  %v506 = vadd.f32 %v496, %v504
  %v507 = vtanh.pop %v506
  %509 = vrot.lane.b32.xlu0 %v507, 32
  %v510 = vpop.permute.xlu0 %509
  %v512 = vmul.f32 %v494, %v510
  %s513 = scalar_lea.vmem [#allocation2], 32
  %v514 = vld [vmem:[%s513] sm:$0xff]
  %v515 = vpack.c.bf16 %v512, %v512
  %517 = vrot.lane.b32.xlu0 %v515, 64
  %v518 = vpop.permute.xlu0 %517
  %v520 = vsel %vm95, %v518, 0
  %522 = vmatpush.bf16.msra.mxu0 0
  %523 = vmatpush.bf16.msra.mxu0 0
  %524 = vmatpush.bf16.msra.mxu0 0
  %525 = vmatpush.bf16.msra.mxu0 0
  %526 = vmatpush.bf16.msra.mxu0 0
  %527 = vmatpush.bf16.msra.mxu0 0
  %528 = vmatpush.bf16.msra.mxu0 %v331
  %529 = vmatpush.bf16.msra.mxu0 %v330
  %530 = vmatmul.bf16.gmra.mxu0 %v520
  %v531 = vpop.f32.mrf.mxu0
  %v532 = vadd.f32 0.0, %v531
  %v533 = vpop.f32.mrf.mxu0
  %534 = vdwg.mxu0
  %v535 = vadd.f32 %v514, %v532
  %v536 = vxor.u32 %v535, 2147483648
  %v537 = vmul.f32 %v536, 1.442695
  %v538 = vpow.pop %v537
  %v539 = vadd.f32 %v538, 1.0
  %v540 = vrcp.pop %v539
  %v541 = vmul.f32 %v539, %v540
  %v542 = vsub.f32 1.0, %v541
  %v543 = vmul.f32 %v540, %v542
  %v544 = vadd.f32 %v540, %v543
  %vm545 = vweird.f32 %v539
  %vm546 = vweird.f32 %v540
  %vm547 = vmor %vm545, %vm546
  %v548 = vsel %vm547, %v540, %v544
  %v549 = vand.u32 2147483647, %v539
  %vm550 = vcmp.eq.f32.partialorder %v549, 8.507059e+37
  %v551 = vand.u32 %v539, 2147483648
  %v552 = vor.u32 1.1754944e-38, %v551
  %v553 = vsel %vm550, %v552, %v548
  %v554 = vmul.f32 1.0, %v553
  %v555 = vtanh.pop %v535
  %v556 = vmul.f32 %v554, %v506
  %558 = vrot.lane.b32.xlu0 %v555, 32
  %v559 = vpop.permute.xlu0 %558
  %v561 = vmul.f32 %v554, %v559
  %563 = vrot.lane.b32.xlu0 %v561, 32
  %v564 = vpop.permute.xlu0 %563
  %v566 = vadd.f32 %v556, %v564
  %v567 = vtanh.pop %v566
  %569 = vrot.lane.b32.xlu0 %v567, 32
  %v570 = vpop.permute.xlu0 %569
  %v572 = vmul.f32 %v554, %v570
  %s573 = scalar_lea.vmem [#allocation2], 48
  %v574 = vld [vmem:[%s573] sm:$0xff]
  %v575 = vpack.c.bf16 %v572, %v572
  %577 = vrot.lane.b32.xlu0 %v575, 64
  %v578 = vpop.permute.xlu0 %577
  %v580 = vsel %vm95, %v578, 0
  %582 = vmatpush.bf16.msra.mxu0 0
  %583 = vmatpush.bf16.msra.mxu0 0
  %584 = vmatpush.bf16.msra.mxu0 0
  %585 = vmatpush.bf16.msra.mxu0 0
  %586 = vmatpush.bf16.msra.mxu0 0
  %587 = vmatpush.bf16.msra.mxu0 0
  %588 = vmatpush.bf16.msra.mxu0 %v331
  %589 = vmatpush.bf16.msra.mxu0 %v330
  %590 = vmatmul.bf16.gmra.mxu0 %v580
  %v591 = vpop.f32.mrf.mxu0
  %v592 = vadd.f32 0.0, %v591
  %v593 = vpop.f32.mrf.mxu0
  %594 = vdwg.mxu0
  %v595 = vadd.f32 %v574, %v592
  %v596 = vxor.u32 %v595, 2147483648
  %v597 = vmul.f32 %v596, 1.442695
  %v598 = vpow.pop %v597
  %v599 = vadd.f32 %v598, 1.0
  %v600 = vrcp.pop %v599
  %v601 = vmul.f32 %v599, %v600
  %v602 = vsub.f32 1.0, %v601
  %v603 = vmul.f32 %v600, %v602
  %v604 = vadd.f32 %v600, %v603
  %vm605 = vweird.f32 %v599
  %vm606 = vweird.f32 %v600
  %vm607 = vmor %vm605, %vm606
  %v608 = vsel %vm607, %v600, %v604
  %v609 = vand.u32 2147483647, %v599
  %vm610 = vcmp.eq.f32.partialorder %v609, 8.507059e+37
  %v611 = vand.u32 %v599, 2147483648
  %v612 = vor.u32 1.1754944e-38, %v611
  %v613 = vsel %vm610, %v612, %v608
  %v614 = vmul.f32 1.0, %v613
  %v615 = vtanh.pop %v595
  %v616 = vmul.f32 %v614, %v566
  %618 = vrot.lane.b32.xlu0 %v615, 32
  %v619 = vpop.permute.xlu0 %618
  %v621 = vmul.f32 %v614, %v619
  %623 = vrot.lane.b32.xlu0 %v621, 32
  %v624 = vpop.permute.xlu0 %623
  %v626 = vadd.f32 %v616, %v624
  %v627 = vtanh.pop %v626
  %629 = vrot.lane.b32.xlu0 %v627, 32
  %v630 = vpop.permute.xlu0 %629
  %v632 = vmul.f32 %v614, %v630
  %s633 = scalar_lea.vmem [#allocation2], 64
  %v634 = vld [vmem:[%s633] sm:$0xff]
  %v635 = vpack.c.bf16 %v632, %v632
  %637 = vrot.lane.b32.xlu0 %v635, 64
  %v638 = vpop.permute.xlu0 %637
  %v640 = vsel %vm95, %v638, 0
  %642 = vmatpush.bf16.msra.mxu0 0
  %643 = vmatpush.bf16.msra.mxu0 0
  %644 = vmatpush.bf16.msra.mxu0 0
  %645 = vmatpush.bf16.msra.mxu0 0
  %646 = vmatpush.bf16.msra.mxu0 0
  %647 = vmatpush.bf16.msra.mxu0 0
  %648 = vmatpush.bf16.msra.mxu0 %v331
  %649 = vmatpush.bf16.msra.mxu0 %v330
  %650 = vmatmul.bf16.gmra.mxu0 %v640
  %v651 = vpop.f32.mrf.mxu0
  %v652 = vadd.f32 0.0, %v651
  %v653 = vpop.f32.mrf.mxu0
  %654 = vdwg.mxu0
  %v655 = vadd.f32 %v634, %v652
  %v656 = vxor.u32 %v655, 2147483648
  %v657 = vmul.f32 %v656, 1.442695
  %v658 = vpow.pop %v657
  %v659 = vadd.f32 %v658, 1.0
  %v660 = vrcp.pop %v659
  %v661 = vmul.f32 %v659, %v660
  %v662 = vsub.f32 1.0, %v661
  %v663 = vmul.f32 %v660, %v662
  %v664 = vadd.f32 %v660, %v663
  %vm665 = vweird.f32 %v659
  %vm666 = vweird.f32 %v660
  %vm667 = vmor %vm665, %vm666
  %v668 = vsel %vm667, %v660, %v664
  %v669 = vand.u32 2147483647, %v659
  %vm670 = vcmp.eq.f32.partialorder %v669, 8.507059e+37
  %v671 = vand.u32 %v659, 2147483648
  %v672 = vor.u32 1.1754944e-38, %v671
  %v673 = vsel %vm670, %v672, %v668
  %v674 = vmul.f32 1.0, %v673
  %v675 = vtanh.pop %v655
  %v676 = vmul.f32 %v674, %v626
  %678 = vrot.lane.b32.xlu0 %v675, 32
  %v679 = vpop.permute.xlu0 %678
  %v681 = vmul.f32 %v674, %v679
  %683 = vrot.lane.b32.xlu0 %v681, 32
  %v684 = vpop.permute.xlu0 %683
  %v686 = vadd.f32 %v676, %v684
  %v687 = vtanh.pop %v686
  %689 = vrot.lane.b32.xlu0 %v687, 32
  %v690 = vpop.permute.xlu0 %689
  %v692 = vmul.f32 %v674, %v690
  %s693 = scalar_lea.vmem [#allocation2], 80
  %v694 = vld [vmem:[%s693] sm:$0xff]
  %v695 = vpack.c.bf16 %v692, %v692
  %697 = vrot.lane.b32.xlu0 %v695, 64
  %v698 = vpop.permute.xlu0 %697
  %v700 = vsel %vm95, %v698, 0
  %702 = vmatpush.bf16.msra.mxu0 0
  %703 = vmatpush.bf16.msra.mxu0 0
  %704 = vmatpush.bf16.msra.mxu0 0
  %705 = vmatpush.bf16.msra.mxu0 0
  %706 = vmatpush.bf16.msra.mxu0 0
  %707 = vmatpush.bf16.msra.mxu0 0
  %708 = vmatpush.bf16.msra.mxu0 %v331
  %709 = vmatpush.bf16.msra.mxu0 %v330
  %710 = vmatmul.bf16.gmra.mxu0 %v700
  %v711 = vpop.f32.mrf.mxu0
  %v712 = vadd.f32 0.0, %v711
  %v713 = vpop.f32.mrf.mxu0
  %714 = vdwg.mxu0
  %v715 = vadd.f32 %v694, %v712
  %v716 = vxor.u32 %v715, 2147483648
  %v717 = vmul.f32 %v716, 1.442695
  %v718 = vpow.pop %v717
  %v719 = vadd.f32 %v718, 1.0
  %v720 = vrcp.pop %v719
  %v721 = vmul.f32 %v719, %v720
  %v722 = vsub.f32 1.0, %v721
  %v723 = vmul.f32 %v720, %v722
  %v724 = vadd.f32 %v720, %v723
  %vm725 = vweird.f32 %v719
  %vm726 = vweird.f32 %v720
  %vm727 = vmor %vm725, %vm726
  %v728 = vsel %vm727, %v720, %v724
  %v729 = vand.u32 2147483647, %v719
  %vm730 = vcmp.eq.f32.partialorder %v729, 8.507059e+37
  %v731 = vand.u32 %v719, 2147483648
  %v732 = vor.u32 1.1754944e-38, %v731
  %v733 = vsel %vm730, %v732, %v728
  %v734 = vmul.f32 1.0, %v733
  %v735 = vtanh.pop %v715
  %v736 = vmul.f32 %v734, %v686
  %738 = vrot.lane.b32.xlu0 %v735, 32
  %v739 = vpop.permute.xlu0 %738
  %v741 = vmul.f32 %v734, %v739
  %743 = vrot.lane.b32.xlu0 %v741, 32
  %v744 = vpop.permute.xlu0 %743
  %v746 = vadd.f32 %v736, %v744
  %v747 = vtanh.pop %v746
  %749 = vrot.lane.b32.xlu0 %v747, 32
  %v750 = vpop.permute.xlu0 %749
  %v752 = vmul.f32 %v734, %v750
  %s753 = scalar_lea.vmem [#allocation2], 96
  %v754 = vld [vmem:[%s753] sm:$0xff]
  %v755 = vpack.c.bf16 %v752, %v752
  %757 = vrot.lane.b32.xlu0 %v755, 64
  %v758 = vpop.permute.xlu0 %757
  %v760 = vsel %vm95, %v758, 0
  %762 = vmatpush.bf16.msra.mxu0 0
  %763 = vmatpush.bf16.msra.mxu0 0
  %764 = vmatpush.bf16.msra.mxu0 0
  %765 = vmatpush.bf16.msra.mxu0 0
  %766 = vmatpush.bf16.msra.mxu0 0
  %767 = vmatpush.bf16.msra.mxu0 0
  %768 = vmatpush.bf16.msra.mxu0 %v331
  %769 = vmatpush.bf16.msra.mxu0 %v330
  %770 = vmatmul.bf16.gmra.mxu0 %v760
  %v771 = vpop.f32.mrf.mxu0
  %v772 = vadd.f32 0.0, %v771
  %v773 = vpop.f32.mrf.mxu0
  %774 = vdwg.mxu0
  %v775 = vadd.f32 %v754, %v772
  %v776 = vxor.u32 %v775, 2147483648
  %v777 = vmul.f32 %v776, 1.442695
  %v778 = vpow.pop %v777
  %v779 = vadd.f32 %v778, 1.0
  %v780 = vrcp.pop %v779
  %v781 = vmul.f32 %v779, %v780
  %v782 = vsub.f32 1.0, %v781
  %v783 = vmul.f32 %v780, %v782
  %v784 = vadd.f32 %v780, %v783
  %vm785 = vweird.f32 %v779
  %vm786 = vweird.f32 %v780
  %vm787 = vmor %vm785, %vm786
  %v788 = vsel %vm787, %v780, %v784
  %v789 = vand.u32 2147483647, %v779
  %vm790 = vcmp.eq.f32.partialorder %v789, 8.507059e+37
  %v791 = vand.u32 %v779, 2147483648
  %v792 = vor.u32 1.1754944e-38, %v791
  %v793 = vsel %vm790, %v792, %v788
  %v794 = vmul.f32 1.0, %v793
  %v795 = vtanh.pop %v775
  %v796 = vmul.f32 %v794, %v746
  %798 = vrot.lane.b32.xlu0 %v795, 32
  %v799 = vpop.permute.xlu0 %798
  %v801 = vmul.f32 %v794, %v799
  %803 = vrot.lane.b32.xlu0 %v801, 32
  %v804 = vpop.permute.xlu0 %803
  %v806 = vadd.f32 %v796, %v804
  %v807 = vtanh.pop %v806
  %809 = vrot.lane.b32.xlu0 %v807, 32
  %v810 = vpop.permute.xlu0 %809
  %v812 = vmul.f32 %v794, %v810
  %v813 = vld [vmem:[%s351] sm:$0xff]
  %v814 = vpack.c.bf16 %v812, %v812
  %816 = vrot.lane.b32.xlu0 %v814, 64
  %v817 = vpop.permute.xlu0 %816
  %v819 = vsel %vm95, %v817, 0
  %821 = vmatpush.bf16.msra.mxu0 0
  %822 = vmatpush.bf16.msra.mxu0 0
  %823 = vmatpush.bf16.msra.mxu0 0
  %824 = vmatpush.bf16.msra.mxu0 0
  %825 = vmatpush.bf16.msra.mxu0 0
  %826 = vmatpush.bf16.msra.mxu0 0
  %827 = vmatpush.bf16.msra.mxu0 %v331
  %828 = vmatpush.bf16.msra.mxu0 %v330
  %829 = vmatmul.bf16.gmra.mxu0 %v819
  %v830 = vpop.f32.mrf.mxu0
  %v831 = vadd.f32 0.0, %v830
  %v832 = vpop.f32.mrf.mxu0
  %833 = vdwg.mxu0
  %v834 = vadd.f32 %v813, %v831
  %v835 = vxor.u32 %v834, 2147483648
  %v836 = vmul.f32 %v835, 1.442695
  %v837 = vpow.pop %v836
  %v838 = vadd.f32 %v837, 1.0
  %v839 = vrcp.pop %v838
  %v840 = vmul.f32 %v838, %v839
  %v841 = vsub.f32 1.0, %v840
  %v842 = vmul.f32 %v839, %v841
  %v843 = vadd.f32 %v839, %v842
  %vm844 = vweird.f32 %v838
  %vm845 = vweird.f32 %v839
  %vm846 = vmor %vm844, %vm845
  %v847 = vsel %vm846, %v839, %v843
  %v848 = vand.u32 2147483647, %v838
  %vm849 = vcmp.eq.f32.partialorder %v848, 8.507059e+37
  %v850 = vand.u32 %v838, 2147483648
  %v851 = vor.u32 1.1754944e-38, %v850
  %v852 = vsel %vm849, %v851, %v847
  %v853 = vmul.f32 1.0, %v852
  %v854 = vtanh.pop %v834
  %v855 = vmul.f32 %v853, %v806
  %857 = vrot.lane.b32.xlu0 %v854, 32
  %v858 = vpop.permute.xlu0 %857
  %v860 = vmul.f32 %v853, %v858
  %862 = vrot.lane.b32.xlu0 %v860, 32
  %v863 = vpop.permute.xlu0 %862
  %v865 = vadd.f32 %v855, %v863
  %v866 = vtanh.pop %v865
  %868 = vrot.lane.b32.xlu0 %v866, 32
  %v869 = vpop.permute.xlu0 %868
  %v871 = vmul.f32 %v853, %v869
  %v872 = vld [vmem:[%s6] sm:$0xff]
  %v873 = vld [vmem:[%s6 + $0x8] sm:$0xff]
  %v874 = vld [vmem:[%s6 + $0x10] sm:$0xff]
  %v875 = vld [vmem:[%s6 + $0x18] sm:$0xff]
  %v876 = vld [vmem:[%s6 + $0x20] sm:$0xff]
  %v877 = vld [vmem:[%s6 + $0x28] sm:$0xff]
  %v878 = vld [vmem:[%s6 + $0x30] sm:$0xff]
  %v879 = vld [vmem:[%s6 + $0x38] sm:$0xff]
  %881 = vrot.lane.b32.xlu0 %v452, 64
  %v882 = vpop.permute.xlu0 %881
  %v883 = vsel %vm95, %v882, 0
  %885 = vmatpush.msra.mxu0 0.0
  %886 = vmatpush.msra.mxu0 0.0
  %887 = vmatpush.msra.mxu0 0.0
  %888 = vmatpush.msra.mxu0 0.0
  %889 = vmatpush.msra.mxu0 0.0
  %890 = vmatpush.msra.mxu0 0.0
  %891 = vmatpush.msra.mxu0 0.0
  %892 = vmatpush.msra.mxu0 0.0
  %893 = vmatpush.msra.mxu0 0.0
  %894 = vmatpush.msra.mxu0 0.0
  %895 = vmatpush.msra.mxu0 0.0
  %896 = vmatpush.msra.mxu0 0.0
  %897 = vmatpush.msra.mxu0 %v879
  %898 = vmatpush.msra.mxu0 %v878
  %899 = vmatpush.msra.mxu0 %v877
  %900 = vmatpush.msra.mxu0 %v876
  %901 = vmatmul.f32.gmra.mxu0 %v883
  %v902 = vpop.f32.mrf.mxu0
  %v903 = vadd.f32 0.0, %v902
  %904 = vdwg.mxu0
  %906 = vrot.lane.b32.xlu0 %v871, 64
  %v907 = vpop.permute.xlu0 %906
  %v908 = vsel %vm95, %v907, 0
  %910 = vmatpush.msra.mxu0 0.0
  %911 = vmatpush.msra.mxu0 0.0
  %912 = vmatpush.msra.mxu0 0.0
  %913 = vmatpush.msra.mxu0 0.0
  %914 = vmatpush.msra.mxu0 0.0
  %915 = vmatpush.msra.mxu0 0.0
  %916 = vmatpush.msra.mxu0 0.0
  %917 = vmatpush.msra.mxu0 0.0
  %918 = vmatpush.msra.mxu0 0.0
  %919 = vmatpush.msra.mxu0 0.0
  %920 = vmatpush.msra.mxu0 0.0
  %921 = vmatpush.msra.mxu0 0.0
  %922 = vmatpush.msra.mxu0 %v875
  %923 = vmatpush.msra.mxu0 %v874
  %924 = vmatpush.msra.mxu0 %v873
  %925 = vmatpush.msra.mxu0 %v872
  %926 = vmatmul.f32.gmra.mxu0 %v908
  %v927 = vpop.f32.mrf.mxu0
  %v928 = vadd.f32 %v903, %v927
  %929 = vdwg.mxu0
  %v930 = vld [vmem:[%s7] sm:$0x1]
  %v932 = vperm.slane %v930, 0
  %v934 = vadd.f32 %v928, %v932
  %v935 = vxor.u32 %v934, 2147483648
  %v936 = vmul.f32 %v935, 1.442695
  %v937 = vpow.pop %v936
  %v938 = vadd.f32 %v937, 1.0
  %v939 = vrcp.pop %v938
  %v940 = vmul.f32 %v938, %v939
  %v941 = vsub.f32 1.0, %v940
  %v942 = vmul.f32 %v939, %v941
  %v943 = vadd.f32 %v939, %v942
  %vm944 = vweird.f32 %v938
  %vm945 = vweird.f32 %v939
  %vm946 = vmor %vm944, %vm945
  %v947 = vsel %vm946, %v939, %v943
  %v948 = vand.u32 2147483647, %v938
  %vm949 = vcmp.eq.f32.partialorder %v948, 8.507059e+37
  %v950 = vand.u32 %v938, 2147483648
  %v951 = vor.u32 1.1754944e-38, %v950
  %v952 = vsel %vm949, %v951, %v947
  %v953 = vmul.f32 1.0, %v952
  %vm954 = vcmask 31744
  %955 = vst.msk [vmem:[%s8] sm:$0xff] %vm954, %v953
  // Predicated region
  $region34: #{bilstm_forward.3} parent=0 // pred_check
    _
  $region35: #{bilstm_forward.3} parent=0 // pred_check_branch
    %957 = sbr.rel (0) target = $region37
  $region36: #{bilstm_forward.3} parent=0 // pred_region
    _
  $region37: #{bilstm_forward.3} parent=0 // pred_fallthru
    _
  // Predicated region
  $region38: #{bilstm_forward.3} parent=0 // pred_check
    _
  $region39: #{bilstm_forward.3} parent=0 // pred_check_branch
    %959 = sbr.rel (0) target = $region41
  $region40: #{bilstm_forward.3} parent=0 // pred_region
    _
  $region41: #{bilstm_forward.3} parent=0 // pred_fallthru
    _

// kernel: bilstm_forward.2
$region0: #{bilstm_forward.2}
  #allocation0 [shape = 'u32[]', space=smem, size = 0x4, offset = 0x4, fixed_abs, tag = 'smem constant byte address 0x4 - core index']
  #allocation1 [shape = 'u32[72,128]{1,0:T(1,128)}', space=vmem, size = 0x9000, scoped, tag = 'internal scratch']
  #allocation2 [shape = 'f32[8,8,256]{2,1,0:T(8,128)}', space=vmem, size = 0x10000, scoped, tag = 'scratch operand']
  %s0 = inlined_call_operand.vmem [shape: bf16[8,8,32], index: 0, kind: input, shape index: {}]
  %s1 = inlined_call_operand.vmem [shape: bf16[32,256], index: 1, kind: input, shape index: {}]
  %s2 = inlined_call_operand.vmem [shape: f32[1,256], index: 2, kind: input, shape index: {}]
  %s3 = inlined_call_operand.vmem [shape: bf16[32,128], index: 3, kind: input, shape index: {}]
  %s4 = inlined_call_operand.vmem [shape: bf16[32,128], index: 4, kind: input, shape index: {}]
  %s5 = inlined_call_operand.vmem [shape: bf16[8,8,32], index: 5, kind: output, shape index: {0}]
  %s6 = inlined_call_operand.vmem [shape: bf16[8,8,32], index: 6, kind: output, shape index: {1}]
  %7 = xla_tuple %s5, %s6
  %s8 = sld [smem:[#allocation0]]
  $region38: #{bilstm_forward.2} parent=0
    _
  %s10 = ssub.s32 1, %s8
  %s11 = scalar_select 0, %s10, %s8
  // Predicated region
  $region2: #{bilstm_forward.2} parent=0 // pred_check
    _
  $region3: #{bilstm_forward.2} parent=0 // pred_check_branch
    %13 = sbr.rel (0) target = $region5
  $region4: #{bilstm_forward.2} parent=0 // pred_region
    _
  $region5: #{bilstm_forward.2} parent=0 // pred_fallthru
    _
  // Predicated region
  $region6: #{bilstm_forward.2} parent=0 // pred_check
    _
  $region7: #{bilstm_forward.2} parent=0 // pred_check_branch
    %15 = sbr.rel (0) target = $region9
  $region8: #{bilstm_forward.2} parent=0 // pred_region
    _
  $region9: #{bilstm_forward.2} parent=0 // pred_fallthru
    _
  // Predicated region
  $region10: #{bilstm_forward.2} parent=0 // pred_check
    _
  $region11: #{bilstm_forward.2} parent=0 // pred_check_branch
    %17 = sbr.rel (0) target = $region13
  $region12: #{bilstm_forward.2} parent=0 // pred_region
    _
  $region13: #{bilstm_forward.2} parent=0 // pred_fallthru
    _
  // Predicated region
  $region14: #{bilstm_forward.2} parent=0 // pred_check
    _
  $region15: #{bilstm_forward.2} parent=0 // pred_check_branch
    %19 = sbr.rel (0) target = $region17
  $region16: #{bilstm_forward.2} parent=0 // pred_region
    _
  $region17: #{bilstm_forward.2} parent=0 // pred_fallthru
    _
  // Predicated region
  $region18: #{bilstm_forward.2} parent=0 // pred_check
    _
  $region19: #{bilstm_forward.2} parent=0 // pred_check_branch
    %21 = sbr.rel (0) target = $region21
  $region20: #{bilstm_forward.2} parent=0 // pred_region
    _
  $region21: #{bilstm_forward.2} parent=0 // pred_fallthru
    _
  %v23 = vld [vmem:[%s2] sm:$0x3]
  %v24 = vld [vmem:[%s0] sm:$0xf]
  %v25 = vld [vmem:[%s0 + $0x4] sm:$0xf]
  %v26 = vld [vmem:[%s0 + $0x8] sm:$0xf]
  %v27 = vld [vmem:[%s0 + $0xc] sm:$0xf]
  %v28 = vld [vmem:[%s0 + $0x10] sm:$0xf]
  %v29 = vld [vmem:[%s0 + $0x14] sm:$0xf]
  %v30 = vld [vmem:[%s0 + $0x18] sm:$0xf]
  %v31 = vld [vmem:[%s0 + $0x1c] sm:$0xf]
  %v32 = vld [vmem:[%s1] sm:$0xff]
  %v33 = vld [vmem:[%s1 + $0x8] sm:$0xff]
  %v34 = vld [vmem:[%s1 + $0x10] sm:$0xff]
  %v35 = vld [vmem:[%s1 + $0x18] sm:$0xff]
  %v37 = vperm.slane %v23, 0
  %v38 = vperm.slane %v23, 1
  %v49 = vunpack.c.l.b16 %v24
  %v50 = vunpack.c.l.b16 %v25
  %v51 = vunpack.c.l.b16 %v26
  %v52 = vunpack.c.l.b16 %v27
  %v53 = vunpack.c.l.b16 %v28
  %v54 = vunpack.c.l.b16 %v29
  %v55 = vunpack.c.l.b16 %v30
  %v56 = vunpack.c.l.b16 %v31
  %v57 = vpack.c.b16 %v50, %v49
  %v58 = vpack.c.b16 %v52, %v51
  %v59 = vpack.c.b16 %v54, %v53
  %v60 = vpack.c.b16 %v56, %v55
  %v65 = vunpack.c.l.b16 %v32
  %v66 = vunpack.c.h.b16 %v32
  %v67 = vunpack.c.l.b16 %v33
  %v68 = vunpack.c.h.b16 %v33
  %v69 = vunpack.c.l.b16 %v34
  %v70 = vunpack.c.h.b16 %v34
  %v71 = vunpack.c.l.b16 %v35
  %v72 = vunpack.c.h.b16 %v35
  %v73 = vpack.c.b16 %v67, %v65
  %v74 = vpack.c.b16 %v68, %v66
  %v75 = vpack.c.b16 %v71, %v69
  %v76 = vpack.c.b16 %v72, %v70
  %vm81 = vcmask 261120
  %v83 = vsel %vm81, %v57, 0
  %v86 = vsel %vm81, %v58, 0
  %v89 = vsel %vm81, %v59, 0
  %v92 = vsel %vm81, %v60, 0
  %94 = vmatpush.bf16.msra.mxu0 0
  %95 = vmatpush.bf16.msra.mxu0 0
  %96 = vmatpush.bf16.msra.mxu0 0
  %97 = vmatpush.bf16.msra.mxu0 0
  %98 = vmatpush.bf16.msra.mxu0 0
  %99 = vmatpush.bf16.msra.mxu0 0
  %100 = vmatpush.bf16.msra.mxu0 %v75
  %101 = vmatpush.bf16.msra.mxu0 %v73
  %102 = vmatmul.bf16.gmra.mxu0 %v83
  %v103 = vpop.f32.mrf.mxu0
  %v104 = vadd.f32 %v37, %v103
  %v105 = vpop.f32.mrf.mxu0
  %v106 = vadd.f32 %v37, %v105
  %107 = vmatmul.bf16.gmra.mxu0 %v86
  %v108 = vpop.f32.mrf.mxu0
  %v109 = vadd.f32 %v37, %v108
  %v110 = vpop.f32.mrf.mxu0
  %v111 = vadd.f32 %v37, %v110
  %112 = vmatmul.bf16.gmra.mxu0 %v89
  %v113 = vpop.f32.mrf.mxu0
  %v114 = vadd.f32 %v37, %v113
  %v115 = vpop.f32.mrf.mxu0
  %v116 = vadd.f32 %v37, %v115
  %117 = vmatmul.bf16.gmra.mxu0 %v92
  %v118 = vpop.f32.mrf.mxu0
  %v119 = vadd.f32 %v37, %v118
  %v120 = vpop.f32.mrf.mxu0
  %v121 = vadd.f32 %v37, %v120
  %122 = vdwg.mxu0
  %123 = vmatpush.bf16.msra.mxu0 0
  %124 = vmatpush.bf16.msra.mxu0 0
  %125 = vmatpush.bf16.msra.mxu0 0
  %126 = vmatpush.bf16.msra.mxu0 0
  %127 = vmatpush.bf16.msra.mxu0 0
  %128 = vmatpush.bf16.msra.mxu0 0
  %129 = vmatpush.bf16.msra.mxu0 %v76
  %130 = vmatpush.bf16.msra.mxu0 %v74
  %131 = vmatmul.bf16.gmra.mxu0 %v83
  %v132 = vpop.f32.mrf.mxu0
  %v133 = vadd.f32 %v38, %v132
  %v134 = vpop.f32.mrf.mxu0
  %v135 = vadd.f32 %v38, %v134
  %136 = vmatmul.bf16.gmra.mxu0 %v86
  %v137 = vpop.f32.mrf.mxu0
  %v138 = vadd.f32 %v38, %v137
  %v139 = vpop.f32.mrf.mxu0
  %v140 = vadd.f32 %v38, %v139
  %141 = vmatmul.bf16.gmra.mxu0 %v89
  %v142 = vpop.f32.mrf.mxu0
  %v143 = vadd.f32 %v38, %v142
  %v144 = vpop.f32.mrf.mxu0
  %v145 = vadd.f32 %v38, %v144
  %146 = vmatmul.bf16.gmra.mxu0 %v92
  %v147 = vpop.f32.mrf.mxu0
  %v148 = vadd.f32 %v38, %v147
  %v149 = vpop.f32.mrf.mxu0
  %v150 = vadd.f32 %v38, %v149
  %151 = vdwg.mxu0
  %152 = vst [vmem:[#allocation2] sm:$0xff] %v104
  %153 = vst [vmem:[#allocation2 + $0x8] sm:$0xff] %v133
  %154 = vst [vmem:[#allocation2 + $0x10] sm:$0xff] %v106
  %155 = vst [vmem:[#allocation2 + $0x18] sm:$0xff] %v135
  %156 = vst [vmem:[#allocation2 + $0x20] sm:$0xff] %v109
  %157 = vst [vmem:[#allocation2 + $0x28] sm:$0xff] %v138
  %158 = vst [vmem:[#allocation2 + $0x30] sm:$0xff] %v111
  %159 = vst [vmem:[#allocation2 + $0x38] sm:$0xff] %v140
  %160 = vst [vmem:[#allocation2 + $0x40] sm:$0xff] %v114
  %161 = vst [vmem:[#allocation2 + $0x48] sm:$0xff] %v143
  %162 = vst [vmem:[#allocation2 + $0x50] sm:$0xff] %v116
  %163 = vst [vmem:[#allocation2 + $0x58] sm:$0xff] %v145
  %164 = vst [vmem:[#allocation2 + $0x60] sm:$0xff] %v119
  %165 = vst [vmem:[#allocation2 + $0x68] sm:$0xff] %v148
  %166 = vst [vmem:[#allocation2 + $0x70] sm:$0xff] %v121
  %167 = vst [vmem:[#allocation2 + $0x78] sm:$0xff] %v150
  %v168 = vld [vmem:[%s3] sm:$0xf]
  %v169 = vld [vmem:[%s3 + $0x4] sm:$0xf]
  %v170 = vld [vmem:[%s3 + $0x8] sm:$0xf]
  %v171 = vld [vmem:[%s3 + $0xc] sm:$0xf]
  %v172 = vld [vmem:[%s4] sm:$0xf]
  %v173 = vld [vmem:[%s4 + $0x4] sm:$0xf]
  %v174 = vld [vmem:[%s4 + $0x8] sm:$0xf]
  %v175 = vld [vmem:[%s4 + $0xc] sm:$0xf]
  %v176 = vld [vmem:[#allocation2] sm:$0xff]
  %v181 = vunpack.c.l.b16 %v168
  %v182 = vunpack.c.l.b16 %v169
  %v183 = vunpack.c.l.b16 %v170
  %v184 = vunpack.c.l.b16 %v171
  %v185 = vpack.c.b16 %v182, %v181
  %v186 = vpack.c.b16 %v184, %v183
  %v190 = vsel %vm81, 0, 0
  %192 = vmatpush.bf16.msra.mxu0 0
  %193 = vmatpush.bf16.msra.mxu0 0
  %194 = vmatpush.bf16.msra.mxu0 0
  %195 = vmatpush.bf16.msra.mxu0 0
  %196 = vmatpush.bf16.msra.mxu0 0
  %197 = vmatpush.bf16.msra.mxu0 0
  %198 = vmatpush.bf16.msra.mxu0 %v186
  %199 = vmatpush.bf16.msra.mxu0 %v185
  %200 = vmatmul.bf16.gmra.mxu0 %v190
  %v201 = vpop.f32.mrf.mxu0
  %v202 = vadd.f32 0.0, %v201
  %v203 = vpop.f32.mrf.mxu0
  %204 = vdwg.mxu0
  %v205 = vadd.f32 %v176, %v202
  %s206 = scalar_lea.vmem [#allocation2], 112
  %v207 = vld [vmem:[%s206 + $0x8] sm:$0xff]
  %v212 = vunpack.c.l.b16 %v172
  %v213 = vunpack.c.l.b16 %v173
  %v214 = vunpack.c.l.b16 %v174
  %v215 = vunpack.c.l.b16 %v175
  %v216 = vpack.c.b16 %v213, %v212
  %v217 = vpack.c.b16 %v215, %v214
  %220 = vmatpush.bf16.msra.mxu0 0
  %221 = vmatpush.bf16.msra.mxu0 0
  %222 = vmatpush.bf16.msra.mxu0 0
  %223 = vmatpush.bf16.msra.mxu0 0
  %224 = vmatpush.bf16.msra.mxu0 0
  %225 = vmatpush.bf16.msra.mxu0 0
  %226 = vmatpush.bf16.msra.mxu0 %v217
  %227 = vmatpush.bf16.msra.mxu0 %v216
  %228 = vmatmul.bf16.gmra.mxu0 %v190
  %v229 = vpop.f32.mrf.mxu0
  %v230 = vadd.f32 0.0, %v229
  %v231 = vpop.f32.mrf.mxu0
  %232 = vdwg.mxu0
  %v233 = vadd.f32 %v207, %v230
  %v234 = vxor.u32 %v205, 2147483648
  %v235 = vmul.f32 %v234, 1.442695
  %v236 = vpow.pop %v235
  %v237 = vadd.f32 %v236, 1.0
  %v238 = vrcp.pop %v237
  %v239 = vmul.f32 %v237, %v238
  %v240 = vsub.f32 1.0, %v239
  %v241 = vmul.f32 %v238, %v240
  %v242 = vadd.f32 %v238, %v241
  %vm243 = vweird.f32 %v237
  %vm244 = vweird.f32 %v238
  %vm245 = vmor %vm243, %vm244
  %v246 = vsel %vm245, %v238, %v242
  %v247 = vand.u32 2147483647, %v237
  %vm248 = vcmp.eq.f32.partialorder %v247, 8.507059e+37
  %v249 = vand.u32 %v237, 2147483648
  %v250 = vor.u32 1.1754944e-38, %v249
  %v251 = vsel %vm248, %v250, %v246
  %v252 = vmul.f32 1.0, %v251
  %v253 = vtanh.pop %v205
  %v254 = vmul.f32 %v252, 0.0
  %256 = vrot.lane.b32.xlu0 %v253, 32
  %v257 = vpop.permute.xlu0 %256
  %v259 = vmul.f32 %v252, %v257
  %261 = vrot.lane.b32.xlu0 %v259, 32
  %v262 = vpop.permute.xlu0 %261
  %v264 = vadd.f32 %v254, %v262
  %v265 = vtanh.pop %v264
  %267 = vrot.lane.b32.xlu0 %v265, 32
  %v268 = vpop.permute.xlu0 %267
  %v270 = vmul.f32 %v252, %v268
  %v271 = vxor.u32 %v233, 2147483648
  %v272 = vmul.f32 %v271, 1.442695
  %v273 = vpow.pop %v272
  %v274 = vadd.f32 %v273, 1.0
  %v275 = vrcp.pop %v274
  %v276 = vmul.f32 %v274, %v275
  %v277 = vsub.f32 1.0, %v276
  %v278 = vmul.f32 %v275, %v277
  %v279 = vadd.f32 %v275, %v278
  %vm280 = vweird.f32 %v274
  %vm281 = vweird.f32 %v275
  %vm282 = vmor %vm280, %vm281
  %v283 = vsel %vm282, %v275, %v279
  %v284 = vand.u32 2147483647, %v274
  %vm285 = vcmp.eq.f32.partialorder %v284, 8.507059e+37
  %v286 = vand.u32 %v274, 2147483648
  %v287 = vor.u32 1.1754944e-38, %v286
  %v288 = vsel %vm285, %v287, %v283
  %v289 = vmul.f32 1.0, %v288
  %v290 = vtanh.pop %v233
  %v291 = vmul.f32 %v289, 0.0
  %293 = vrot.lane.b32.xlu0 %v290, 32
  %v294 = vpop.permute.xlu0 %293
  %v296 = vmul.f32 %v289, %v294
  %298 = vrot.lane.b32.xlu0 %v296, 32
  %v299 = vpop.permute.xlu0 %298
  %v301 = vadd.f32 %v291, %v299
  %v302 = vtanh.pop %v301
  %304 = vrot.lane.b32.xlu0 %v302, 32
  %v305 = vpop.permute.xlu0 %304
  %v307 = vmul.f32 %v289, %v305
  %v308 = vpack.c.bf16 %v270, %v270
  %310 = vrot.lane.b32.xlu0 %v308, 64
  %v311 = vpop.permute.xlu0 %310
  %vm313 = vcmask 257024
  %314 = vst.msk [vmem:[%s5] sm:$0xf] %vm313, %v311
  %v315 = vpack.c.bf16 %v307, %v307
  %317 = vrot.lane.b32.xlu0 %v315, 64
  %v318 = vpop.permute.xlu0 %317
  %s320 = scalar_lea.vmem %s6, 28
  %321 = vst.msk [vmem:[%s320] sm:$0xf] %vm313, %v318
  %s322 = scalar_lea.vmem [#allocation2], 16
  %v323 = vld [vmem:[%s322] sm:$0xff]
  %v324 = vunpack.c.l.b16 %v308
  %v325 = vpack.c.b16 %v324, %v324
  %326 = vrot.lane.b32.xlu0 %v325, 64
  %v327 = vpop.permute.xlu0 %326
  %v329 = vsel %vm81, %v327, 0
  %331 = vmatpush.bf16.msra.mxu0 0
  %332 = vmatpush.bf16.msra.mxu0 0
  %333 = vmatpush.bf16.msra.mxu0 0
  %334 = vmatpush.bf16.msra.mxu0 0
  %335 = vmatpush.bf16.msra.mxu0 0
  %336 = vmatpush.bf16.msra.mxu0 0
  %337 = vmatpush.bf16.msra.mxu0 %v186
  %338 = vmatpush.bf16.msra.mxu0 %v185
  %339 = vmatmul.bf16.gmra.mxu0 %v329
  %v340 = vpop.f32.mrf.mxu0
  %v341 = vadd.f32 0.0, %v340
  %v342 = vpop.f32.mrf.mxu0
  %343 = vdwg.mxu0
  %v344 = vadd.f32 %v323, %v341
  %s345 = scalar_lea.vmem [#allocation2], 96
  %v346 = vld [vmem:[%s345 + $0x8] sm:$0xff]
  %v347 = vunpack.c.l.b16 %v315
  %v348 = vpack.c.b16 %v347, %v347
  %349 = vrot.lane.b32.xlu0 %v348, 64
  %v350 = vpop.permute.xlu0 %349
  %v352 = vsel %vm81, %v350, 0
  %354 = vmatpush.bf16.msra.mxu0 0
  %355 = vmatpush.bf16.msra.mxu0 0
  %356 = vmatpush.bf16.msra.mxu0 0
  %357 = vmatpush.bf16.msra.mxu0 0
  %358 = vmatpush.bf16.msra.mxu0 0
  %359 = vmatpush.bf16.msra.mxu0 0
  %360 = vmatpush.bf16.msra.mxu0 %v217
  %361 = vmatpush.bf16.msra.mxu0 %v216
  %362 = vmatmul.bf16.gmra.mxu0 %v352
  %v363 = vpop.f32.mrf.mxu0
  %v364 = vadd.f32 0.0, %v363
  %v365 = vpop.f32.mrf.mxu0
  %366 = vdwg.mxu0
  %v367 = vadd.f32 %v346, %v364
  %v368 = vxor.u32 %v344, 2147483648
  %v369 = vmul.f32 %v368, 1.442695
  %v370 = vpow.pop %v369
  %v371 = vadd.f32 %v370, 1.0
  %v372 = vrcp.pop %v371
  %v373 = vmul.f32 %v371, %v372
  %v374 = vsub.f32 1.0, %v373
  %v375 = vmul.f32 %v372, %v374
  %v376 = vadd.f32 %v372, %v375
  %vm377 = vweird.f32 %v371
  %vm378 = vweird.f32 %v372
  %vm379 = vmor %vm377, %vm378
  %v380 = vsel %vm379, %v372, %v376
  %v381 = vand.u32 2147483647, %v371
  %vm382 = vcmp.eq.f32.partialorder %v381, 8.507059e+37
  %v383 = vand.u32 %v371, 2147483648
  %v384 = vor.u32 1.1754944e-38, %v383
  %v385 = vsel %vm382, %v384, %v380
  %v386 = vmul.f32 1.0, %v385
  %v387 = vtanh.pop %v344
  %v388 = vmul.f32 %v386, %v264
  %390 = vrot.lane.b32.xlu0 %v387, 32
  %v391 = vpop.permute.xlu0 %390
  %v393 = vmul.f32 %v386, %v391
  %395 = vrot.lane.b32.xlu0 %v393, 32
  %v396 = vpop.permute.xlu0 %395
  %v398 = vadd.f32 %v388, %v396
  %v399 = vtanh.pop %v398
  %401 = vrot.lane.b32.xlu0 %v399, 32
  %v402 = vpop.permute.xlu0 %401
  %v404 = vmul.f32 %v386, %v402
  %v405 = vxor.u32 %v367, 2147483648
  %v406 = vmul.f32 %v405, 1.442695
  %v407 = vpow.pop %v406
  %v408 = vadd.f32 %v407, 1.0
  %v409 = vrcp.pop %v408
  %v410 = vmul.f32 %v408, %v409
  %v411 = vsub.f32 1.0, %v410
  %v412 = vmul.f32 %v409, %v411
  %v413 = vadd.f32 %v409, %v412
  %vm414 = vweird.f32 %v408
  %vm415 = vweird.f32 %v409
  %vm416 = vmor %vm414, %vm415
  %v417 = vsel %vm416, %v409, %v413
  %v418 = vand.u32 2147483647, %v408
  %vm419 = vcmp.eq.f32.partialorder %v418, 8.507059e+37
  %v420 = vand.u32 %v408, 2147483648
  %v421 = vor.u32 1.1754944e-38, %v420
  %v422 = vsel %vm419, %v421, %v417
  %v423 = vmul.f32 1.0, %v422
  %v424 = vtanh.pop %v367
  %v425 = vmul.f32 %v423, %v301
  %427 = vrot.lane.b32.xlu0 %v424, 32
  %v428 = vpop.permute.xlu0 %427
  %v430 = vmul.f32 %v423, %v428
  %432 = vrot.lane.b32.xlu0 %v430, 32
  %v433 = vpop.permute.xlu0 %432
  %v435 = vadd.f32 %v425, %v433
  %v436 = vtanh.pop %v435
  %438 = vrot.lane.b32.xlu0 %v436, 32
  %v439 = vpop.permute.xlu0 %438
  %v441 = vmul.f32 %v423, %v439
  %v442 = vpack.c.bf16 %v404, %v404
  %444 = vrot.lane.b32.xlu0 %v442, 64
  %v445 = vpop.permute.xlu0 %444
  %s447 = scalar_lea.vmem %s5, 4
  %448 = vst.msk [vmem:[%s447] sm:$0xf] %vm313, %v445
  %v449 = vpack.c.bf16 %v441, %v441
  %451 = vrot.lane.b32.xlu0 %v449, 64
  %v452 = vpop.permute.xlu0 %451
  %s454 = scalar_lea.vmem %s6, 24
  %455 = vst.msk [vmem:[%s454] sm:$0xf] %vm313, %v452
  %s456 = scalar_lea.vmem [#allocation2], 32
  %v457 = vld [vmem:[%s456] sm:$0xff]
  %v458 = vunpack.c.l.b16 %v442
  %v459 = vpack.c.b16 %v458, %v458
  %460 = vrot.lane.b32.xlu0 %v459, 64
  %v461 = vpop.permute.xlu0 %460
  %v463 = vsel %vm81, %v461, 0
  %465 = vmatpush.bf16.msra.mxu0 0
  %466 = vmatpush.bf16.msra.mxu0 0
  %467 = vmatpush.bf16.msra.mxu0 0
  %468 = vmatpush.bf16.msra.mxu0 0
  %469 = vmatpush.bf16.msra.mxu0 0
  %470 = vmatpush.bf16.msra.mxu0 0
  %471 = vmatpush.bf16.msra.mxu0 %v186
  %472 = vmatpush.bf16.msra.mxu0 %v185
  %473 = vmatmul.bf16.gmra.mxu0 %v463
  %v474 = vpop.f32.mrf.mxu0
  %v475 = vadd.f32 0.0, %v474
  %v476 = vpop.f32.mrf.mxu0
  %477 = vdwg.mxu0
  %v478 = vadd.f32 %v457, %v475
  %s479 = scalar_lea.vmem [#allocation2], 80
  %v480 = vld [vmem:[%s479 + $0x8] sm:$0xff]
  %v481 = vunpack.c.l.b16 %v449
  %v482 = vpack.c.b16 %v481, %v481
  %483 = vrot.lane.b32.xlu0 %v482, 64
  %v484 = vpop.permute.xlu0 %483
  %v486 = vsel %vm81, %v484, 0
  %488 = vmatpush.bf16.msra.mxu0 0
  %489 = vmatpush.bf16.msra.mxu0 0
  %490 = vmatpush.bf16.msra.mxu0 0
  %491 = vmatpush.bf16.msra.mxu0 0
  %492 = vmatpush.bf16.msra.mxu0 0
  %493 = vmatpush.bf16.msra.mxu0 0
  %494 = vmatpush.bf16.msra.mxu0 %v217
  %495 = vmatpush.bf16.msra.mxu0 %v216
  %496 = vmatmul.bf16.gmra.mxu0 %v486
  %v497 = vpop.f32.mrf.mxu0
  %v498 = vadd.f32 0.0, %v497
  %v499 = vpop.f32.mrf.mxu0
  %500 = vdwg.mxu0
  %v501 = vadd.f32 %v480, %v498
  %v502 = vxor.u32 %v478, 2147483648
  %v503 = vmul.f32 %v502, 1.442695
  %v504 = vpow.pop %v503
  %v505 = vadd.f32 %v504, 1.0
  %v506 = vrcp.pop %v505
  %v507 = vmul.f32 %v505, %v506
  %v508 = vsub.f32 1.0, %v507
  %v509 = vmul.f32 %v506, %v508
  %v510 = vadd.f32 %v506, %v509
  %vm511 = vweird.f32 %v505
  %vm512 = vweird.f32 %v506
  %vm513 = vmor %vm511, %vm512
  %v514 = vsel %vm513, %v506, %v510
  %v515 = vand.u32 2147483647, %v505
  %vm516 = vcmp.eq.f32.partialorder %v515, 8.507059e+37
  %v517 = vand.u32 %v505, 2147483648
  %v518 = vor.u32 1.1754944e-38, %v517
  %v519 = vsel %vm516, %v518, %v514
  %v520 = vmul.f32 1.0, %v519
  %v521 = vtanh.pop %v478
  %v522 = vmul.f32 %v520, %v398
  %524 = vrot.lane.b32.xlu0 %v521, 32
  %v525 = vpop.permute.xlu0 %524
  %v527 = vmul.f32 %v520, %v525
  %529 = vrot.lane.b32.xlu0 %v527, 32
  %v530 = vpop.permute.xlu0 %529
  %v532 = vadd.f32 %v522, %v530
  %v533 = vtanh.pop %v532
  %535 = vrot.lane.b32.xlu0 %v533, 32
  %v536 = vpop.permute.xlu0 %535
  %v538 = vmul.f32 %v520, %v536
  %v539 = vxor.u32 %v501, 2147483648
  %v540 = vmul.f32 %v539, 1.442695
  %v541 = vpow.pop %v540
  %v542 = vadd.f32 %v541, 1.0
  %v543 = vrcp.pop %v542
  %v544 = vmul.f32 %v542, %v543
  %v545 = vsub.f32 1.0, %v544
  %v546 = vmul.f32 %v543, %v545
  %v547 = vadd.f32 %v543, %v546
  %vm548 = vweird.f32 %v542
  %vm549 = vweird.f32 %v543
  %vm550 = vmor %vm548, %vm549
  %v551 = vsel %vm550, %v543, %v547
  %v552 = vand.u32 2147483647, %v542
  %vm553 = vcmp.eq.f32.partialorder %v552, 8.507059e+37
  %v554 = vand.u32 %v542, 2147483648
  %v555 = vor.u32 1.1754944e-38, %v554
  %v556 = vsel %vm553, %v555, %v551
  %v557 = vmul.f32 1.0, %v556
  %v558 = vtanh.pop %v501
  %v559 = vmul.f32 %v557, %v435
  %561 = vrot.lane.b32.xlu0 %v558, 32
  %v562 = vpop.permute.xlu0 %561
  %v564 = vmul.f32 %v557, %v562
  %566 = vrot.lane.b32.xlu0 %v564, 32
  %v567 = vpop.permute.xlu0 %566
  %v569 = vadd.f32 %v559, %v567
  %v570 = vtanh.pop %v569
  %572 = vrot.lane.b32.xlu0 %v570, 32
  %v573 = vpop.permute.xlu0 %572
  %v575 = vmul.f32 %v557, %v573
  %v576 = vpack.c.bf16 %v538, %v538
  %578 = vrot.lane.b32.xlu0 %v576, 64
  %v579 = vpop.permute.xlu0 %578
  %s581 = scalar_lea.vmem %s5, 8
  %582 = vst.msk [vmem:[%s581] sm:$0xf] %vm313, %v579
  %v583 = vpack.c.bf16 %v575, %v575
  %585 = vrot.lane.b32.xlu0 %v583, 64
  %v586 = vpop.permute.xlu0 %585
  %s588 = scalar_lea.vmem %s6, 20
  %589 = vst.msk [vmem:[%s588] sm:$0xf] %vm313, %v586
  %s590 = scalar_lea.vmem [#allocation2], 48
  %v591 = vld [vmem:[%s590] sm:$0xff]
  %v592 = vunpack.c.l.b16 %v576
  %v593 = vpack.c.b16 %v592, %v592
  %594 = vrot.lane.b32.xlu0 %v593, 64
  %v595 = vpop.permute.xlu0 %594
  %v597 = vsel %vm81, %v595, 0
  %599 = vmatpush.bf16.msra.mxu0 0
  %600 = vmatpush.bf16.msra.mxu0 0
  %601 = vmatpush.bf16.msra.mxu0 0
  %602 = vmatpush.bf16.msra.mxu0 0
  %603 = vmatpush.bf16.msra.mxu0 0
  %604 = vmatpush.bf16.msra.mxu0 0
  %605 = vmatpush.bf16.msra.mxu0 %v186
  %606 = vmatpush.bf16.msra.mxu0 %v185
  %607 = vmatmul.bf16.gmra.mxu0 %v597
  %v608 = vpop.f32.mrf.mxu0
  %v609 = vadd.f32 0.0, %v608
  %v610 = vpop.f32.mrf.mxu0
  %611 = vdwg.mxu0
  %v612 = vadd.f32 %v591, %v609
  %s613 = scalar_lea.vmem [#allocation2], 64
  %v614 = vld [vmem:[%s613 + $0x8] sm:$0xff]
  %v615 = vunpack.c.l.b16 %v583
  %v616 = vpack.c.b16 %v615, %v615
  %617 = vrot.lane.b32.xlu0 %v616, 64
  %v618 = vpop.permute.xlu0 %617
  %v620 = vsel %vm81, %v618, 0
  %622 = vmatpush.bf16.msra.mxu0 0
  %623 = vmatpush.bf16.msra.mxu0 0
  %624 = vmatpush.bf16.msra.mxu0 0
  %625 = vmatpush.bf16.msra.mxu0 0
  %626 = vmatpush.bf16.msra.mxu0 0
  %627 = vmatpush.bf16.msra.mxu0 0
  %628 = vmatpush.bf16.msra.mxu0 %v217
  %629 = vmatpush.bf16.msra.mxu0 %v216
  %630 = vmatmul.bf16.gmra.mxu0 %v620
  %v631 = vpop.f32.mrf.mxu0
  %v632 = vadd.f32 0.0, %v631
  %v633 = vpop.f32.mrf.mxu0
  %634 = vdwg.mxu0
  %v635 = vadd.f32 %v614, %v632
  %v636 = vxor.u32 %v612, 2147483648
  %v637 = vmul.f32 %v636, 1.442695
  %v638 = vpow.pop %v637
  %v639 = vadd.f32 %v638, 1.0
  %v640 = vrcp.pop %v639
  %v641 = vmul.f32 %v639, %v640
  %v642 = vsub.f32 1.0, %v641
  %v643 = vmul.f32 %v640, %v642
  %v644 = vadd.f32 %v640, %v643
  %vm645 = vweird.f32 %v639
  %vm646 = vweird.f32 %v640
  %vm647 = vmor %vm645, %vm646
  %v648 = vsel %vm647, %v640, %v644
  %v649 = vand.u32 2147483647, %v639
  %vm650 = vcmp.eq.f32.partialorder %v649, 8.507059e+37
  %v651 = vand.u32 %v639, 2147483648
  %v652 = vor.u32 1.1754944e-38, %v651
  %v653 = vsel %vm650, %v652, %v648
  %v654 = vmul.f32 1.0, %v653
  %v655 = vtanh.pop %v612
  %v656 = vmul.f32 %v654, %v532
  %658 = vrot.lane.b32.xlu0 %v655, 32
  %v659 = vpop.permute.xlu0 %658
  %v661 = vmul.f32 %v654, %v659
  %663 = vrot.lane.b32.xlu0 %v661, 32
  %v664 = vpop.permute.xlu0 %663
  %v666 = vadd.f32 %v656, %v664
  %v667 = vtanh.pop %v666
  %669 = vrot.lane.b32.xlu0 %v667, 32
  %v670 = vpop.permute.xlu0 %669
  %v672 = vmul.f32 %v654, %v670
  %v673 = vxor.u32 %v635, 2147483648
  %v674 = vmul.f32 %v673, 1.442695
  %v675 = vpow.pop %v674
  %v676 = vadd.f32 %v675, 1.0
  %v677 = vrcp.pop %v676
  %v678 = vmul.f32 %v676, %v677
  %v679 = vsub.f32 1.0, %v678
  %v680 = vmul.f32 %v677, %v679
  %v681 = vadd.f32 %v677, %v680
  %vm682 = vweird.f32 %v676
  %vm683 = vweird.f32 %v677
  %vm684 = vmor %vm682, %vm683
  %v685 = vsel %vm684, %v677, %v681
  %v686 = vand.u32 2147483647, %v676
  %vm687 = vcmp.eq.f32.partialorder %v686, 8.507059e+37
  %v688 = vand.u32 %v676, 2147483648
  %v689 = vor.u32 1.1754944e-38, %v688
  %v690 = vsel %vm687, %v689, %v685
  %v691 = vmul.f32 1.0, %v690
  %v692 = vtanh.pop %v635
  %v693 = vmul.f32 %v691, %v569
  %695 = vrot.lane.b32.xlu0 %v692, 32
  %v696 = vpop.permute.xlu0 %695
  %v698 = vmul.f32 %v691, %v696
  %700 = vrot.lane.b32.xlu0 %v698, 32
  %v701 = vpop.permute.xlu0 %700
  %v703 = vadd.f32 %v693, %v701
  %v704 = vtanh.pop %v703
  %706 = vrot.lane.b32.xlu0 %v704, 32
  %v707 = vpop.permute.xlu0 %706
  %v709 = vmul.f32 %v691, %v707
  %v710 = vpack.c.bf16 %v672, %v672
  %712 = vrot.lane.b32.xlu0 %v710, 64
  %v713 = vpop.permute.xlu0 %712
  %s715 = scalar_lea.vmem %s5, 12
  %716 = vst.msk [vmem:[%s715] sm:$0xf] %vm313, %v713
  %v717 = vpack.c.bf16 %v709, %v709
  %719 = vrot.lane.b32.xlu0 %v717, 64
  %v720 = vpop.permute.xlu0 %719
  %s722 = scalar_lea.vmem %s6, 16
  %723 = vst.msk [vmem:[%s722] sm:$0xf] %vm313, %v720
  %v724 = vld [vmem:[%s613] sm:$0xff]
  %v725 = vunpack.c.l.b16 %v710
  %v726 = vpack.c.b16 %v725, %v725
  %727 = vrot.lane.b32.xlu0 %v726, 64
  %v728 = vpop.permute.xlu0 %727
  %v730 = vsel %vm81, %v728, 0
  %732 = vmatpush.bf16.msra.mxu0 0
  %733 = vmatpush.bf16.msra.mxu0 0
  %734 = vmatpush.bf16.msra.mxu0 0
  %735 = vmatpush.bf16.msra.mxu0 0
  %736 = vmatpush.bf16.msra.mxu0 0
  %737 = vmatpush.bf16.msra.mxu0 0
  %738 = vmatpush.bf16.msra.mxu0 %v186
  %739 = vmatpush.bf16.msra.mxu0 %v185
  %740 = vmatmul.bf16.gmra.mxu0 %v730
  %v741 = vpop.f32.mrf.mxu0
  %v742 = vadd.f32 0.0, %v741
  %v743 = vpop.f32.mrf.mxu0
  %744 = vdwg.mxu0
  %v745 = vadd.f32 %v724, %v742
  %v746 = vld [vmem:[%s590 + $0x8] sm:$0xff]
  %v747 = vunpack.c.l.b16 %v717
  %v748 = vpack.c.b16 %v747, %v747
  %749 = vrot.lane.b32.xlu0 %v748, 64
  %v750 = vpop.permute.xlu0 %749
  %v752 = vsel %vm81, %v750, 0
  %754 = vmatpush.bf16.msra.mxu0 0
  %755 = vmatpush.bf16.msra.mxu0 0
  %756 = vmatpush.bf16.msra.mxu0 0
  %757 = vmatpush.bf16.msra.mxu0 0
  %758 = vmatpush.bf16.msra.mxu0 0
  %759 = vmatpush.bf16.msra.mxu0 0
  %760 = vmatpush.bf16.msra.mxu0 %v217
  %761 = vmatpush.bf16.msra.mxu0 %v216
  %762 = vmatmul.bf16.gmra.mxu0 %v752
  %v763 = vpop.f32.mrf.mxu0
  %v764 = vadd.f32 0.0, %v763
  %v765 = vpop.f32.mrf.mxu0
  %766 = vdwg.mxu0
  %v767 = vadd.f32 %v746, %v764
  %v768 = vxor.u32 %v745, 2147483648
  %v769 = vmul.f32 %v768, 1.442695
  %v770 = vpow.pop %v769
  %v771 = vadd.f32 %v770, 1.0
  %v772 = vrcp.pop %v771
  %v773 = vmul.f32 %v771, %v772
  %v774 = vsub.f32 1.0, %v773
  %v775 = vmul.f32 %v772, %v774
  %v776 = vadd.f32 %v772, %v775
  %vm777 = vweird.f32 %v771
  %vm778 = vweird.f32 %v772
  %vm779 = vmor %vm777, %vm778
  %v780 = vsel %vm779, %v772, %v776
  %v781 = vand.u32 2147483647, %v771
  %vm782 = vcmp.eq.f32.partialorder %v781, 8.507059e+37
  %v783 = vand.u32 %v771, 2147483648
  %v784 = vor.u32 1.1754944e-38, %v783
  %v785 = vsel %vm782, %v784, %v780
  %v786 = vmul.f32 1.0, %v785
  %v787 = vtanh.pop %v745
  %v788 = vmul.f32 %v786, %v666
  %790 = vrot.lane.b32.xlu0 %v787, 32
  %v791 = vpop.permute.xlu0 %790
  %v793 = vmul.f32 %v786, %v791
  %795 = vrot.lane.b32.xlu0 %v793, 32
  %v796 = vpop.permute.xlu0 %795
  %v798 = vadd.f32 %v788, %v796
  %v799 = vtanh.pop %v798
  %801 = vrot.lane.b32.xlu0 %v799, 32
  %v802 = vpop.permute.xlu0 %801
  %v804 = vmul.f32 %v786, %v802
  %v805 = vxor.u32 %v767, 2147483648
  %v806 = vmul.f32 %v805, 1.442695
  %v807 = vpow.pop %v806
  %v808 = vadd.f32 %v807, 1.0
  %v809 = vrcp.pop %v808
  %v810 = vmul.f32 %v808, %v809
  %v811 = vsub.f32 1.0, %v810
  %v812 = vmul.f32 %v809, %v811
  %v813 = vadd.f32 %v809, %v812
  %vm814 = vweird.f32 %v808
  %vm815 = vweird.f32 %v809
  %vm816 = vmor %vm814, %vm815
  %v817 = vsel %vm816, %v809, %v813
  %v818 = vand.u32 2147483647, %v808
  %vm819 = vcmp.eq.f32.partialorder %v818, 8.507059e+37
  %v820 = vand.u32 %v808, 2147483648
  %v821 = vor.u32 1.1754944e-38, %v820
  %v822 = vsel %vm819, %v821, %v817
  %v823 = vmul.f32 1.0, %v822
  %v824 = vtanh.pop %v767
  %v825 = vmul.f32 %v823, %v703
  %827 = vrot.lane.b32.xlu0 %v824, 32
  %v828 = vpop.permute.xlu0 %827
  %v830 = vmul.f32 %v823, %v828
  %832 = vrot.lane.b32.xlu0 %v830, 32
  %v833 = vpop.permute.xlu0 %832
  %v835 = vadd.f32 %v825, %v833
  %v836 = vtanh.pop %v835
  %838 = vrot.lane.b32.xlu0 %v836, 32
  %v839 = vpop.permute.xlu0 %838
  %v841 = vmul.f32 %v823, %v839
  %v842 = vpack.c.bf16 %v804, %v804
  %844 = vrot.lane.b32.xlu0 %v842, 64
  %v845 = vpop.permute.xlu0 %844
  %s847 = scalar_lea.vmem %s5, 16
  %848 = vst.msk [vmem:[%s847] sm:$0xf] %vm313, %v845
  %v849 = vpack.c.bf16 %v841, %v841
  %851 = vrot.lane.b32.xlu0 %v849, 64
  %v852 = vpop.permute.xlu0 %851
  %s854 = scalar_lea.vmem %s6, 12
  %855 = vst.msk [vmem:[%s854] sm:$0xf] %vm313, %v852
  %v856 = vld [vmem:[%s479] sm:$0xff]
  %v857 = vunpack.c.l.b16 %v842
  %v858 = vpack.c.b16 %v857, %v857
  %859 = vrot.lane.b32.xlu0 %v858, 64
  %v860 = vpop.permute.xlu0 %859
  %v862 = vsel %vm81, %v860, 0
  %864 = vmatpush.bf16.msra.mxu0 0
  %865 = vmatpush.bf16.msra.mxu0 0
  %866 = vmatpush.bf16.msra.mxu0 0
  %867 = vmatpush.bf16.msra.mxu0 0
  %868 = vmatpush.bf16.msra.mxu0 0
  %869 = vmatpush.bf16.msra.mxu0 0
  %870 = vmatpush.bf16.msra.mxu0 %v186
  %871 = vmatpush.bf16.msra.mxu0 %v185
  %872 = vmatmul.bf16.gmra.mxu0 %v862
  %v873 = vpop.f32.mrf.mxu0
  %v874 = vadd.f32 0.0, %v873
  %v875 = vpop.f32.mrf.mxu0
  %876 = vdwg.mxu0
  %v877 = vadd.f32 %v856, %v874
  %v878 = vld [vmem:[%s456 + $0x8] sm:$0xff]
  %v879 = vunpack.c.l.b16 %v849
  %v880 = vpack.c.b16 %v879, %v879
  %881 = vrot.lane.b32.xlu0 %v880, 64
  %v882 = vpop.permute.xlu0 %881
  %v884 = vsel %vm81, %v882, 0
  %886 = vmatpush.bf16.msra.mxu0 0
  %887 = vmatpush.bf16.msra.mxu0 0
  %888 = vmatpush.bf16.msra.mxu0 0
  %889 = vmatpush.bf16.msra.mxu0 0
  %890 = vmatpush.bf16.msra.mxu0 0
  %891 = vmatpush.bf16.msra.mxu0 0
  %892 = vmatpush.bf16.msra.mxu0 %v217
  %893 = vmatpush.bf16.msra.mxu0 %v216
  %894 = vmatmul.bf16.gmra.mxu0 %v884
  %v895 = vpop.f32.mrf.mxu0
  %v896 = vadd.f32 0.0, %v895
  %v897 = vpop.f32.mrf.mxu0
  %898 = vdwg.mxu0
  %v899 = vadd.f32 %v878, %v896
  %v900 = vxor.u32 %v877, 2147483648
  %v901 = vmul.f32 %v900, 1.442695
  %v902 = vpow.pop %v901
  %v903 = vadd.f32 %v902, 1.0
  %v904 = vrcp.pop %v903
  %v905 = vmul.f32 %v903, %v904
  %v906 = vsub.f32 1.0, %v905
  %v907 = vmul.f32 %v904, %v906
  %v908 = vadd.f32 %v904, %v907
  %vm909 = vweird.f32 %v903
  %vm910 = vweird.f32 %v904
  %vm911 = vmor %vm909, %vm910
  %v912 = vsel %vm911, %v904, %v908
  %v913 = vand.u32 2147483647, %v903
  %vm914 = vcmp.eq.f32.partialorder %v913, 8.507059e+37
  %v915 = vand.u32 %v903, 2147483648
  %v916 = vor.u32 1.1754944e-38, %v915
  %v917 = vsel %vm914, %v916, %v912
  %v918 = vmul.f32 1.0, %v917
  %v919 = vtanh.pop %v877
  %v920 = vmul.f32 %v918, %v798
  %922 = vrot.lane.b32.xlu0 %v919, 32
  %v923 = vpop.permute.xlu0 %922
  %v925 = vmul.f32 %v918, %v923
  %927 = vrot.lane.b32.xlu0 %v925, 32
  %v928 = vpop.permute.xlu0 %927
  %v930 = vadd.f32 %v920, %v928
  %v931 = vtanh.pop %v930
  %933 = vrot.lane.b32.xlu0 %v931, 32
  %v934 = vpop.permute.xlu0 %933
  %v936 = vmul.f32 %v918, %v934
  %v937 = vxor.u32 %v899, 2147483648
  %v938 = vmul.f32 %v937, 1.442695
  %v939 = vpow.pop %v938
  %v940 = vadd.f32 %v939, 1.0
  %v941 = vrcp.pop %v940
  %v942 = vmul.f32 %v940, %v941
  %v943 = vsub.f32 1.0, %v942
  %v944 = vmul.f32 %v941, %v943
  %v945 = vadd.f32 %v941, %v944
  %vm946 = vweird.f32 %v940
  %vm947 = vweird.f32 %v941
  %vm948 = vmor %vm946, %vm947
  %v949 = vsel %vm948, %v941, %v945
  %v950 = vand.u32 2147483647, %v940
  %vm951 = vcmp.eq.f32.partialorder %v950, 8.507059e+37
  %v952 = vand.u32 %v940, 2147483648
  %v953 = vor.u32 1.1754944e-38, %v952
  %v954 = vsel %vm951, %v953, %v949
  %v955 = vmul.f32 1.0, %v954
  %v956 = vtanh.pop %v899
  %v957 = vmul.f32 %v955, %v835
  %959 = vrot.lane.b32.xlu0 %v956, 32
  %v960 = vpop.permute.xlu0 %959
  %v962 = vmul.f32 %v955, %v960
  %964 = vrot.lane.b32.xlu0 %v962, 32
  %v965 = vpop.permute.xlu0 %964
  %v967 = vadd.f32 %v957, %v965
  %v968 = vtanh.pop %v967
  %970 = vrot.lane.b32.xlu0 %v968, 32
  %v971 = vpop.permute.xlu0 %970
  %v973 = vmul.f32 %v955, %v971
  %v974 = vpack.c.bf16 %v936, %v936
  %976 = vrot.lane.b32.xlu0 %v974, 64
  %v977 = vpop.permute.xlu0 %976
  %s979 = scalar_lea.vmem %s5, 20
  %980 = vst.msk [vmem:[%s979] sm:$0xf] %vm313, %v977
  %v981 = vpack.c.bf16 %v973, %v973
  %983 = vrot.lane.b32.xlu0 %v981, 64
  %v984 = vpop.permute.xlu0 %983
  %s986 = scalar_lea.vmem %s6, 8
  %987 = vst.msk [vmem:[%s986] sm:$0xf] %vm313, %v984
  %v988 = vld [vmem:[%s345] sm:$0xff]
  %v989 = vunpack.c.l.b16 %v974
  %v990 = vpack.c.b16 %v989, %v989
  %991 = vrot.lane.b32.xlu0 %v990, 64
  %v992 = vpop.permute.xlu0 %991
  %v994 = vsel %vm81, %v992, 0
  %996 = vmatpush.bf16.msra.mxu0 0
  %997 = vmatpush.bf16.msra.mxu0 0
  %998 = vmatpush.bf16.msra.mxu0 0
  %999 = vmatpush.bf16.msra.mxu0 0
  %1000 = vmatpush.bf16.msra.mxu0 0
  %1001 = vmatpush.bf16.msra.mxu0 0
  %1002 = vmatpush.bf16.msra.mxu0 %v186
  %1003 = vmatpush.bf16.msra.mxu0 %v185
  %1004 = vmatmul.bf16.gmra.mxu0 %v994
  %v1005 = vpop.f32.mrf.mxu0
  %v1006 = vadd.f32 0.0, %v1005
  %v1007 = vpop.f32.mrf.mxu0
  %1008 = vdwg.mxu0
  %v1009 = vadd.f32 %v988, %v1006
  %v1010 = vld [vmem:[%s322 + $0x8] sm:$0xff]
  %v1011 = vunpack.c.l.b16 %v981
  %v1012 = vpack.c.b16 %v1011, %v1011
  %1013 = vrot.lane.b32.xlu0 %v1012, 64
  %v1014 = vpop.permute.xlu0 %1013
  %v1016 = vsel %vm81, %v1014, 0
  %1018 = vmatpush.bf16.msra.mxu0 0
  %1019 = vmatpush.bf16.msra.mxu0 0
  %1020 = vmatpush.bf16.msra.mxu0 0
  %1021 = vmatpush.bf16.msra.mxu0 0
  %1022 = vmatpush.bf16.msra.mxu0 0
  %1023 = vmatpush.bf16.msra.mxu0 0
  %1024 = vmatpush.bf16.msra.mxu0 %v217
  %1025 = vmatpush.bf16.msra.mxu0 %v216
  %1026 = vmatmul.bf16.gmra.mxu0 %v1016
  %v1027 = vpop.f32.mrf.mxu0
  %v1028 = vadd.f32 0.0, %v1027
  %v1029 = vpop.f32.mrf.mxu0
  %1030 = vdwg.mxu0
  %v1031 = vadd.f32 %v1010, %v1028
  %v1032 = vxor.u32 %v1009, 2147483648
  %v1033 = vmul.f32 %v1032, 1.442695
  %v1034 = vpow.pop %v1033
  %v1035 = vadd.f32 %v1034, 1.0
  %v1036 = vrcp.pop %v1035
  %v1037 = vmul.f32 %v1035, %v1036
  %v1038 = vsub.f32 1.0, %v1037
  %v1039 = vmul.f32 %v1036, %v1038
  %v1040 = vadd.f32 %v1036, %v1039
  %vm1041 = vweird.f32 %v1035
  %vm1042 = vweird.f32 %v1036
  %vm1043 = vmor %vm1041, %vm1042
  %v1044 = vsel %vm1043, %v1036, %v1040
  %v1045 = vand.u32 2147483647, %v1035
  %vm1046 = vcmp.eq.f32.partialorder %v1045, 8.507059e+37
  %v1047 = vand.u32 %v1035, 2147483648
  %v1048 = vor.u32 1.1754944e-38, %v1047
  %v1049 = vsel %vm1046, %v1048, %v1044
  %v1050 = vmul.f32 1.0, %v1049
  %v1051 = vtanh.pop %v1009
  %v1052 = vmul.f32 %v1050, %v930
  %1054 = vrot.lane.b32.xlu0 %v1051, 32
  %v1055 = vpop.permute.xlu0 %1054
  %v1057 = vmul.f32 %v1050, %v1055
  %1059 = vrot.lane.b32.xlu0 %v1057, 32
  %v1060 = vpop.permute.xlu0 %1059
  %v1062 = vadd.f32 %v1052, %v1060
  %v1063 = vtanh.pop %v1062
  %1065 = vrot.lane.b32.xlu0 %v1063, 32
  %v1066 = vpop.permute.xlu0 %1065
  %v1068 = vmul.f32 %v1050, %v1066
  %v1069 = vxor.u32 %v1031, 2147483648
  %v1070 = vmul.f32 %v1069, 1.442695
  %v1071 = vpow.pop %v1070
  %v1072 = vadd.f32 %v1071, 1.0
  %v1073 = vrcp.pop %v1072
  %v1074 = vmul.f32 %v1072, %v1073
  %v1075 = vsub.f32 1.0, %v1074
  %v1076 = vmul.f32 %v1073, %v1075
  %v1077 = vadd.f32 %v1073, %v1076
  %vm1078 = vweird.f32 %v1072
  %vm1079 = vweird.f32 %v1073
  %vm1080 = vmor %vm1078, %vm1079
  %v1081 = vsel %vm1080, %v1073, %v1077
  %v1082 = vand.u32 2147483647, %v1072
  %vm1083 = vcmp.eq.f32.partialorder %v1082, 8.507059e+37
  %v1084 = vand.u32 %v1072, 2147483648
  %v1085 = vor.u32 1.1754944e-38, %v1084
  %v1086 = vsel %vm1083, %v1085, %v1081
  %v1087 = vmul.f32 1.0, %v1086
  %v1088 = vtanh.pop %v1031
  %v1089 = vmul.f32 %v1087, %v967
  %1091 = vrot.lane.b32.xlu0 %v1088, 32
  %v1092 = vpop.permute.xlu0 %1091
  %v1094 = vmul.f32 %v1087, %v1092
  %1096 = vrot.lane.b32.xlu0 %v1094, 32
  %v1097 = vpop.permute.xlu0 %1096
  %v1099 = vadd.f32 %v1089, %v1097
  %v1100 = vtanh.pop %v1099
  %1102 = vrot.lane.b32.xlu0 %v1100, 32
  %v1103 = vpop.permute.xlu0 %1102
  %v1105 = vmul.f32 %v1087, %v1103
  %v1106 = vpack.c.bf16 %v1068, %v1068
  %1108 = vrot.lane.b32.xlu0 %v1106, 64
  %v1109 = vpop.permute.xlu0 %1108
  %s1111 = scalar_lea.vmem %s5, 24
  %1112 = vst.msk [vmem:[%s1111] sm:$0xf] %vm313, %v1109
  %v1113 = vpack.c.bf16 %v1105, %v1105
  %1115 = vrot.lane.b32.xlu0 %v1113, 64
  %v1116 = vpop.permute.xlu0 %1115
  %s1118 = scalar_lea.vmem %s6, 4
  %1119 = vst.msk [vmem:[%s1118] sm:$0xf] %vm313, %v1116
  %v1120 = vld [vmem:[%s206] sm:$0xff]
  %v1121 = vunpack.c.l.b16 %v1106
  %v1122 = vpack.c.b16 %v1121, %v1121
  %1123 = vrot.lane.b32.xlu0 %v1122, 64
  %v1124 = vpop.permute.xlu0 %1123
  %v1126 = vsel %vm81, %v1124, 0
  %1128 = vmatpush.bf16.msra.mxu0 0
  %1129 = vmatpush.bf16.msra.mxu0 0
  %1130 = vmatpush.bf16.msra.mxu0 0
  %1131 = vmatpush.bf16.msra.mxu0 0
  %1132 = vmatpush.bf16.msra.mxu0 0
  %1133 = vmatpush.bf16.msra.mxu0 0
  %1134 = vmatpush.bf16.msra.mxu0 %v186
  %1135 = vmatpush.bf16.msra.mxu0 %v185
  %1136 = vmatmul.bf16.gmra.mxu0 %v1126
  %v1137 = vpop.f32.mrf.mxu0
  %v1138 = vadd.f32 0.0, %v1137
  %v1139 = vpop.f32.mrf.mxu0
  %1140 = vdwg.mxu0
  %v1141 = vadd.f32 %v1120, %v1138
  %v1142 = vld [vmem:[#allocation2 + $0x8] sm:$0xff]
  %v1143 = vunpack.c.l.b16 %v1113
  %v1144 = vpack.c.b16 %v1143, %v1143
  %1145 = vrot.lane.b32.xlu0 %v1144, 64
  %v1146 = vpop.permute.xlu0 %1145
  %v1148 = vsel %vm81, %v1146, 0
  %1150 = vmatpush.bf16.msra.mxu0 0
  %1151 = vmatpush.bf16.msra.mxu0 0
  %1152 = vmatpush.bf16.msra.mxu0 0
  %1153 = vmatpush.bf16.msra.mxu0 0
  %1154 = vmatpush.bf16.msra.mxu0 0
  %1155 = vmatpush.bf16.msra.mxu0 0
  %1156 = vmatpush.bf16.msra.mxu0 %v217
  %1157 = vmatpush.bf16.msra.mxu0 %v216
  %1158 = vmatmul.bf16.gmra.mxu0 %v1148
  %v1159 = vpop.f32.mrf.mxu0
  %v1160 = vadd.f32 0.0, %v1159
  %v1161 = vpop.f32.mrf.mxu0
  %1162 = vdwg.mxu0
  %v1163 = vadd.f32 %v1142, %v1160
  %v1164 = vxor.u32 %v1141, 2147483648
  %v1165 = vmul.f32 %v1164, 1.442695
  %v1166 = vpow.pop %v1165
  %v1167 = vadd.f32 %v1166, 1.0
  %v1168 = vrcp.pop %v1167
  %v1169 = vmul.f32 %v1167, %v1168
  %v1170 = vsub.f32 1.0, %v1169
  %v1171 = vmul.f32 %v1168, %v1170
  %v1172 = vadd.f32 %v1168, %v1171
  %vm1173 = vweird.f32 %v1167
  %vm1174 = vweird.f32 %v1168
  %vm1175 = vmor %vm1173, %vm1174
  %v1176 = vsel %vm1175, %v1168, %v1172
  %v1177 = vand.u32 2147483647, %v1167
  %vm1178 = vcmp.eq.f32.partialorder %v1177, 8.507059e+37
  %v1179 = vand.u32 %v1167, 2147483648
  %v1180 = vor.u32 1.1754944e-38, %v1179
  %v1181 = vsel %vm1178, %v1180, %v1176
  %v1182 = vmul.f32 1.0, %v1181
  %v1183 = vtanh.pop %v1141
  %v1184 = vmul.f32 %v1182, %v1062
  %1186 = vrot.lane.b32.xlu0 %v1183, 32
  %v1187 = vpop.permute.xlu0 %1186
  %v1189 = vmul.f32 %v1182, %v1187
  %1191 = vrot.lane.b32.xlu0 %v1189, 32
  %v1192 = vpop.permute.xlu0 %1191
  %v1194 = vadd.f32 %v1184, %v1192
  %v1195 = vtanh.pop %v1194
  %1197 = vrot.lane.b32.xlu0 %v1195, 32
  %v1198 = vpop.permute.xlu0 %1197
  %v1200 = vmul.f32 %v1182, %v1198
  %v1201 = vxor.u32 %v1163, 2147483648
  %v1202 = vmul.f32 %v1201, 1.442695
  %v1203 = vpow.pop %v1202
  %v1204 = vadd.f32 %v1203, 1.0
  %v1205 = vrcp.pop %v1204
  %v1206 = vmul.f32 %v1204, %v1205
  %v1207 = vsub.f32 1.0, %v1206
  %v1208 = vmul.f32 %v1205, %v1207
  %v1209 = vadd.f32 %v1205, %v1208
  %vm1210 = vweird.f32 %v1204
  %vm1211 = vweird.f32 %v1205
  %vm1212 = vmor %vm1210, %vm1211
  %v1213 = vsel %vm1212, %v1205, %v1209
  %v1214 = vand.u32 2147483647, %v1204
  %vm1215 = vcmp.eq.f32.partialorder %v1214, 8.507059e+37
  %v1216 = vand.u32 %v1204, 2147483648
  %v1217 = vor.u32 1.1754944e-38, %v1216
  %v1218 = vsel %vm1215, %v1217, %v1213
  %v1219 = vmul.f32 1.0, %v1218
  %v1220 = vtanh.pop %v1163
  %v1221 = vmul.f32 %v1219, %v1099
  %1223 = vrot.lane.b32.xlu0 %v1220, 32
  %v1224 = vpop.permute.xlu0 %1223
  %v1226 = vmul.f32 %v1219, %v1224
  %1228 = vrot.lane.b32.xlu0 %v1226, 32
  %v1229 = vpop.permute.xlu0 %1228
  %v1231 = vadd.f32 %v1221, %v1229
  %v1232 = vtanh.pop %v1231
  %1234 = vrot.lane.b32.xlu0 %v1232, 32
  %v1235 = vpop.permute.xlu0 %1234
  %v1237 = vmul.f32 %v1219, %v1235
  %v1238 = vpack.c.bf16 %v1200, %v1200
  %1240 = vrot.lane.b32.xlu0 %v1238, 64
  %v1241 = vpop.permute.xlu0 %1240
  %s1243 = scalar_lea.vmem %s5, 28
  %1244 = vst.msk [vmem:[%s1243] sm:$0xf] %vm313, %v1241
  %v1245 = vpack.c.bf16 %v1237, %v1237
  %1247 = vrot.lane.b32.xlu0 %v1245, 64
  %v1248 = vpop.permute.xlu0 %1247
  %1250 = vst.msk [vmem:[%s6] sm:$0xf] %vm313, %v1248
  // Predicated region
  $region22: #{bilstm_forward.2} parent=0 // pred_check
    _
  $region23: #{bilstm_forward.2} parent=0 // pred_check_branch
    %1252 = sbr.rel (0) target = $region25
  $region24: #{bilstm_forward.2} parent=0 // pred_region
    _
  $region25: #{bilstm_forward.2} parent=0 // pred_fallthru
    _
  // Predicated region
  $region26: #{bilstm_forward.2} parent=0 // pred_check
    _
  $region27: #{bilstm_forward.2} parent=0 // pred_check_branch
    %1254 = sbr.rel (0) target = $region29
  $region28: #{bilstm_forward.2} parent=0 // pred_region
    _
  $region29: #{bilstm_forward.2} parent=0 // pred_fallthru
    _
  // Predicated region
  $region30: #{bilstm_forward.2} parent=0 // pred_check
    _
  $region31: #{bilstm_forward.2} parent=0 // pred_check_branch
    %1256 = sbr.rel (0) target = $region33
  $region32: #{bilstm_forward.2} parent=0 // pred_region
    _
  $region33: #{bilstm_forward.2} parent=0 // pred_fallthru
    _
  // Predicated region
  $region34: #{bilstm_forward.2} parent=0 // pred_check
    _
  $region35: #{bilstm_forward.2} parent=0 // pred_check_branch
    %1258 = sbr.rel (0) target = $region37
  $region36: #{bilstm_forward.2} parent=0 // pred_region
    _
  $region37: #{bilstm_forward.2} parent=0 // pred_fallthru
    _

</llo_original>
